<compile_context>
chip_gen: v5e
topology: v5e:2x2
jax: 0.10.0
libtpu: 0.0.40
codegen_flags: <defaults>
</compile_context>

<pallas_src>
import functools

import jax
import jax.numpy as jnp
from jax.experimental import pallas as pl
from jax.experimental.pallas import tpu as pltpu


def _mlp_kernel(fuse_dir, x_ref, d_ref,
                w0s_ref, b0_ref,
                w1_ref, b1_ref,
                w2h_ref, b2_ref,
                w3_ref, b3_ref,
                wh_ref, bh_ref,
                *rest):
    if fuse_dir:
        wr2_ref, br2_ref, rgb_ref, sig_ref = rest
        wr1d_ref = None
    else:
        wr1d_ref, wr2_ref, br2_ref, rgb_ref, sig_ref = rest

    f32, bf16 = jnp.float32, jnp.bfloat16
    H = w1_ref.shape[0]                 # hidden_dim (128)

    x = x_ref[...].astype(bf16)         # [T, Ds] row-major, cast in-VMEM

    # fused layer-0 + layer-2 skip contribution: x @ [W0 | W2x] -> [T, 2H]
    xw = jnp.dot(x, w0s_ref[...], preferred_element_type=f32)
    skip = xw[:, H:]                    # (x @ W2x), sliced at a vreg boundary

    # layer 0
    h = jnp.maximum(xw[:, :H] + b0_ref[...], 0.0)
    # layer 1
    h = jnp.maximum(
        jnp.dot(h.astype(bf16), w1_ref[...], preferred_element_type=f32)
        + b1_ref[...], 0.0)
    # layer 2 (skip): cat([x, h]) @ W2 == x @ W2x + h @ W2h
    h = jnp.maximum(
        jnp.dot(h.astype(bf16), w2h_ref[...], preferred_element_type=f32)
        + skip + b2_ref[...], 0.0)
    # layer 3
    h = jnp.maximum(
        jnp.dot(h.astype(bf16), w3_ref[...], preferred_element_type=f32)
        + b3_ref[...], 0.0)

    if fuse_dir:
        # fused heads + dir: concat([h, d]) @ [[Wr1h, Wd], [Wr1d, 0]] -> [T, H+1]
        hd = jnp.concatenate([h, d_ref[...]], axis=-1).astype(bf16)   # [T, H+Dd]
        hh = jnp.dot(hd, wh_ref[...], preferred_element_type=f32) + bh_ref[...]
        r = jnp.maximum(hh[:, :H], 0.0)
    else:
        # v5e path: split head (wh = [Wr1h, Wd]) + separate dir matmul
        hh = (jnp.dot(h.astype(bf16), wh_ref[...], preferred_element_type=f32)
              + bh_ref[...])                                          # [T, H+1]
        r = jnp.maximum(
            hh[:, :H] + jnp.dot(d_ref[...].astype(bf16), wr1d_ref[...],
                                preferred_element_type=f32), 0.0)
    sig = jnp.maximum(hh[:, H:H + 1], 0.0)                            # [T, 1]

    rgb = jax.nn.sigmoid(
        jnp.dot(r.astype(bf16), wr2_ref[...], preferred_element_type=f32)
        + br2_ref[...])                                               # [T, 3]

    rgb_ref[...] = rgb.astype(rgb_ref.dtype)
    sig_ref[...] = sig.astype(sig_ref.dtype)


def _full_spec(shape):
    # grid-invariant weight/bias block: whole array, same block every step
    return pl.BlockSpec(shape, lambda i: (0,) * len(shape))


@functools.partial(jax.jit, static_argnames=("tile_m", "fuse_dir"))
def _mlp_forward_impl(pos_enc_samples, pos_enc_ray_dir, params, tile_m, fuse_dir):
    f32, bf16 = jnp.float32, jnp.bfloat16
    N, Ds = pos_enc_samples.shape
    _, Dd = pos_enc_ray_dir.shape
    H = params["w1"].shape[0]

    n_tiles = pl.cdiv(N, tile_m)
    Np = n_tiles * tile_m
    x = pos_enc_samples
    d = pos_enc_ray_dir
    if Np != N:
        # only triggers on ragged N; padded rows produce finite garbage that is
        # sliced off below
        x = jnp.pad(x, ((0, Np - N), (0, 0)))
        d = jnp.pad(d, ((0, Np - N), (0, 0)))

    # fused / bf16 weights (natural [in, out] layout), f32 biases
    w0s = jnp.concatenate([params["w0"], params["w2x"]], axis=1).astype(bf16)  # [Ds, 2H]
    w1 = params["w1"].astype(bf16)                                             # [H, H]
    w2h = params["w2h"].astype(bf16)                                           # [H, H]
    w3 = params["w3"].astype(bf16)                                             # [H, H]
    wr2 = params["wr2"].astype(bf16)                                           # [H, 3]
    b0 = params["b0"].astype(f32)                                              # [1, H]
    b1 = params["b1"].astype(f32)
    b2 = params["b2"].astype(f32)
    b3 = params["b3"].astype(f32)
    bh = jnp.concatenate([params["br1"], params["bd"]], axis=1).astype(f32)    # [1, H+1]
    br2 = params["br2"].astype(f32)                                            # [1, 3]

    wh_top = jnp.concatenate([params["wr1h"], params["wd"]], axis=1)           # [H, H+1]
    if fuse_dir:
        wh_bot = jnp.concatenate([params["wr1d"],
                                  jnp.zeros((Dd, 1), f32)], axis=1)            # [Dd, H+1]
        wh = jnp.concatenate([wh_top, wh_bot], axis=0).astype(bf16)            # [H+Dd, H+1]
        extra_w = []
    else:
        wh = wh_top.astype(bf16)                                               # [H, H+1]
        extra_w = [params["wr1d"].astype(bf16)]                                # [Dd, H]

    row = lambda i: (i, 0)
    operands = [x, d, w0s, b0, w1, b1, w2h, b2, w3, b3, wh, bh] + extra_w + [wr2, br2]
    in_specs = ([pl.BlockSpec((tile_m, Ds), row),          # x tile (row-major)
                 pl.BlockSpec((tile_m, Dd), row)]          # ray-dir tile
                + [_full_spec(a.shape) for a in operands[2:]])

    out_specs = (pl.BlockSpec((tile_m, 3), row),
                 pl.BlockSpec((tile_m, 1), row))
    out_shape = (jax.ShapeDtypeStruct((Np, 3), f32),
                 jax.ShapeDtypeStruct((Np, 1), f32))

    # advisory cost estimate
    macs_per_row = Ds * 2 * H + 3 * H * H + H * (H + 1) + Dd * H + H * 3
    weight_bytes = sum(int(a.size) * a.dtype.itemsize for a in operands[2:])
    cost = pl.CostEstimate(
        flops=2 * macs_per_row * Np,
        transcendentals=3 * Np,
        bytes_accessed=int(x.size) * 4 + int(d.size) * 4 + 16 * Np + weight_bytes,
    )

    rgb, sigma = pl.pallas_call(
        functools.partial(_mlp_kernel, fuse_dir),
        grid=(n_tiles,),
        in_specs=in_specs,
        out_specs=out_specs,
        out_shape=out_shape,
        compiler_params=pltpu.CompilerParams(
            dimension_semantics=("parallel",)),
        cost_estimate=cost,
    )(*operands)

    return rgb[:N], sigma[:N]


def mlp_forward(pos_enc_samples, pos_enc_ray_dir, params, tile_m=None, fuse_dir=None):
    kind = jax.devices()[0].device_kind.lower()
    old_gen = any(v in kind for v in ("v2", "v3", "v4", "v5"))
    if fuse_dir is None:
        # v5e-and-older (128x128 MXU): fusing the K=144/N=129 head costs an
        # extra MXU pass -> keep the split head there (per perf review).
        fuse_dir = not old_gen
    if tile_m is None:
        N = pos_enc_samples.shape[0]
        cap = 1024 if old_gen else 2048   # v5e: 16 MiB scoped-VMEM default
        tile_m = min(cap, max(128, (N // 4) // 128 * 128))  # >=4 grid steps
    return _mlp_forward_impl(pos_enc_samples, pos_enc_ray_dir, params,
                             tile_m=int(tile_m), fuse_dir=bool(fuse_dir))


def init_params(key, samples_dim, ray_dir_dim, hidden_dim=128):
    """Deterministic synthetic parameters matching the PyTorch module's shapes.

    Linear weights stored as [in_dim, out_dim] (transposed vs. torch), biases as
    [1, out_dim]. Concat weights are pre-split to mirror torch.cat ordering.
    """
    def linear(k, din, dout):
        kw, kb = jax.random.split(k)
        bound = 1.0 / jnp.sqrt(din)
        w = jax.random.uniform(kw, (din, dout), jnp.float32, -bound, bound)
        b = jax.random.uniform(kb, (1, dout), jnp.float32, -bound, bound)
        return w, b

    keys = jax.random.split(key, 7)
    H = hidden_dim
    w0, b0 = linear(keys[0], samples_dim, H)              # layer 0
    w1, b1 = linear(keys[1], H, H)                        # layer 1
    w2, b2 = linear(keys[2], H + samples_dim, H)          # layer 2 (skip)
    w3, b3 = linear(keys[3], H, H)                        # layer 3
    wd, bd = linear(keys[4], H, 1)                        # density_fn
    wr1, br1 = linear(keys[5], H + ray_dir_dim, H)        # rgb_fn[0]
    wr2, br2 = linear(keys[6], H, 3)                      # rgb_fn[2]

    return {
        "w0": w0, "b0": b0,
        "w1": w1, "b1": b1,
        "w2x": w2[:samples_dim], "w2h": w2[samples_dim:], "b2": b2,   # cat([x, h])
        "w3": w3, "b3": b3,
        "wd": wd, "bd": bd,
        "wr1h": wr1[:H], "wr1d": wr1[H:], "br1": br1,                 # cat([h, d])
        "wr2": wr2, "br2": br2,
    }


def mlp_reference(x, d, p):
    """Plain-JAX f32 reference of the torch forward, for verification."""
    relu = lambda v: jnp.maximum(v, 0.0)
    h = relu(x @ p["w0"] + p["b0"])
    h = relu(h @ p["w1"] + p["b1"])
    h = relu(jnp.concatenate([x, h], axis=-1)
             @ jnp.concatenate([p["w2x"], p["w2h"]], axis=0) + p["b2"])
    h = relu(h @ p["w3"] + p["b3"])
    sigma = relu(h @ p["wd"] + p["bd"])
    r = relu(jnp.concatenate([h, d], axis=-1)
             @ jnp.concatenate([p["wr1h"], p["wr1d"]], axis=0) + p["br1"])
    rgb = jax.nn.sigmoid(r @ p["wr2"] + p["br2"])
    return rgb, sigma


if __name__ == "__main__":
    N = 1024                # rows (samples); tile_m=256 -> 4 grid steps
    SAMPLES_DIM = 32        # pos_enc_samples_dim
    RAY_DIR_DIM = 16        # pos_enc_ray_dir_dim
    HIDDEN = 128            # hidden_dim (fixed at 128 by the density/rgb heads)

    key = jax.random.PRNGKey(0)
    k_x, k_d, k_p = jax.random.split(key, 3)
    pos_enc_samples = jax.random.normal(k_x, (N, SAMPLES_DIM), jnp.float32)
    pos_enc_ray_dir = jax.random.normal(k_d, (N, RAY_DIR_DIM), jnp.float32)
    params = init_params(k_p, SAMPLES_DIM, RAY_DIR_DIM, HIDDEN)

    rgb, sigma = mlp_forward(pos_enc_samples, pos_enc_ray_dir, params)
    jax.block_until_ready((rgb, sigma))

    rgb_ref, sigma_ref = mlp_reference(pos_enc_samples, pos_enc_ray_dir, params)
    assert rgb.shape == (N, 3) and sigma.shape == (N, 1)
    assert jnp.all(jnp.isfinite(rgb)) and jnp.all(jnp.isfinite(sigma))
    # bf16 matmul operands with f32 accumulation -> loosened tolerance vs f32 ref
    assert jnp.allclose(rgb, rgb_ref, atol=5e-2, rtol=5e-2)
    assert jnp.allclose(sigma, sigma_ref, atol=5e-2, rtol=5e-2)

    print("KERNEL_OK")
</pallas_src>

<mosaic_0001>
module attributes {stable_mosaic.version = 11 : i64} {
  func.func @_mlp_kernel(%arg0: i32, %arg1: memref<256x32xf32, #tpu.memory_space<vmem>>, %arg2: memref<256x16xf32, #tpu.memory_space<vmem>>, %arg3: memref<32x256xbf16, #tpu.memory_space<vmem>>, %arg4: memref<1x128xf32, #tpu.memory_space<vmem>>, %arg5: memref<128x128xbf16, #tpu.memory_space<vmem>>, %arg6: memref<1x128xf32, #tpu.memory_space<vmem>>, %arg7: memref<128x128xbf16, #tpu.memory_space<vmem>>, %arg8: memref<1x128xf32, #tpu.memory_space<vmem>>, %arg9: memref<128x128xbf16, #tpu.memory_space<vmem>>, %arg10: memref<1x128xf32, #tpu.memory_space<vmem>>, %arg11: memref<144x129xbf16, #tpu.memory_space<vmem>>, %arg12: memref<1x129xf32, #tpu.memory_space<vmem>>, %arg13: memref<128x3xbf16, #tpu.memory_space<vmem>>, %arg14: memref<1x3xf32, #tpu.memory_space<vmem>>, %arg15: memref<256x3xf32, #tpu.memory_space<vmem>>, %arg16: memref<256x1xf32, #tpu.memory_space<vmem>>) attributes {dimension_semantics = [#tpu.dimension_semantics<parallel>], iteration_bounds = array<i64: 4>, scalar_prefetch = 0 : i64, scratch_operands = 0 : i64, tpu.core_type = #tpu.core_type<tc>, window_params = [{transform_indices = @transform_0, window_bounds = array<i64: 256, 32>}, {transform_indices = @transform_1, window_bounds = array<i64: 256, 16>}, {pipeline_mode = #tpu.pipeline_mode<synchronous>, transform_indices = @transform_2, window_bounds = array<i64: 32, 256>}, {pipeline_mode = #tpu.pipeline_mode<synchronous>, transform_indices = @transform_3, window_bounds = array<i64: 1, 128>}, {pipeline_mode = #tpu.pipeline_mode<synchronous>, transform_indices = @transform_4, window_bounds = array<i64: 128, 128>}, {pipeline_mode = #tpu.pipeline_mode<synchronous>, transform_indices = @transform_5, window_bounds = array<i64: 1, 128>}, {pipeline_mode = #tpu.pipeline_mode<synchronous>, transform_indices = @transform_6, window_bounds = array<i64: 128, 128>}, {pipeline_mode = #tpu.pipeline_mode<synchronous>, transform_indices = @transform_7, window_bounds = array<i64: 1, 128>}, {pipeline_mode = #tpu.pipeline_mode<synchronous>, transform_indices = @transform_8, window_bounds = array<i64: 128, 128>}, {pipeline_mode = #tpu.pipeline_mode<synchronous>, transform_indices = @transform_9, window_bounds = array<i64: 1, 128>}, {pipeline_mode = #tpu.pipeline_mode<synchronous>, transform_indices = @transform_10, window_bounds = array<i64: 144, 129>}, {pipeline_mode = #tpu.pipeline_mode<synchronous>, transform_indices = @transform_11, window_bounds = array<i64: 1, 129>}, {pipeline_mode = #tpu.pipeline_mode<synchronous>, transform_indices = @transform_12, window_bounds = array<i64: 128, 3>}, {pipeline_mode = #tpu.pipeline_mode<synchronous>, transform_indices = @transform_13, window_bounds = array<i64: 1, 3>}, {transform_indices = @transform_14, window_bounds = array<i64: 256, 3>}, {transform_indices = @transform_15, window_bounds = array<i64: 256, 1>}]} {
    %c0 = arith.constant 0 : index
    %c0_0 = arith.constant 0 : index
    %0 = vector.load %arg1[%c0, %c0_0] : memref<256x32xf32, #tpu.memory_space<vmem>>, vector<256x32xf32>
    %1 = arith.truncf %0 : vector<256x32xf32> to vector<256x32xbf16>
    %c0_1 = arith.constant 0 : index
    %c0_2 = arith.constant 0 : index
    %2 = vector.load %arg3[%c0_1, %c0_2] : memref<32x256xbf16, #tpu.memory_space<vmem>>, vector<32x256xbf16>
    %cst = arith.constant dense<0.000000e+00> : vector<256x256xf32>
    %3 = tpu.matmul %1, %2, %cst {dimension_numbers = #tpu.dot_dimension_numbers<[1], [0], [0], [1], [0, 0, 1, 1], [], []>} : vector<256x32xbf16>, vector<32x256xbf16>, vector<256x256xf32> -> vector<256x256xf32>
    %4 = vector.extract_strided_slice %3 {offsets = [0, 128], sizes = [256, 128], strides = [1, 1]} : vector<256x256xf32> to vector<256x128xf32>
    %5 = vector.extract_strided_slice %3 {offsets = [0, 0], sizes = [256, 128], strides = [1, 1]} : vector<256x256xf32> to vector<256x128xf32>
    %c0_3 = arith.constant 0 : index
    %c0_4 = arith.constant 0 : index
    %6 = vector.load %arg4[%c0_3, %c0_4] : memref<1x128xf32, #tpu.memory_space<vmem>>, vector<1x128xf32>
    %7 = vector.broadcast %6 : vector<1x128xf32> to vector<256x128xf32>
    %8 = arith.addf %5, %7 : vector<256x128xf32>
    %cst_5 = arith.constant 0.000000e+00 : f32
    %9 = vector.broadcast %cst_5 : f32 to vector<256x128xf32>
    %10 = arith.maximumf %8, %9 : vector<256x128xf32>
    %11 = arith.truncf %10 : vector<256x128xf32> to vector<256x128xbf16>
    %c0_6 = arith.constant 0 : index
    %c0_7 = arith.constant 0 : index
    %12 = vector.load %arg5[%c0_6, %c0_7] : memref<128x128xbf16, #tpu.memory_space<vmem>>, vector<128x128xbf16>
    %cst_8 = arith.constant dense<0.000000e+00> : vector<256x128xf32>
    %13 = tpu.matmul %11, %12, %cst_8 {dimension_numbers = #tpu.dot_dimension_numbers<[1], [0], [0], [1], [0, 0, 1, 1], [], []>} : vector<256x128xbf16>, vector<128x128xbf16>, vector<256x128xf32> -> vector<256x128xf32>
    %c0_9 = arith.constant 0 : index
    %c0_10 = arith.constant 0 : index
    %14 = vector.load %arg6[%c0_9, %c0_10] : memref<1x128xf32, #tpu.memory_space<vmem>>, vector<1x128xf32>
    %15 = vector.broadcast %14 : vector<1x128xf32> to vector<256x128xf32>
    %16 = arith.addf %13, %15 : vector<256x128xf32>
    %cst_11 = arith.constant 0.000000e+00 : f32
    %17 = vector.broadcast %cst_11 : f32 to vector<256x128xf32>
    %18 = arith.maximumf %16, %17 : vector<256x128xf32>
    %19 = arith.truncf %18 : vector<256x128xf32> to vector<256x128xbf16>
    %c0_12 = arith.constant 0 : index
    %c0_13 = arith.constant 0 : index
    %20 = vector.load %arg7[%c0_12, %c0_13] : memref<128x128xbf16, #tpu.memory_space<vmem>>, vector<128x128xbf16>
    %cst_14 = arith.constant dense<0.000000e+00> : vector<256x128xf32>
    %21 = tpu.matmul %19, %20, %cst_14 {dimension_numbers = #tpu.dot_dimension_numbers<[1], [0], [0], [1], [0, 0, 1, 1], [], []>} : vector<256x128xbf16>, vector<128x128xbf16>, vector<256x128xf32> -> vector<256x128xf32>
    %22 = arith.addf %21, %4 : vector<256x128xf32>
    %c0_15 = arith.constant 0 : index
    %c0_16 = arith.constant 0 : index
    %23 = vector.load %arg8[%c0_15, %c0_16] : memref<1x128xf32, #tpu.memory_space<vmem>>, vector<1x128xf32>
    %24 = vector.broadcast %23 : vector<1x128xf32> to vector<256x128xf32>
    %25 = arith.addf %22, %24 : vector<256x128xf32>
    %cst_17 = arith.constant 0.000000e+00 : f32
    %26 = vector.broadcast %cst_17 : f32 to vector<256x128xf32>
    %27 = arith.maximumf %25, %26 : vector<256x128xf32>
    %28 = arith.truncf %27 : vector<256x128xf32> to vector<256x128xbf16>
    %c0_18 = arith.constant 0 : index
    %c0_19 = arith.constant 0 : index
    %29 = vector.load %arg9[%c0_18, %c0_19] : memref<128x128xbf16, #tpu.memory_space<vmem>>, vector<128x128xbf16>
    %cst_20 = arith.constant dense<0.000000e+00> : vector<256x128xf32>
    %30 = tpu.matmul %28, %29, %cst_20 {dimension_numbers = #tpu.dot_dimension_numbers<[1], [0], [0], [1], [0, 0, 1, 1], [], []>} : vector<256x128xbf16>, vector<128x128xbf16>, vector<256x128xf32> -> vector<256x128xf32>
    %c0_21 = arith.constant 0 : index
    %c0_22 = arith.constant 0 : index
    %31 = vector.load %arg10[%c0_21, %c0_22] : memref<1x128xf32, #tpu.memory_space<vmem>>, vector<1x128xf32>
    %32 = vector.broadcast %31 : vector<1x128xf32> to vector<256x128xf32>
    %33 = arith.addf %30, %32 : vector<256x128xf32>
    %cst_23 = arith.constant 0.000000e+00 : f32
    %34 = vector.broadcast %cst_23 : f32 to vector<256x128xf32>
    %35 = arith.maximumf %33, %34 : vector<256x128xf32>
    %c0_24 = arith.constant 0 : index
    %c0_25 = arith.constant 0 : index
    %36 = vector.load %arg2[%c0_24, %c0_25] : memref<256x16xf32, #tpu.memory_space<vmem>>, vector<256x16xf32>
    %37 = tpu.concatenate %35, %36 in 1 : vector<256x128xf32>, vector<256x16xf32> -> vector<256x144xf32>
    %38 = arith.truncf %37 : vector<256x144xf32> to vector<256x144xbf16>
    %c0_26 = arith.constant 0 : index
    %c0_27 = arith.constant 0 : index
    %39 = vector.load %arg11[%c0_26, %c0_27] : memref<144x129xbf16, #tpu.memory_space<vmem>>, vector<144x129xbf16>
    %cst_28 = arith.constant dense<0.000000e+00> : vector<256x129xf32>
    %40 = tpu.matmul %38, %39, %cst_28 {dimension_numbers = #tpu.dot_dimension_numbers<[1], [0], [0], [1], [0, 0, 1, 1], [], []>} : vector<256x144xbf16>, vector<144x129xbf16>, vector<256x129xf32> -> vector<256x129xf32>
    %c0_29 = arith.constant 0 : index
    %c0_30 = arith.constant 0 : index
    %41 = vector.load %arg12[%c0_29, %c0_30] : memref<1x129xf32, #tpu.memory_space<vmem>>, vector<1x129xf32>
    %42 = vector.broadcast %41 : vector<1x129xf32> to vector<256x129xf32>
    %43 = arith.addf %40, %42 : vector<256x129xf32>
    %44 = vector.extract_strided_slice %43 {offsets = [0, 0], sizes = [256, 128], strides = [1, 1]} : vector<256x129xf32> to vector<256x128xf32>
    %cst_31 = arith.constant 0.000000e+00 : f32
    %45 = vector.broadcast %cst_31 : f32 to vector<256x128xf32>
    %46 = arith.maximumf %44, %45 : vector<256x128xf32>
    %47 = vector.extract_strided_slice %43 {offsets = [0, 128], sizes = [256, 1], strides = [1, 1]} : vector<256x129xf32> to vector<256x1xf32>
    %cst_32 = arith.constant 0.000000e+00 : f32
    %48 = vector.broadcast %cst_32 : f32 to vector<256x1xf32>
    %49 = arith.maximumf %47, %48 : vector<256x1xf32>
    %50 = arith.truncf %46 : vector<256x128xf32> to vector<256x128xbf16>
    %c0_33 = arith.constant 0 : index
    %c0_34 = arith.constant 0 : index
    %51 = vector.load %arg13[%c0_33, %c0_34] : memref<128x3xbf16, #tpu.memory_space<vmem>>, vector<128x3xbf16>
    %cst_35 = arith.constant dense<0.000000e+00> : vector<256x3xf32>
    %52 = tpu.matmul %50, %51, %cst_35 {dimension_numbers = #tpu.dot_dimension_numbers<[1], [0], [0], [1], [0, 0, 1, 1], [], []>} : vector<256x128xbf16>, vector<128x3xbf16>, vector<256x3xf32> -> vector<256x3xf32>
    %c0_36 = arith.constant 0 : index
    %c0_37 = arith.constant 0 : index
    %53 = vector.load %arg14[%c0_36, %c0_37] : memref<1x3xf32, #tpu.memory_space<vmem>>, vector<1x3xf32>
    %54 = vector.broadcast %53 : vector<1x3xf32> to vector<256x3xf32>
    %55 = arith.addf %52, %54 : vector<256x3xf32>
    %56 = arith.negf %55 : vector<256x3xf32>
    %57 = math.exp %56 : vector<256x3xf32>
    %cst_38 = arith.constant 1.000000e+00 : f32
    %58 = vector.broadcast %cst_38 : f32 to vector<256x3xf32>
    %59 = arith.addf %58, %57 : vector<256x3xf32>
    %60 = arith.divf %58, %59 : vector<256x3xf32>
    %c0_39 = arith.constant 0 : index
    %c0_40 = arith.constant 0 : index
    %61 = vector.load %arg15[%c0_39, %c0_40] : memref<256x3xf32, #tpu.memory_space<vmem>>, vector<256x3xf32>
    tpu.vector_store %arg15[%c0_39, %c0_40], %60 {strides = array<i32>} : memref<256x3xf32, #tpu.memory_space<vmem>>, vector<256x3xf32>,
    %c0_41 = arith.constant 0 : index
    %c0_42 = arith.constant 0 : index
    %62 = vector.load %arg16[%c0_41, %c0_42] : memref<256x1xf32, #tpu.memory_space<vmem>>, vector<256x1xf32>
    tpu.vector_store %arg16[%c0_41, %c0_42], %49 {strides = array<i32>} : memref<256x1xf32, #tpu.memory_space<vmem>>, vector<256x1xf32>,
    return
  }
  func.func @transform_0(%arg0: i32) -> (i32, i32) {
    %c0_i32 = arith.constant 0 : i32
    %c0_i32_0 = arith.constant 0 : i32
    return %arg0, %c0_i32 : i32, i32
  }
  func.func @transform_1(%arg0: i32) -> (i32, i32) {
    %c0_i32 = arith.constant 0 : i32
    %c0_i32_0 = arith.constant 0 : i32
    return %arg0, %c0_i32 : i32, i32
  }
  func.func @transform_2(%arg0: i32) -> (i32, i32) {
    %c0_i32 = arith.constant 0 : i32
    %c0_i32_0 = arith.constant 0 : i32
    %c0_i32_1 = arith.constant 0 : i32
    return %c0_i32, %c0_i32_0 : i32, i32
  }
  func.func @transform_3(%arg0: i32) -> (i32, i32) {
    %c0_i32 = arith.constant 0 : i32
    %c0_i32_0 = arith.constant 0 : i32
    %c0_i32_1 = arith.constant 0 : i32
    return %c0_i32, %c0_i32_0 : i32, i32
  }
  func.func @transform_4(%arg0: i32) -> (i32, i32) {
    %c0_i32 = arith.constant 0 : i32
    %c0_i32_0 = arith.constant 0 : i32
    %c0_i32_1 = arith.constant 0 : i32
    return %c0_i32, %c0_i32_0 : i32, i32
  }
  func.func @transform_5(%arg0: i32) -> (i32, i32) {
    %c0_i32 = arith.constant 0 : i32
    %c0_i32_0 = arith.constant 0 : i32
    %c0_i32_1 = arith.constant 0 : i32
    return %c0_i32, %c0_i32_0 : i32, i32
  }
  func.func @transform_6(%arg0: i32) -> (i32, i32) {
    %c0_i32 = arith.constant 0 : i32
    %c0_i32_0 = arith.constant 0 : i32
    %c0_i32_1 = arith.constant 0 : i32
    return %c0_i32, %c0_i32_0 : i32, i32
  }
  func.func @transform_7(%arg0: i32) -> (i32, i32) {
    %c0_i32 = arith.constant 0 : i32
    %c0_i32_0 = arith.constant 0 : i32
    %c0_i32_1 = arith.constant 0 : i32
    return %c0_i32, %c0_i32_0 : i32, i32
  }
  func.func @transform_8(%arg0: i32) -> (i32, i32) {
    %c0_i32 = arith.constant 0 : i32
    %c0_i32_0 = arith.constant 0 : i32
    %c0_i32_1 = arith.constant 0 : i32
    return %c0_i32, %c0_i32_0 : i32, i32
  }
  func.func @transform_9(%arg0: i32) -> (i32, i32) {
    %c0_i32 = arith.constant 0 : i32
    %c0_i32_0 = arith.constant 0 : i32
    %c0_i32_1 = arith.constant 0 : i32
    return %c0_i32, %c0_i32_0 : i32, i32
  }
  func.func @transform_10(%arg0: i32) -> (i32, i32) {
    %c0_i32 = arith.constant 0 : i32
    %c0_i32_0 = arith.constant 0 : i32
    %c0_i32_1 = arith.constant 0 : i32
    return %c0_i32, %c0_i32_0 : i32, i32
  }
  func.func @transform_11(%arg0: i32) -> (i32, i32) {
    %c0_i32 = arith.constant 0 : i32
    %c0_i32_0 = arith.constant 0 : i32
    %c0_i32_1 = arith.constant 0 : i32
    return %c0_i32, %c0_i32_0 : i32, i32
  }
  func.func @transform_12(%arg0: i32) -> (i32, i32) {
    %c0_i32 = arith.constant 0 : i32
    %c0_i32_0 = arith.constant 0 : i32
    %c0_i32_1 = arith.constant 0 : i32
    return %c0_i32, %c0_i32_0 : i32, i32
  }
  func.func @transform_13(%arg0: i32) -> (i32, i32) {
    %c0_i32 = arith.constant 0 : i32
    %c0_i32_0 = arith.constant 0 : i32
    %c0_i32_1 = arith.constant 0 : i32
    return %c0_i32, %c0_i32_0 : i32, i32
  }
  func.func @transform_14(%arg0: i32) -> (i32, i32) {
    %c0_i32 = arith.constant 0 : i32
    %c0_i32_0 = arith.constant 0 : i32
    return %arg0, %c0_i32 : i32, i32
  }
  func.func @transform_15(%arg0: i32) -> (i32, i32) {
    %c0_i32 = arith.constant 0 : i32
    %c0_i32_0 = arith.constant 0 : i32
    return %arg0, %c0_i32 : i32, i32
  }
}

</mosaic_0001>

<llo_original>
// kernel: _mlp_forward_impl.1
$region0: #{_mlp_forward_impl.1}
  #allocation0 [shape = 'u32[]', space=smem, size = 0x4, offset = 0x4, fixed_abs, tag = 'smem constant byte address 0x4 - core index']
  #allocation1 [shape = 'u32[72,128]{1,0:T(1,128)}', space=vmem, size = 0x9000, scoped, tag = 'internal scratch']
  %s0 = inlined_call_operand.vmem [shape: f32[1024,32], index: 0, kind: input, shape index: {}]
  %s1 = inlined_call_operand.vmem [shape: f32[1024,16], index: 1, kind: input, shape index: {}]
  %s2 = inlined_call_operand.vmem [shape: bf16[32,256], index: 2, kind: input, shape index: {}]
  %s3 = inlined_call_operand.vmem [shape: f32[1,128], index: 3, kind: input, shape index: {}]
  %s4 = inlined_call_operand.vmem [shape: bf16[128,128], index: 4, kind: input, shape index: {}]
  %s5 = inlined_call_operand.vmem [shape: f32[1,128], index: 5, kind: input, shape index: {}]
  %s6 = inlined_call_operand.vmem [shape: bf16[128,128], index: 6, kind: input, shape index: {}]
  %s7 = inlined_call_operand.vmem [shape: f32[1,128], index: 7, kind: input, shape index: {}]
  %s8 = inlined_call_operand.vmem [shape: bf16[128,128], index: 8, kind: input, shape index: {}]
  %s9 = inlined_call_operand.vmem [shape: f32[1,128], index: 9, kind: input, shape index: {}]
  %s10 = inlined_call_operand.vmem [shape: bf16[144,129], index: 10, kind: input, shape index: {}]
  %s11 = inlined_call_operand.vmem [shape: f32[1,129], index: 11, kind: input, shape index: {}]
  %s12 = inlined_call_operand.vmem [shape: bf16[128,3], index: 12, kind: input, shape index: {}]
  %s13 = inlined_call_operand.vmem [shape: f32[1,3], index: 13, kind: input, shape index: {}]
  %s14 = inlined_call_operand.vmem [shape: f32[1024,3], index: 14, kind: output, shape index: {0}]
  %s15 = inlined_call_operand.vmem [shape: f32[1024,1], index: 15, kind: output, shape index: {1}]
  %16 = xla_tuple %s14, %s15
  %s17 = sld [smem:[#allocation0]]
  $region97: #{_mlp_forward_impl.1} parent=0
    _
  %s19 = ssub.s32 1, %s17
  %s20 = scalar_select 0, %s19, %s17
  loop: start=0, step=1, limit=6
  $region2: #{_mlp_forward_impl.1} parent=0 // loop_pre_header
    _
  $region3: #{_mlp_forward_impl.1} parent=0 // loop_header
    %s22 = sphi 0, %s26
    %p23 = scmp.ge.s32.totalorder %s22, 6
    %s32 = sphi 0, %s34
    %s35 = sphi 0, %s32
    %s36 = sphi 0, %s35
    %s52 = sphi 0, %s36
    %s58 = sphi 0, %s60
    %s61 = sphi 0, %s58
    %s62 = sphi 0, %s61
    %s78 = sphi 0, %s62
    %s82 = sphi 0, %s82
    %s84 = sphi 0, %s82
    %s85 = sphi 0, %s84
    %s99 = sphi 0, %s85
    %s103 = sphi 0, %s103
    %s105 = sphi 0, %s103
    %s106 = sphi 0, %s105
    %s120 = sphi 0, %s106
    %s124 = sphi 0, %s124
    %s126 = sphi 0, %s124
    %s127 = sphi 0, %s126
    %s141 = sphi 0, %s127
    %s145 = sphi 0, %s145
    %s147 = sphi 0, %s145
    %s148 = sphi 0, %s147
    %s162 = sphi 0, %s148
    %s166 = sphi 0, %s166
    %s168 = sphi 0, %s166
    %s169 = sphi 0, %s168
    %s183 = sphi 0, %s169
    %s187 = sphi 0, %s187
    %s189 = sphi 0, %s187
    %s190 = sphi 0, %s189
    %s204 = sphi 0, %s190
    %s208 = sphi 0, %s208
    %s210 = sphi 0, %s208
    %s211 = sphi 0, %s210
    %s225 = sphi 0, %s211
    %s229 = sphi 0, %s229
    %s231 = sphi 0, %s229
    %s232 = sphi 0, %s231
    %s246 = sphi 0, %s232
    %s250 = sphi 0, %s250
    %s252 = sphi 0, %s250
    %s253 = sphi 0, %s252
    %s267 = sphi 0, %s253
    %s271 = sphi 0, %s271
    %s273 = sphi 0, %s271
    %s274 = sphi 0, %s273
    %s288 = sphi 0, %s274
    %s292 = sphi 0, %s292
    %s294 = sphi 0, %s292
    %s295 = sphi 0, %s294
    %s309 = sphi 0, %s295
    %s313 = sphi 0, %s313
    %s315 = sphi 0, %s313
    %s316 = sphi 0, %s315
    %s330 = sphi 0, %s316
    %s336 = sphi 0, %s338
    %s339 = sphi 0, %s336
    %s340 = sphi 0, %s339
    %s356 = sphi 0, %s340
    %s362 = sphi 0, %s364
    %s365 = sphi 0, %s362
    %s366 = sphi 0, %s365
    %s382 = sphi 0, %s366
  $region4: #{_mlp_forward_impl.1} parent=0 // loop_header_branch
    %25 = sbr.rel (%p23) target = $region8
  $region5: #{_mlp_forward_impl.1} parent=0 // loop_body
    %s27 = ssub.s32 %s22, 1
    %s28 = ssub.s32 %s22, 2
    %s29 = sadd.s32 %s22, 1
    %s30 = ssub.s32 %s22, %s29
    %p31 = scmp.eq.s32.totalorder %s30, 0
    %s33 = sadd.s32 %s32, 1
    %s34 = scalar_select %p31, %s32, %s33
    %p37 = pneg %p31
    %p38 = scmp.eq.s32.totalorder %s22, 3
    %p39 = por %p37, %p38
    %p40 = scmp.ne.s32.totalorder %s32, %s35
    %p41 = scmp.eq.s32.totalorder %s22, 0
    %p42 = por %p40, %p41
    %p43 = scmp.ne.s32.totalorder %s32, %s35
    %p44 = scmp.eq.s32.totalorder %s27, 3
    %p45 = por %p43, %p44
    %p46 = scmp.ne.s32.totalorder %s35, %s36
    %p47 = scmp.eq.s32.totalorder %s27, 0
    %p48 = por %p46, %p47
    %p49 = scmp.ne.s32.totalorder %s35, %s36
    %p50 = scmp.eq.s32.totalorder %s28, 3
    %p51 = por %p49, %p50
    %p53 = scmp.ne.s32.totalorder %s36, %s52
    %p54 = scmp.eq.s32.totalorder %s28, 0
    %p55 = por %p53, %p54
    %s56 = ssub.s32 %s22, %s29
    %p57 = scmp.eq.s32.totalorder %s56, 0
    %s59 = sadd.s32 %s58, 1
    %s60 = scalar_select %p57, %s58, %s59
    %p63 = pneg %p57
    %p64 = scmp.eq.s32.totalorder %s22, 3
    %p65 = por %p63, %p64
    %p66 = scmp.ne.s32.totalorder %s58, %s61
    %p67 = scmp.eq.s32.totalorder %s22, 0
    %p68 = por %p66, %p67
    %p69 = scmp.ne.s32.totalorder %s58, %s61
    %p70 = scmp.eq.s32.totalorder %s27, 3
    %p71 = por %p69, %p70
    %p72 = scmp.ne.s32.totalorder %s61, %s62
    %p73 = scmp.eq.s32.totalorder %s27, 0
    %p74 = por %p72, %p73
    %p75 = scmp.ne.s32.totalorder %s61, %s62
    %p76 = scmp.eq.s32.totalorder %s28, 3
    %p77 = por %p75, %p76
    %p79 = scmp.ne.s32.totalorder %s62, %s78
    %p80 = scmp.eq.s32.totalorder %s28, 0
    %p81 = por %p79, %p80
    %s83 = sadd.s32 %s82, 1
    %p86 = scmp.eq.s32.totalorder %s22, 3
    %p87 = scmp.ne.s32.totalorder %s82, %s84
    %p88 = scmp.eq.s32.totalorder %s22, 0
    %p89 = por %p87, %p88
    %p90 = scmp.ne.s32.totalorder %s82, %s84
    %p91 = scmp.eq.s32.totalorder %s27, 3
    %p92 = por %p90, %p91
    %p93 = scmp.ne.s32.totalorder %s84, %s85
    %p94 = scmp.eq.s32.totalorder %s27, 0
    %p95 = por %p93, %p94
    %p96 = scmp.ne.s32.totalorder %s84, %s85
    %p97 = scmp.eq.s32.totalorder %s28, 3
    %p98 = por %p96, %p97
    %p100 = scmp.ne.s32.totalorder %s85, %s99
    %p101 = scmp.eq.s32.totalorder %s28, 0
    %p102 = por %p100, %p101
    %s104 = sadd.s32 %s103, 1
    %p107 = scmp.eq.s32.totalorder %s22, 3
    %p108 = scmp.ne.s32.totalorder %s103, %s105
    %p109 = scmp.eq.s32.totalorder %s22, 0
    %p110 = por %p108, %p109
    %p111 = scmp.ne.s32.totalorder %s103, %s105
    %p112 = scmp.eq.s32.totalorder %s27, 3
    %p113 = por %p111, %p112
    %p114 = scmp.ne.s32.totalorder %s105, %s106
    %p115 = scmp.eq.s32.totalorder %s27, 0
    %p116 = por %p114, %p115
    %p117 = scmp.ne.s32.totalorder %s105, %s106
    %p118 = scmp.eq.s32.totalorder %s28, 3
    %p119 = por %p117, %p118
    %p121 = scmp.ne.s32.totalorder %s106, %s120
    %p122 = scmp.eq.s32.totalorder %s28, 0
    %p123 = por %p121, %p122
    %s125 = sadd.s32 %s124, 1
    %p128 = scmp.eq.s32.totalorder %s22, 3
    %p129 = scmp.ne.s32.totalorder %s124, %s126
    %p130 = scmp.eq.s32.totalorder %s22, 0
    %p131 = por %p129, %p130
    %p132 = scmp.ne.s32.totalorder %s124, %s126
    %p133 = scmp.eq.s32.totalorder %s27, 3
    %p134 = por %p132, %p133
    %p135 = scmp.ne.s32.totalorder %s126, %s127
    %p136 = scmp.eq.s32.totalorder %s27, 0
    %p137 = por %p135, %p136
    %p138 = scmp.ne.s32.totalorder %s126, %s127
    %p139 = scmp.eq.s32.totalorder %s28, 3
    %p140 = por %p138, %p139
    %p142 = scmp.ne.s32.totalorder %s127, %s141
    %p143 = scmp.eq.s32.totalorder %s28, 0
    %p144 = por %p142, %p143
    %s146 = sadd.s32 %s145, 1
    %p149 = scmp.eq.s32.totalorder %s22, 3
    %p150 = scmp.ne.s32.totalorder %s145, %s147
    %p151 = scmp.eq.s32.totalorder %s22, 0
    %p152 = por %p150, %p151
    %p153 = scmp.ne.s32.totalorder %s145, %s147
    %p154 = scmp.eq.s32.totalorder %s27, 3
    %p155 = por %p153, %p154
    %p156 = scmp.ne.s32.totalorder %s147, %s148
    %p157 = scmp.eq.s32.totalorder %s27, 0
    %p158 = por %p156, %p157
    %p159 = scmp.ne.s32.totalorder %s147, %s148
    %p160 = scmp.eq.s32.totalorder %s28, 3
    %p161 = por %p159, %p160
    %p163 = scmp.ne.s32.totalorder %s148, %s162
    %p164 = scmp.eq.s32.totalorder %s28, 0
    %p165 = por %p163, %p164
    %s167 = sadd.s32 %s166, 1
    %p170 = scmp.eq.s32.totalorder %s22, 3
    %p171 = scmp.ne.s32.totalorder %s166, %s168
    %p172 = scmp.eq.s32.totalorder %s22, 0
    %p173 = por %p171, %p172
    %p174 = scmp.ne.s32.totalorder %s166, %s168
    %p175 = scmp.eq.s32.totalorder %s27, 3
    %p176 = por %p174, %p175
    %p177 = scmp.ne.s32.totalorder %s168, %s169
    %p178 = scmp.eq.s32.totalorder %s27, 0
    %p179 = por %p177, %p178
    %p180 = scmp.ne.s32.totalorder %s168, %s169
    %p181 = scmp.eq.s32.totalorder %s28, 3
    %p182 = por %p180, %p181
    %p184 = scmp.ne.s32.totalorder %s169, %s183
    %p185 = scmp.eq.s32.totalorder %s28, 0
    %p186 = por %p184, %p185
    %s188 = sadd.s32 %s187, 1
    %p191 = scmp.eq.s32.totalorder %s22, 3
    %p192 = scmp.ne.s32.totalorder %s187, %s189
    %p193 = scmp.eq.s32.totalorder %s22, 0
    %p194 = por %p192, %p193
    %p195 = scmp.ne.s32.totalorder %s187, %s189
    %p196 = scmp.eq.s32.totalorder %s27, 3
    %p197 = por %p195, %p196
    %p198 = scmp.ne.s32.totalorder %s189, %s190
    %p199 = scmp.eq.s32.totalorder %s27, 0
    %p200 = por %p198, %p199
    %p201 = scmp.ne.s32.totalorder %s189, %s190
    %p202 = scmp.eq.s32.totalorder %s28, 3
    %p203 = por %p201, %p202
    %p205 = scmp.ne.s32.totalorder %s190, %s204
    %p206 = scmp.eq.s32.totalorder %s28, 0
    %p207 = por %p205, %p206
    %s209 = sadd.s32 %s208, 1
    %p212 = scmp.eq.s32.totalorder %s22, 3
    %p213 = scmp.ne.s32.totalorder %s208, %s210
    %p214 = scmp.eq.s32.totalorder %s22, 0
    %p215 = por %p213, %p214
    %p216 = scmp.ne.s32.totalorder %s208, %s210
    %p217 = scmp.eq.s32.totalorder %s27, 3
    %p218 = por %p216, %p217
    %p219 = scmp.ne.s32.totalorder %s210, %s211
    %p220 = scmp.eq.s32.totalorder %s27, 0
    %p221 = por %p219, %p220
    %p222 = scmp.ne.s32.totalorder %s210, %s211
    %p223 = scmp.eq.s32.totalorder %s28, 3
    %p224 = por %p222, %p223
    %p226 = scmp.ne.s32.totalorder %s211, %s225
    %p227 = scmp.eq.s32.totalorder %s28, 0
    %p228 = por %p226, %p227
    %s230 = sadd.s32 %s229, 1
    %p233 = scmp.eq.s32.totalorder %s22, 3
    %p234 = scmp.ne.s32.totalorder %s229, %s231
    %p235 = scmp.eq.s32.totalorder %s22, 0
    %p236 = por %p234, %p235
    %p237 = scmp.ne.s32.totalorder %s229, %s231
    %p238 = scmp.eq.s32.totalorder %s27, 3
    %p239 = por %p237, %p238
    %p240 = scmp.ne.s32.totalorder %s231, %s232
    %p241 = scmp.eq.s32.totalorder %s27, 0
    %p242 = por %p240, %p241
    %p243 = scmp.ne.s32.totalorder %s231, %s232
    %p244 = scmp.eq.s32.totalorder %s28, 3
    %p245 = por %p243, %p244
    %p247 = scmp.ne.s32.totalorder %s232, %s246
    %p248 = scmp.eq.s32.totalorder %s28, 0
    %p249 = por %p247, %p248
    %s251 = sadd.s32 %s250, 1
    %p254 = scmp.eq.s32.totalorder %s22, 3
    %p255 = scmp.ne.s32.totalorder %s250, %s252
    %p256 = scmp.eq.s32.totalorder %s22, 0
    %p257 = por %p255, %p256
    %p258 = scmp.ne.s32.totalorder %s250, %s252
    %p259 = scmp.eq.s32.totalorder %s27, 3
    %p260 = por %p258, %p259
    %p261 = scmp.ne.s32.totalorder %s252, %s253
    %p262 = scmp.eq.s32.totalorder %s27, 0
    %p263 = por %p261, %p262
    %p264 = scmp.ne.s32.totalorder %s252, %s253
    %p265 = scmp.eq.s32.totalorder %s28, 3
    %p266 = por %p264, %p265
    %p268 = scmp.ne.s32.totalorder %s253, %s267
    %p269 = scmp.eq.s32.totalorder %s28, 0
    %p270 = por %p268, %p269
    %s272 = sadd.s32 %s271, 1
    %p275 = scmp.eq.s32.totalorder %s22, 3
    %p276 = scmp.ne.s32.totalorder %s271, %s273
    %p277 = scmp.eq.s32.totalorder %s22, 0
    %p278 = por %p276, %p277
    %p279 = scmp.ne.s32.totalorder %s271, %s273
    %p280 = scmp.eq.s32.totalorder %s27, 3
    %p281 = por %p279, %p280
    %p282 = scmp.ne.s32.totalorder %s273, %s274
    %p283 = scmp.eq.s32.totalorder %s27, 0
    %p284 = por %p282, %p283
    %p285 = scmp.ne.s32.totalorder %s273, %s274
    %p286 = scmp.eq.s32.totalorder %s28, 3
    %p287 = por %p285, %p286
    %p289 = scmp.ne.s32.totalorder %s274, %s288
    %p290 = scmp.eq.s32.totalorder %s28, 0
    %p291 = por %p289, %p290
    %s293 = sadd.s32 %s292, 1
    %p296 = scmp.eq.s32.totalorder %s22, 3
    %p297 = scmp.ne.s32.totalorder %s292, %s294
    %p298 = scmp.eq.s32.totalorder %s22, 0
    %p299 = por %p297, %p298
    %p300 = scmp.ne.s32.totalorder %s292, %s294
    %p301 = scmp.eq.s32.totalorder %s27, 3
    %p302 = por %p300, %p301
    %p303 = scmp.ne.s32.totalorder %s294, %s295
    %p304 = scmp.eq.s32.totalorder %s27, 0
    %p305 = por %p303, %p304
    %p306 = scmp.ne.s32.totalorder %s294, %s295
    %p307 = scmp.eq.s32.totalorder %s28, 3
    %p308 = por %p306, %p307
    %p310 = scmp.ne.s32.totalorder %s295, %s309
    %p311 = scmp.eq.s32.totalorder %s28, 0
    %p312 = por %p310, %p311
    %s314 = sadd.s32 %s313, 1
    %p317 = scmp.eq.s32.totalorder %s22, 3
    %p318 = scmp.ne.s32.totalorder %s313, %s315
    %p319 = scmp.eq.s32.totalorder %s22, 0
    %p320 = por %p318, %p319
    %p321 = scmp.ne.s32.totalorder %s313, %s315
    %p322 = scmp.eq.s32.totalorder %s27, 3
    %p323 = por %p321, %p322
    %p324 = scmp.ne.s32.totalorder %s315, %s316
    %p325 = scmp.eq.s32.totalorder %s27, 0
    %p326 = por %p324, %p325
    %p327 = scmp.ne.s32.totalorder %s315, %s316
    %p328 = scmp.eq.s32.totalorder %s28, 3
    %p329 = por %p327, %p328
    %p331 = scmp.ne.s32.totalorder %s316, %s330
    %p332 = scmp.eq.s32.totalorder %s28, 0
    %p333 = por %p331, %p332
    %s334 = ssub.s32 %s22, %s29
    %p335 = scmp.eq.s32.totalorder %s334, 0
    %s337 = sadd.s32 %s336, 1
    %s338 = scalar_select %p335, %s336, %s337
    %p341 = pneg %p335
    %p342 = scmp.eq.s32.totalorder %s22, 3
    %p343 = por %p341, %p342
    %p344 = scmp.ne.s32.totalorder %s336, %s339
    %p345 = scmp.eq.s32.totalorder %s22, 0
    %p346 = por %p344, %p345
    %p347 = scmp.ne.s32.totalorder %s336, %s339
    %p348 = scmp.eq.s32.totalorder %s27, 3
    %p349 = por %p347, %p348
    %p350 = scmp.ne.s32.totalorder %s339, %s340
    %p351 = scmp.eq.s32.totalorder %s27, 0
    %p352 = por %p350, %p351
    %p353 = scmp.ne.s32.totalorder %s339, %s340
    %p354 = scmp.eq.s32.totalorder %s28, 3
    %p355 = por %p353, %p354
    %p357 = scmp.ne.s32.totalorder %s340, %s356
    %p358 = scmp.eq.s32.totalorder %s28, 0
    %p359 = por %p357, %p358
    %s360 = ssub.s32 %s22, %s29
    %p361 = scmp.eq.s32.totalorder %s360, 0
    %s363 = sadd.s32 %s362, 1
    %s364 = scalar_select %p361, %s362, %s363
    %p367 = pneg %p361
    %p368 = scmp.eq.s32.totalorder %s22, 3
    %p369 = por %p367, %p368
    %p370 = scmp.ne.s32.totalorder %s362, %s365
    %p371 = scmp.eq.s32.totalorder %s22, 0
    %p372 = por %p370, %p371
    %p373 = scmp.ne.s32.totalorder %s362, %s365
    %p374 = scmp.eq.s32.totalorder %s27, 3
    %p375 = por %p373, %p374
    %p376 = scmp.ne.s32.totalorder %s365, %s366
    %p377 = scmp.eq.s32.totalorder %s27, 0
    %p378 = por %p376, %p377
    %p379 = scmp.ne.s32.totalorder %s365, %s366
    %p380 = scmp.eq.s32.totalorder %s28, 3
    %p381 = por %p379, %p380
    %p383 = scmp.ne.s32.totalorder %s366, %s382
    %p384 = scmp.eq.s32.totalorder %s28, 0
    %p385 = por %p383, %p384
    %p386 = scmp.le.s32.totalorder 1, %s22
    %p387 = scmp.lt.s32.totalorder %s22, 5
    %p388 = pnand %p386, %p387
    %p389 = pneg %p388
    // Predicated region
    $region9: #{_mlp_forward_impl.1} parent=5 // pred_check
      _
    $region10: #{_mlp_forward_impl.1} parent=5 // pred_check_branch
      %391 = sbr.rel (%p388) target = $region12
    $region11: #{_mlp_forward_impl.1} parent=5 // pred_region
      %s392 = ssub.s32 %s22, 1
      // Predicated region
      $region13: #{_mlp_forward_impl.1} parent=11 // pred_check
        %p393 = pneg %p95
      $region14: #{_mlp_forward_impl.1} parent=11 // pred_check_branch
        %395 = sbr.rel (%p393) target = $region16
      $region15: #{_mlp_forward_impl.1} parent=11 // pred_region
        _
      $region16: #{_mlp_forward_impl.1} parent=11 // pred_fallthru
        _
      // Predicated region
      $region17: #{_mlp_forward_impl.1} parent=11 // pred_check
        %p396 = pneg %p116
      $region18: #{_mlp_forward_impl.1} parent=11 // pred_check_branch
        %398 = sbr.rel (%p396) target = $region20
      $region19: #{_mlp_forward_impl.1} parent=11 // pred_region
        _
      $region20: #{_mlp_forward_impl.1} parent=11 // pred_fallthru
        _
      // Predicated region
      $region21: #{_mlp_forward_impl.1} parent=11 // pred_check
        %p399 = pneg %p137
      $region22: #{_mlp_forward_impl.1} parent=11 // pred_check_branch
        %401 = sbr.rel (%p399) target = $region24
      $region23: #{_mlp_forward_impl.1} parent=11 // pred_region
        _
      $region24: #{_mlp_forward_impl.1} parent=11 // pred_fallthru
        _
      // Predicated region
      $region25: #{_mlp_forward_impl.1} parent=11 // pred_check
        %p402 = pneg %p158
      $region26: #{_mlp_forward_impl.1} parent=11 // pred_check_branch
        %404 = sbr.rel (%p402) target = $region28
      $region27: #{_mlp_forward_impl.1} parent=11 // pred_region
        _
      $region28: #{_mlp_forward_impl.1} parent=11 // pred_fallthru
        _
      // Predicated region
      $region29: #{_mlp_forward_impl.1} parent=11 // pred_check
        %p405 = pneg %p179
      $region30: #{_mlp_forward_impl.1} parent=11 // pred_check_branch
        %407 = sbr.rel (%p405) target = $region32
      $region31: #{_mlp_forward_impl.1} parent=11 // pred_region
        _
      $region32: #{_mlp_forward_impl.1} parent=11 // pred_fallthru
        _
      // Predicated region
      $region33: #{_mlp_forward_impl.1} parent=11 // pred_check
        %p408 = pneg %p200
      $region34: #{_mlp_forward_impl.1} parent=11 // pred_check_branch
        %410 = sbr.rel (%p408) target = $region36
      $region35: #{_mlp_forward_impl.1} parent=11 // pred_region
        _
      $region36: #{_mlp_forward_impl.1} parent=11 // pred_fallthru
        _
      // Predicated region
      $region37: #{_mlp_forward_impl.1} parent=11 // pred_check
        %p411 = pneg %p221
      $region38: #{_mlp_forward_impl.1} parent=11 // pred_check_branch
        %413 = sbr.rel (%p411) target = $region40
      $region39: #{_mlp_forward_impl.1} parent=11 // pred_region
        _
      $region40: #{_mlp_forward_impl.1} parent=11 // pred_fallthru
        _
      // Predicated region
      $region41: #{_mlp_forward_impl.1} parent=11 // pred_check
        %p414 = pneg %p242
      $region42: #{_mlp_forward_impl.1} parent=11 // pred_check_branch
        %416 = sbr.rel (%p414) target = $region44
      $region43: #{_mlp_forward_impl.1} parent=11 // pred_region
        _
      $region44: #{_mlp_forward_impl.1} parent=11 // pred_fallthru
        _
      // Predicated region
      $region45: #{_mlp_forward_impl.1} parent=11 // pred_check
        %p417 = pneg %p263
      $region46: #{_mlp_forward_impl.1} parent=11 // pred_check_branch
        %419 = sbr.rel (%p417) target = $region48
      $region47: #{_mlp_forward_impl.1} parent=11 // pred_region
        _
      $region48: #{_mlp_forward_impl.1} parent=11 // pred_fallthru
        _
      // Predicated region
      $region49: #{_mlp_forward_impl.1} parent=11 // pred_check
        %p420 = pneg %p284
      $region50: #{_mlp_forward_impl.1} parent=11 // pred_check_branch
        %422 = sbr.rel (%p420) target = $region52
      $region51: #{_mlp_forward_impl.1} parent=11 // pred_region
        _
      $region52: #{_mlp_forward_impl.1} parent=11 // pred_fallthru
        _
      // Predicated region
      $region53: #{_mlp_forward_impl.1} parent=11 // pred_check
        %p423 = pneg %p305
      $region54: #{_mlp_forward_impl.1} parent=11 // pred_check_branch
        %425 = sbr.rel (%p423) target = $region56
      $region55: #{_mlp_forward_impl.1} parent=11 // pred_region
        _
      $region56: #{_mlp_forward_impl.1} parent=11 // pred_fallthru
        _
      // Predicated region
      $region57: #{_mlp_forward_impl.1} parent=11 // pred_check
        %p426 = pneg %p326
      $region58: #{_mlp_forward_impl.1} parent=11 // pred_check_branch
        %428 = sbr.rel (%p426) target = $region60
      $region59: #{_mlp_forward_impl.1} parent=11 // pred_region
        _
      $region60: #{_mlp_forward_impl.1} parent=11 // pred_fallthru
        _
    $region12: #{_mlp_forward_impl.1} parent=5 // pred_fallthru
      _
    %p429 = scmp.lt.s32.totalorder %s22, 4
    // Predicated region
    $region61: #{_mlp_forward_impl.1} parent=5 // pred_check
      %p430 = pneg %p429
    $region62: #{_mlp_forward_impl.1} parent=5 // pred_check_branch
      %432 = sbr.rel (%p430) target = $region64
    $region63: #{_mlp_forward_impl.1} parent=5 // pred_region
      // Predicated region
      $region65: #{_mlp_forward_impl.1} parent=63 // pred_check
        %p433 = pneg %p42
      $region66: #{_mlp_forward_impl.1} parent=63 // pred_check_branch
        %435 = sbr.rel (%p433) target = $region68
      $region67: #{_mlp_forward_impl.1} parent=63 // pred_region
        %s436 = smul.u32 32, %s22
        %p437 = scmp.lt.s32.totalorder %s436, 127
        %s438 = scalar_select %p437, %s436, 127
        %s439 = smul.addr %s438, 8
        %s440 = scalar_lea.vmem %s0, %s439
        %s441 = smul.u32 32, %s22
      $region68: #{_mlp_forward_impl.1} parent=63 // pred_fallthru
        _
      // Predicated region
      $region69: #{_mlp_forward_impl.1} parent=63 // pred_check
        %p442 = pneg %p68
      $region70: #{_mlp_forward_impl.1} parent=63 // pred_check_branch
        %444 = sbr.rel (%p442) target = $region72
      $region71: #{_mlp_forward_impl.1} parent=63 // pred_region
        %s445 = smul.u32 32, %s22
        %p446 = scmp.lt.s32.totalorder %s445, 127
        %s447 = scalar_select %p446, %s445, 127
        %s448 = smul.addr %s447, 8
        %s449 = scalar_lea.vmem %s1, %s448
        %s450 = smul.u32 32, %s22
      $region72: #{_mlp_forward_impl.1} parent=63 // pred_fallthru
        _
    $region64: #{_mlp_forward_impl.1} parent=5 // pred_fallthru
      _
    %p451 = scmp.le.s32.totalorder 1, %s22
    %p452 = scmp.lt.s32.totalorder %s22, 5
    %p453 = pnand %p451, %p452
    %p454 = pneg %p453
    // Predicated region
    $region73: #{_mlp_forward_impl.1} parent=5 // pred_check
      _
    $region74: #{_mlp_forward_impl.1} parent=5 // pred_check_branch
      %456 = sbr.rel (%p453) target = $region76
    $region75: #{_mlp_forward_impl.1} parent=5 // pred_region
      %s457 = ssub.s32 %s22, 1
      %s458 = smul.u32 32, %s27
      %p459 = scmp.lt.s32.totalorder %s458, 127
      %s460 = scalar_select %p459, %s458, 127
      %s461 = smul.addr %s460, 8
      %s462 = scalar_lea.vmem %s0, %s461
      %p463 = pneg %p48
      %p464 = pneg %p45
      %s465 = smul.u32 32, %s27
      %p466 = scmp.lt.s32.totalorder %s465, 127
      %s467 = scalar_select %p466, %s465, 127
      %s468 = smul.addr %s467, 8
      %s469 = scalar_lea.vmem %s1, %s468
      %p470 = pneg %p74
      %p471 = pneg %p71
      %p472 = pneg %p95
      %p473 = pneg %p92
      %p474 = pneg %p116
      %p475 = pneg %p113
      %p476 = pneg %p137
      %p477 = pneg %p134
      %p478 = pneg %p158
      %p479 = pneg %p155
      %p480 = pneg %p179
      %p481 = pneg %p176
      %p482 = pneg %p200
      %p483 = pneg %p197
      %p484 = pneg %p221
      %p485 = pneg %p218
      %p486 = pneg %p242
      %p487 = pneg %p239
      %p488 = pneg %p263
      %p489 = pneg %p260
      %p490 = pneg %p284
      %p491 = pneg %p281
      %p492 = pneg %p305
      %p493 = pneg %p302
      %p494 = pneg %p326
      %p495 = pneg %p323
      %p496 = pneg %p352
      %p497 = pneg %p349
      %s498 = smul.u32 32, %s27
      %p499 = scmp.lt.s32.totalorder %s498, 127
      %s500 = scalar_select %p499, %s498, 127
      %s501 = smul.addr %s500, 8
      %s502 = scalar_lea.vmem %s14, %s501
      %p503 = pneg %p378
      %p504 = pneg %p375
      %s505 = smul.u32 32, %s27
      %p506 = scmp.lt.s32.totalorder %s505, 127
      %s507 = scalar_select %p506, %s505, 127
      %s508 = smul.addr %s507, 8
      %s509 = scalar_lea.vmem %s15, %s508
      %s510 = smul.u32 32, %s27
      %p511 = scmp.lt.s32.totalorder %s510, 127
      %s512 = scalar_select %p511, %s510, 127
      %s513 = smul.addr %s512, 8
      %s514 = scalar_lea.vmem %s0, %s513
      %s515 = smul.u32 32, %s27
      %s516 = smul.u32 32, %s27
      %p517 = scmp.lt.s32.totalorder %s516, 127
      %s518 = scalar_select %p517, %s516, 127
      %s519 = smul.addr %s518, 8
      %s520 = scalar_lea.vmem %s1, %s519
      %s521 = smul.u32 32, %s27
      %s522 = smul.u32 32, %s27
      %p523 = scmp.lt.s32.totalorder %s522, 127
      %s524 = scalar_select %p523, %s522, 127
      %s525 = smul.addr %s524, 8
      %s526 = scalar_lea.vmem %s14, %s525
      %s527 = smul.u32 32, %s27
      %s528 = smul.u32 32, %s27
      %p529 = scmp.lt.s32.totalorder %s528, 127
      %s530 = scalar_select %p529, %s528, 127
      %s531 = smul.addr %s530, 8
      %s532 = scalar_lea.vmem %s15, %s531
      %s533 = smul.u32 32, %s27
      %v535 = vld [vmem:[%s514] sm:$0xff]
      %v536 = vld [vmem:[%s514 + $0x8] sm:$0xff]
      %v537 = vld [vmem:[%s514 + $0x10] sm:$0xff]
      %v538 = vld [vmem:[%s514 + $0x18] sm:$0xff]
      %v539 = vld [vmem:[%s514 + $0x20] sm:$0xff]
      %v540 = vld [vmem:[%s514 + $0x28] sm:$0xff]
      %v541 = vld [vmem:[%s514 + $0x30] sm:$0xff]
      %v542 = vld [vmem:[%s514 + $0x38] sm:$0xff]
      %v543 = vld [vmem:[%s514 + $0x40] sm:$0xff]
      %v544 = vld [vmem:[%s514 + $0x48] sm:$0xff]
      %v545 = vld [vmem:[%s514 + $0x50] sm:$0xff]
      %v546 = vld [vmem:[%s514 + $0x58] sm:$0xff]
      %v547 = vld [vmem:[%s514 + $0x60] sm:$0xff]
      %v548 = vld [vmem:[%s514 + $0x68] sm:$0xff]
      %v549 = vld [vmem:[%s514 + $0x70] sm:$0xff]
      %v550 = vld [vmem:[%s514 + $0x78] sm:$0xff]
      %v551 = vld [vmem:[%s514 + $0x80] sm:$0xff]
      %v552 = vld [vmem:[%s514 + $0x88] sm:$0xff]
      %v553 = vld [vmem:[%s514 + $0x90] sm:$0xff]
      %v554 = vld [vmem:[%s514 + $0x98] sm:$0xff]
      %v555 = vld [vmem:[%s514 + $0xa0] sm:$0xff]
      %v556 = vld [vmem:[%s514 + $0xa8] sm:$0xff]
      %v557 = vld [vmem:[%s514 + $0xb0] sm:$0xff]
      %v558 = vld [vmem:[%s514 + $0xb8] sm:$0xff]
      %v559 = vld [vmem:[%s514 + $0xc0] sm:$0xff]
      %v560 = vld [vmem:[%s514 + $0xc8] sm:$0xff]
      %v561 = vld [vmem:[%s514 + $0xd0] sm:$0xff]
      %v562 = vld [vmem:[%s514 + $0xd8] sm:$0xff]
      %v563 = vld [vmem:[%s514 + $0xe0] sm:$0xff]
      %v564 = vld [vmem:[%s514 + $0xe8] sm:$0xff]
      %v565 = vld [vmem:[%s514 + $0xf0] sm:$0xff]
      %v566 = vld [vmem:[%s514 + $0xf8] sm:$0xff]
      %v567 = vpack.c.bf16 %v536, %v535
      %v568 = vpack.c.bf16 %v538, %v537
      %v569 = vpack.c.bf16 %v540, %v539
      %v570 = vpack.c.bf16 %v542, %v541
      %v571 = vpack.c.bf16 %v544, %v543
      %v572 = vpack.c.bf16 %v546, %v545
      %v573 = vpack.c.bf16 %v548, %v547
      %v574 = vpack.c.bf16 %v550, %v549
      %v575 = vpack.c.bf16 %v552, %v551
      %v576 = vpack.c.bf16 %v554, %v553
      %v577 = vpack.c.bf16 %v556, %v555
      %v578 = vpack.c.bf16 %v558, %v557
      %v579 = vpack.c.bf16 %v560, %v559
      %v580 = vpack.c.bf16 %v562, %v561
      %v581 = vpack.c.bf16 %v564, %v563
      %v582 = vpack.c.bf16 %v566, %v565
      %v583 = vld [vmem:[%s2] sm:$0xff]
      %v584 = vld [vmem:[%s2 + $0x8] sm:$0xff]
      %v585 = vld [vmem:[%s2 + $0x10] sm:$0xff]
      %v586 = vld [vmem:[%s2 + $0x18] sm:$0xff]
      %v591 = vunpack.c.l.b16 %v583
      %v592 = vunpack.c.h.b16 %v583
      %v593 = vunpack.c.l.b16 %v584
      %v594 = vunpack.c.h.b16 %v584
      %v595 = vunpack.c.l.b16 %v585
      %v596 = vunpack.c.h.b16 %v585
      %v597 = vunpack.c.l.b16 %v586
      %v598 = vunpack.c.h.b16 %v586
      %v599 = vpack.c.b16 %v593, %v591
      %v600 = vpack.c.b16 %v594, %v592
      %v601 = vpack.c.b16 %v597, %v595
      %v602 = vpack.c.b16 %v598, %v596
      %vm607 = vcmask 261120
      %v609 = vsel %vm607, %v567, 0
      %v612 = vsel %vm607, %v568, 0
      %v615 = vsel %vm607, %v569, 0
      %v618 = vsel %vm607, %v570, 0
      %v621 = vsel %vm607, %v571, 0
      %v624 = vsel %vm607, %v572, 0
      %v627 = vsel %vm607, %v573, 0
      %v630 = vsel %vm607, %v574, 0
      %v633 = vsel %vm607, %v575, 0
      %v636 = vsel %vm607, %v576, 0
      %v639 = vsel %vm607, %v577, 0
      %v642 = vsel %vm607, %v578, 0
      %v645 = vsel %vm607, %v579, 0
      %v648 = vsel %vm607, %v580, 0
      %v651 = vsel %vm607, %v581, 0
      %v654 = vsel %vm607, %v582, 0
      %656 = vmatpush.bf16.msra.mxu0 0
      %657 = vmatpush.bf16.msra.mxu0 0
      %658 = vmatpush.bf16.msra.mxu0 0
      %659 = vmatpush.bf16.msra.mxu0 0
      %660 = vmatpush.bf16.msra.mxu0 0
      %661 = vmatpush.bf16.msra.mxu0 0
      %662 = vmatpush.bf16.msra.mxu0 %v601
      %663 = vmatpush.bf16.msra.mxu0 %v599
      %664 = vmatmul.bf16.gmra.mxu0 %v609
      %v665 = vpop.f32.mrf.mxu0
      %v666 = vadd.f32 0.0, %v665
      %v667 = vpop.f32.mrf.mxu0
      %v668 = vadd.f32 0.0, %v667
      %669 = vmatmul.bf16.gmra.mxu0 %v612
      %v670 = vpop.f32.mrf.mxu0
      %v671 = vadd.f32 0.0, %v670
      %v672 = vpop.f32.mrf.mxu0
      %v673 = vadd.f32 0.0, %v672
      %674 = vmatmul.bf16.gmra.mxu0 %v615
      %v675 = vpop.f32.mrf.mxu0
      %v676 = vadd.f32 0.0, %v675
      %v677 = vpop.f32.mrf.mxu0
      %v678 = vadd.f32 0.0, %v677
      %679 = vmatmul.bf16.gmra.mxu0 %v618
      %v680 = vpop.f32.mrf.mxu0
      %v681 = vadd.f32 0.0, %v680
      %v682 = vpop.f32.mrf.mxu0
      %v683 = vadd.f32 0.0, %v682
      %684 = vmatmul.bf16.gmra.mxu0 %v621
      %v685 = vpop.f32.mrf.mxu0
      %v686 = vadd.f32 0.0, %v685
      %v687 = vpop.f32.mrf.mxu0
      %v688 = vadd.f32 0.0, %v687
      %689 = vmatmul.bf16.gmra.mxu0 %v624
      %v690 = vpop.f32.mrf.mxu0
      %v691 = vadd.f32 0.0, %v690
      %v692 = vpop.f32.mrf.mxu0
      %v693 = vadd.f32 0.0, %v692
      %694 = vmatmul.bf16.gmra.mxu0 %v627
      %v695 = vpop.f32.mrf.mxu0
      %v696 = vadd.f32 0.0, %v695
      %v697 = vpop.f32.mrf.mxu0
      %v698 = vadd.f32 0.0, %v697
      %699 = vmatmul.bf16.gmra.mxu0 %v630
      %v700 = vpop.f32.mrf.mxu0
      %v701 = vadd.f32 0.0, %v700
      %v702 = vpop.f32.mrf.mxu0
      %v703 = vadd.f32 0.0, %v702
      %704 = vmatmul.bf16.gmra.mxu0 %v633
      %v705 = vpop.f32.mrf.mxu0
      %v706 = vadd.f32 0.0, %v705
      %v707 = vpop.f32.mrf.mxu0
      %v708 = vadd.f32 0.0, %v707
      %709 = vmatmul.bf16.gmra.mxu0 %v636
      %v710 = vpop.f32.mrf.mxu0
      %v711 = vadd.f32 0.0, %v710
      %v712 = vpop.f32.mrf.mxu0
      %v713 = vadd.f32 0.0, %v712
      %714 = vmatmul.bf16.gmra.mxu0 %v639
      %v715 = vpop.f32.mrf.mxu0
      %v716 = vadd.f32 0.0, %v715
      %v717 = vpop.f32.mrf.mxu0
      %v718 = vadd.f32 0.0, %v717
      %719 = vmatmul.bf16.gmra.mxu0 %v642
      %v720 = vpop.f32.mrf.mxu0
      %v721 = vadd.f32 0.0, %v720
      %v722 = vpop.f32.mrf.mxu0
      %v723 = vadd.f32 0.0, %v722
      %724 = vmatmul.bf16.gmra.mxu0 %v645
      %v725 = vpop.f32.mrf.mxu0
      %v726 = vadd.f32 0.0, %v725
      %v727 = vpop.f32.mrf.mxu0
      %v728 = vadd.f32 0.0, %v727
      %729 = vmatmul.bf16.gmra.mxu0 %v648
      %v730 = vpop.f32.mrf.mxu0
      %v731 = vadd.f32 0.0, %v730
      %v732 = vpop.f32.mrf.mxu0
      %v733 = vadd.f32 0.0, %v732
      %734 = vmatmul.bf16.gmra.mxu0 %v651
      %v735 = vpop.f32.mrf.mxu0
      %v736 = vadd.f32 0.0, %v735
      %v737 = vpop.f32.mrf.mxu0
      %v738 = vadd.f32 0.0, %v737
      %739 = vmatmul.bf16.gmra.mxu0 %v654
      %v740 = vpop.f32.mrf.mxu0
      %v741 = vadd.f32 0.0, %v740
      %v742 = vpop.f32.mrf.mxu0
      %v743 = vadd.f32 0.0, %v742
      %744 = vdwg.mxu0
      %745 = vmatpush.bf16.msra.mxu0 0
      %746 = vmatpush.bf16.msra.mxu0 0
      %747 = vmatpush.bf16.msra.mxu0 0
      %748 = vmatpush.bf16.msra.mxu0 0
      %749 = vmatpush.bf16.msra.mxu0 0
      %750 = vmatpush.bf16.msra.mxu0 0
      %751 = vmatpush.bf16.msra.mxu0 %v602
      %752 = vmatpush.bf16.msra.mxu0 %v600
      %753 = vmatmul.bf16.gmra.mxu0 %v609
      %v754 = vpop.f32.mrf.mxu0
      %v755 = vadd.f32 0.0, %v754
      %v756 = vpop.f32.mrf.mxu0
      %v757 = vadd.f32 0.0, %v756
      %758 = vmatmul.bf16.gmra.mxu0 %v612
      %v759 = vpop.f32.mrf.mxu0
      %v760 = vadd.f32 0.0, %v759
      %v761 = vpop.f32.mrf.mxu0
      %v762 = vadd.f32 0.0, %v761
      %763 = vmatmul.bf16.gmra.mxu0 %v615
      %v764 = vpop.f32.mrf.mxu0
      %v765 = vadd.f32 0.0, %v764
      %v766 = vpop.f32.mrf.mxu0
      %v767 = vadd.f32 0.0, %v766
      %768 = vmatmul.bf16.gmra.mxu0 %v618
      %v769 = vpop.f32.mrf.mxu0
      %v770 = vadd.f32 0.0, %v769
      %v771 = vpop.f32.mrf.mxu0
      %v772 = vadd.f32 0.0, %v771
      %773 = vmatmul.bf16.gmra.mxu0 %v621
      %v774 = vpop.f32.mrf.mxu0
      %v775 = vadd.f32 0.0, %v774
      %v776 = vpop.f32.mrf.mxu0
      %v777 = vadd.f32 0.0, %v776
      %778 = vmatmul.bf16.gmra.mxu0 %v624
      %v779 = vpop.f32.mrf.mxu0
      %v780 = vadd.f32 0.0, %v779
      %v781 = vpop.f32.mrf.mxu0
      %v782 = vadd.f32 0.0, %v781
      %783 = vmatmul.bf16.gmra.mxu0 %v627
      %v784 = vpop.f32.mrf.mxu0
      %v785 = vadd.f32 0.0, %v784
      %v786 = vpop.f32.mrf.mxu0
      %v787 = vadd.f32 0.0, %v786
      %788 = vmatmul.bf16.gmra.mxu0 %v630
      %v789 = vpop.f32.mrf.mxu0
      %v790 = vadd.f32 0.0, %v789
      %v791 = vpop.f32.mrf.mxu0
      %v792 = vadd.f32 0.0, %v791
      %793 = vmatmul.bf16.gmra.mxu0 %v633
      %v794 = vpop.f32.mrf.mxu0
      %v795 = vadd.f32 0.0, %v794
      %v796 = vpop.f32.mrf.mxu0
      %v797 = vadd.f32 0.0, %v796
      %798 = vmatmul.bf16.gmra.mxu0 %v636
      %v799 = vpop.f32.mrf.mxu0
      %v800 = vadd.f32 0.0, %v799
      %v801 = vpop.f32.mrf.mxu0
      %v802 = vadd.f32 0.0, %v801
      %803 = vmatmul.bf16.gmra.mxu0 %v639
      %v804 = vpop.f32.mrf.mxu0
      %v805 = vadd.f32 0.0, %v804
      %v806 = vpop.f32.mrf.mxu0
      %v807 = vadd.f32 0.0, %v806
      %808 = vmatmul.bf16.gmra.mxu0 %v642
      %v809 = vpop.f32.mrf.mxu0
      %v810 = vadd.f32 0.0, %v809
      %v811 = vpop.f32.mrf.mxu0
      %v812 = vadd.f32 0.0, %v811
      %813 = vmatmul.bf16.gmra.mxu0 %v645
      %v814 = vpop.f32.mrf.mxu0
      %v815 = vadd.f32 0.0, %v814
      %v816 = vpop.f32.mrf.mxu0
      %v817 = vadd.f32 0.0, %v816
      %818 = vmatmul.bf16.gmra.mxu0 %v648
      %v819 = vpop.f32.mrf.mxu0
      %v820 = vadd.f32 0.0, %v819
      %v821 = vpop.f32.mrf.mxu0
      %v822 = vadd.f32 0.0, %v821
      %823 = vmatmul.bf16.gmra.mxu0 %v651
      %v824 = vpop.f32.mrf.mxu0
      %v825 = vadd.f32 0.0, %v824
      %v826 = vpop.f32.mrf.mxu0
      %v827 = vadd.f32 0.0, %v826
      %828 = vmatmul.bf16.gmra.mxu0 %v654
      %v829 = vpop.f32.mrf.mxu0
      %v830 = vadd.f32 0.0, %v829
      %v831 = vpop.f32.mrf.mxu0
      %v832 = vadd.f32 0.0, %v831
      %833 = vdwg.mxu0
      %v834 = vld [vmem:[%s3] sm:$0x1]
      %v836 = vperm.slane %v834, 0
      %v838 = vadd.f32 %v666, %v836
      %v839 = vadd.f32 %v668, %v836
      %v840 = vadd.f32 %v671, %v836
      %v841 = vadd.f32 %v673, %v836
      %v842 = vadd.f32 %v676, %v836
      %v843 = vadd.f32 %v678, %v836
      %v844 = vadd.f32 %v681, %v836
      %v845 = vadd.f32 %v683, %v836
      %v846 = vadd.f32 %v686, %v836
      %v847 = vadd.f32 %v688, %v836
      %v848 = vadd.f32 %v691, %v836
      %v849 = vadd.f32 %v693, %v836
      %v850 = vadd.f32 %v696, %v836
      %v851 = vadd.f32 %v698, %v836
      %v852 = vadd.f32 %v701, %v836
      %v853 = vadd.f32 %v703, %v836
      %v854 = vadd.f32 %v706, %v836
      %v855 = vadd.f32 %v708, %v836
      %v856 = vadd.f32 %v711, %v836
      %v857 = vadd.f32 %v713, %v836
      %v858 = vadd.f32 %v716, %v836
      %v859 = vadd.f32 %v718, %v836
      %v860 = vadd.f32 %v721, %v836
      %v861 = vadd.f32 %v723, %v836
      %v862 = vadd.f32 %v726, %v836
      %v863 = vadd.f32 %v728, %v836
      %v864 = vadd.f32 %v731, %v836
      %v865 = vadd.f32 %v733, %v836
      %v866 = vadd.f32 %v736, %v836
      %v867 = vadd.f32 %v738, %v836
      %v868 = vadd.f32 %v741, %v836
      %v869 = vadd.f32 %v743, %v836
      %v870 = vmax.f32 %v838, 0.0
      %v871 = vmax.f32 %v839, 0.0
      %v872 = vmax.f32 %v840, 0.0
      %v873 = vmax.f32 %v841, 0.0
      %v874 = vmax.f32 %v842, 0.0
      %v875 = vmax.f32 %v843, 0.0
      %v876 = vmax.f32 %v844, 0.0
      %v877 = vmax.f32 %v845, 0.0
      %v878 = vmax.f32 %v846, 0.0
      %v879 = vmax.f32 %v847, 0.0
      %v880 = vmax.f32 %v848, 0.0
      %v881 = vmax.f32 %v849, 0.0
      %v882 = vmax.f32 %v850, 0.0
      %v883 = vmax.f32 %v851, 0.0
      %v884 = vmax.f32 %v852, 0.0
      %v885 = vmax.f32 %v853, 0.0
      %v886 = vmax.f32 %v854, 0.0
      %v887 = vmax.f32 %v855, 0.0
      %v888 = vmax.f32 %v856, 0.0
      %v889 = vmax.f32 %v857, 0.0
      %v890 = vmax.f32 %v858, 0.0
      %v891 = vmax.f32 %v859, 0.0
      %v892 = vmax.f32 %v860, 0.0
      %v893 = vmax.f32 %v861, 0.0
      %v894 = vmax.f32 %v862, 0.0
      %v895 = vmax.f32 %v863, 0.0
      %v896 = vmax.f32 %v864, 0.0
      %v897 = vmax.f32 %v865, 0.0
      %v898 = vmax.f32 %v866, 0.0
      %v899 = vmax.f32 %v867, 0.0
      %v900 = vmax.f32 %v868, 0.0
      %v901 = vmax.f32 %v869, 0.0
      %v902 = vpack.c.bf16 %v871, %v870
      %v903 = vpack.c.bf16 %v873, %v872
      %v904 = vpack.c.bf16 %v875, %v874
      %v905 = vpack.c.bf16 %v877, %v876
      %v906 = vpack.c.bf16 %v879, %v878
      %v907 = vpack.c.bf16 %v881, %v880
      %v908 = vpack.c.bf16 %v883, %v882
      %v909 = vpack.c.bf16 %v885, %v884
      %v910 = vpack.c.bf16 %v887, %v886
      %v911 = vpack.c.bf16 %v889, %v888
      %v912 = vpack.c.bf16 %v891, %v890
      %v913 = vpack.c.bf16 %v893, %v892
      %v914 = vpack.c.bf16 %v895, %v894
      %v915 = vpack.c.bf16 %v897, %v896
      %v916 = vpack.c.bf16 %v899, %v898
      %v917 = vpack.c.bf16 %v901, %v900
      %v918 = vld [vmem:[%s4] sm:$0xf]
      %v919 = vld [vmem:[%s4 + $0x4] sm:$0xf]
      %v920 = vld [vmem:[%s4 + $0x8] sm:$0xf]
      %v921 = vld [vmem:[%s4 + $0xc] sm:$0xf]
      %v922 = vld [vmem:[%s4 + $0x10] sm:$0xf]
      %v923 = vld [vmem:[%s4 + $0x14] sm:$0xf]
      %v924 = vld [vmem:[%s4 + $0x18] sm:$0xf]
      %v925 = vld [vmem:[%s4 + $0x1c] sm:$0xf]
      %v926 = vld [vmem:[%s4 + $0x20] sm:$0xf]
      %v927 = vld [vmem:[%s4 + $0x24] sm:$0xf]
      %v928 = vld [vmem:[%s4 + $0x28] sm:$0xf]
      %v929 = vld [vmem:[%s4 + $0x2c] sm:$0xf]
      %v930 = vld [vmem:[%s4 + $0x30] sm:$0xf]
      %v931 = vld [vmem:[%s4 + $0x34] sm:$0xf]
      %v932 = vld [vmem:[%s4 + $0x38] sm:$0xf]
      %v933 = vld [vmem:[%s4 + $0x3c] sm:$0xf]
      %v934 = vld [vmem:[%s5] sm:$0x1]
      %v936 = vperm.slane %v934, 0
      %v954 = vunpack.c.l.b16 %v918
      %v955 = vunpack.c.l.b16 %v919
      %v956 = vunpack.c.l.b16 %v920
      %v957 = vunpack.c.l.b16 %v921
      %v958 = vunpack.c.l.b16 %v922
      %v959 = vunpack.c.l.b16 %v923
      %v960 = vunpack.c.l.b16 %v924
      %v961 = vunpack.c.l.b16 %v925
      %v962 = vunpack.c.l.b16 %v926
      %v963 = vunpack.c.l.b16 %v927
      %v964 = vunpack.c.l.b16 %v928
      %v965 = vunpack.c.l.b16 %v929
      %v966 = vunpack.c.l.b16 %v930
      %v967 = vunpack.c.l.b16 %v931
      %v968 = vunpack.c.l.b16 %v932
      %v969 = vunpack.c.l.b16 %v933
      %v970 = vpack.c.b16 %v955, %v954
      %v971 = vpack.c.b16 %v957, %v956
      %v972 = vpack.c.b16 %v959, %v958
      %v973 = vpack.c.b16 %v961, %v960
      %v974 = vpack.c.b16 %v963, %v962
      %v975 = vpack.c.b16 %v965, %v964
      %v976 = vpack.c.b16 %v967, %v966
      %v977 = vpack.c.b16 %v969, %v968
      %986 = vmatpush.bf16.msra.mxu0 %v977
      %987 = vmatpush.bf16.msra.mxu0 %v976
      %988 = vmatpush.bf16.msra.mxu0 %v975
      %989 = vmatpush.bf16.msra.mxu0 %v974
      %990 = vmatpush.bf16.msra.mxu0 %v973
      %991 = vmatpush.bf16.msra.mxu0 %v972
      %992 = vmatpush.bf16.msra.mxu0 %v971
      %993 = vmatpush.bf16.msra.mxu0 %v970
      %994 = vmatmul.bf16.gmra.mxu0 %v902
      %v995 = vpop.f32.mrf.mxu0
      %v996 = vadd.f32 %v936, %v995
      %v997 = vpop.f32.mrf.mxu0
      %v998 = vadd.f32 %v936, %v997
      %999 = vmatmul.bf16.gmra.mxu0 %v903
      %v1000 = vpop.f32.mrf.mxu0
      %v1001 = vadd.f32 %v936, %v1000
      %v1002 = vpop.f32.mrf.mxu0
      %v1003 = vadd.f32 %v936, %v1002
      %1004 = vmatmul.bf16.gmra.mxu0 %v904
      %v1005 = vpop.f32.mrf.mxu0
      %v1006 = vadd.f32 %v936, %v1005
      %v1007 = vpop.f32.mrf.mxu0
      %v1008 = vadd.f32 %v936, %v1007
      %1009 = vmatmul.bf16.gmra.mxu0 %v905
      %v1010 = vpop.f32.mrf.mxu0
      %v1011 = vadd.f32 %v936, %v1010
      %v1012 = vpop.f32.mrf.mxu0
      %v1013 = vadd.f32 %v936, %v1012
      %1014 = vmatmul.bf16.gmra.mxu0 %v906
      %v1015 = vpop.f32.mrf.mxu0
      %v1016 = vadd.f32 %v936, %v1015
      %v1017 = vpop.f32.mrf.mxu0
      %v1018 = vadd.f32 %v936, %v1017
      %1019 = vmatmul.bf16.gmra.mxu0 %v907
      %v1020 = vpop.f32.mrf.mxu0
      %v1021 = vadd.f32 %v936, %v1020
      %v1022 = vpop.f32.mrf.mxu0
      %v1023 = vadd.f32 %v936, %v1022
      %1024 = vmatmul.bf16.gmra.mxu0 %v908
      %v1025 = vpop.f32.mrf.mxu0
      %v1026 = vadd.f32 %v936, %v1025
      %v1027 = vpop.f32.mrf.mxu0
      %v1028 = vadd.f32 %v936, %v1027
      %1029 = vmatmul.bf16.gmra.mxu0 %v909
      %v1030 = vpop.f32.mrf.mxu0
      %v1031 = vadd.f32 %v936, %v1030
      %v1032 = vpop.f32.mrf.mxu0
      %v1033 = vadd.f32 %v936, %v1032
      %1034 = vmatmul.bf16.gmra.mxu0 %v910
      %v1035 = vpop.f32.mrf.mxu0
      %v1036 = vadd.f32 %v936, %v1035
      %v1037 = vpop.f32.mrf.mxu0
      %v1038 = vadd.f32 %v936, %v1037
      %1039 = vmatmul.bf16.gmra.mxu0 %v911
      %v1040 = vpop.f32.mrf.mxu0
      %v1041 = vadd.f32 %v936, %v1040
      %v1042 = vpop.f32.mrf.mxu0
      %v1043 = vadd.f32 %v936, %v1042
      %1044 = vmatmul.bf16.gmra.mxu0 %v912
      %v1045 = vpop.f32.mrf.mxu0
      %v1046 = vadd.f32 %v936, %v1045
      %v1047 = vpop.f32.mrf.mxu0
      %v1048 = vadd.f32 %v936, %v1047
      %1049 = vmatmul.bf16.gmra.mxu0 %v913
      %v1050 = vpop.f32.mrf.mxu0
      %v1051 = vadd.f32 %v936, %v1050
      %v1052 = vpop.f32.mrf.mxu0
      %v1053 = vadd.f32 %v936, %v1052
      %1054 = vmatmul.bf16.gmra.mxu0 %v914
      %v1055 = vpop.f32.mrf.mxu0
      %v1056 = vadd.f32 %v936, %v1055
      %v1057 = vpop.f32.mrf.mxu0
      %v1058 = vadd.f32 %v936, %v1057
      %1059 = vmatmul.bf16.gmra.mxu0 %v915
      %v1060 = vpop.f32.mrf.mxu0
      %v1061 = vadd.f32 %v936, %v1060
      %v1062 = vpop.f32.mrf.mxu0
      %v1063 = vadd.f32 %v936, %v1062
      %1064 = vmatmul.bf16.gmra.mxu0 %v916
      %v1065 = vpop.f32.mrf.mxu0
      %v1066 = vadd.f32 %v936, %v1065
      %v1067 = vpop.f32.mrf.mxu0
      %v1068 = vadd.f32 %v936, %v1067
      %1069 = vmatmul.bf16.gmra.mxu0 %v917
      %v1070 = vpop.f32.mrf.mxu0
      %v1071 = vadd.f32 %v936, %v1070
      %v1072 = vpop.f32.mrf.mxu0
      %v1073 = vadd.f32 %v936, %v1072
      %1074 = vdwg.mxu0
      %v1075 = vmax.f32 %v996, 0.0
      %v1076 = vmax.f32 %v998, 0.0
      %v1077 = vmax.f32 %v1001, 0.0
      %v1078 = vmax.f32 %v1003, 0.0
      %v1079 = vmax.f32 %v1006, 0.0
      %v1080 = vmax.f32 %v1008, 0.0
      %v1081 = vmax.f32 %v1011, 0.0
      %v1082 = vmax.f32 %v1013, 0.0
      %v1083 = vmax.f32 %v1016, 0.0
      %v1084 = vmax.f32 %v1018, 0.0
      %v1085 = vmax.f32 %v1021, 0.0
      %v1086 = vmax.f32 %v1023, 0.0
      %v1087 = vmax.f32 %v1026, 0.0
      %v1088 = vmax.f32 %v1028, 0.0
      %v1089 = vmax.f32 %v1031, 0.0
      %v1090 = vmax.f32 %v1033, 0.0
      %v1091 = vmax.f32 %v1036, 0.0
      %v1092 = vmax.f32 %v1038, 0.0
      %v1093 = vmax.f32 %v1041, 0.0
      %v1094 = vmax.f32 %v1043, 0.0
      %v1095 = vmax.f32 %v1046, 0.0
      %v1096 = vmax.f32 %v1048, 0.0
      %v1097 = vmax.f32 %v1051, 0.0
      %v1098 = vmax.f32 %v1053, 0.0
      %v1099 = vmax.f32 %v1056, 0.0
      %v1100 = vmax.f32 %v1058, 0.0
      %v1101 = vmax.f32 %v1061, 0.0
      %v1102 = vmax.f32 %v1063, 0.0
      %v1103 = vmax.f32 %v1066, 0.0
      %v1104 = vmax.f32 %v1068, 0.0
      %v1105 = vmax.f32 %v1071, 0.0
      %v1106 = vmax.f32 %v1073, 0.0
      %v1107 = vpack.c.bf16 %v1076, %v1075
      %v1108 = vpack.c.bf16 %v1078, %v1077
      %v1109 = vpack.c.bf16 %v1080, %v1079
      %v1110 = vpack.c.bf16 %v1082, %v1081
      %v1111 = vpack.c.bf16 %v1084, %v1083
      %v1112 = vpack.c.bf16 %v1086, %v1085
      %v1113 = vpack.c.bf16 %v1088, %v1087
      %v1114 = vpack.c.bf16 %v1090, %v1089
      %v1115 = vpack.c.bf16 %v1092, %v1091
      %v1116 = vpack.c.bf16 %v1094, %v1093
      %v1117 = vpack.c.bf16 %v1096, %v1095
      %v1118 = vpack.c.bf16 %v1098, %v1097
      %v1119 = vpack.c.bf16 %v1100, %v1099
      %v1120 = vpack.c.bf16 %v1102, %v1101
      %v1121 = vpack.c.bf16 %v1104, %v1103
      %v1122 = vpack.c.bf16 %v1106, %v1105
      %v1123 = vld [vmem:[%s6] sm:$0xf]
      %v1124 = vld [vmem:[%s6 + $0x4] sm:$0xf]
      %v1125 = vld [vmem:[%s6 + $0x8] sm:$0xf]
      %v1126 = vld [vmem:[%s6 + $0xc] sm:$0xf]
      %v1127 = vld [vmem:[%s6 + $0x10] sm:$0xf]
      %v1128 = vld [vmem:[%s6 + $0x14] sm:$0xf]
      %v1129 = vld [vmem:[%s6 + $0x18] sm:$0xf]
      %v1130 = vld [vmem:[%s6 + $0x1c] sm:$0xf]
      %v1131 = vld [vmem:[%s6 + $0x20] sm:$0xf]
      %v1132 = vld [vmem:[%s6 + $0x24] sm:$0xf]
      %v1133 = vld [vmem:[%s6 + $0x28] sm:$0xf]
      %v1134 = vld [vmem:[%s6 + $0x2c] sm:$0xf]
      %v1135 = vld [vmem:[%s6 + $0x30] sm:$0xf]
      %v1136 = vld [vmem:[%s6 + $0x34] sm:$0xf]
      %v1137 = vld [vmem:[%s6 + $0x38] sm:$0xf]
      %v1138 = vld [vmem:[%s6 + $0x3c] sm:$0xf]
      %v1155 = vunpack.c.l.b16 %v1123
      %v1156 = vunpack.c.l.b16 %v1124
      %v1157 = vunpack.c.l.b16 %v1125
      %v1158 = vunpack.c.l.b16 %v1126
      %v1159 = vunpack.c.l.b16 %v1127
      %v1160 = vunpack.c.l.b16 %v1128
      %v1161 = vunpack.c.l.b16 %v1129
      %v1162 = vunpack.c.l.b16 %v1130
      %v1163 = vunpack.c.l.b16 %v1131
      %v1164 = vunpack.c.l.b16 %v1132
      %v1165 = vunpack.c.l.b16 %v1133
      %v1166 = vunpack.c.l.b16 %v1134
      %v1167 = vunpack.c.l.b16 %v1135
      %v1168 = vunpack.c.l.b16 %v1136
      %v1169 = vunpack.c.l.b16 %v1137
      %v1170 = vunpack.c.l.b16 %v1138
      %v1171 = vpack.c.b16 %v1156, %v1155
      %v1172 = vpack.c.b16 %v1158, %v1157
      %v1173 = vpack.c.b16 %v1160, %v1159
      %v1174 = vpack.c.b16 %v1162, %v1161
      %v1175 = vpack.c.b16 %v1164, %v1163
      %v1176 = vpack.c.b16 %v1166, %v1165
      %v1177 = vpack.c.b16 %v1168, %v1167
      %v1178 = vpack.c.b16 %v1170, %v1169
      %1187 = vmatpush.bf16.msra.mxu0 %v1178
      %1188 = vmatpush.bf16.msra.mxu0 %v1177
      %1189 = vmatpush.bf16.msra.mxu0 %v1176
      %1190 = vmatpush.bf16.msra.mxu0 %v1175
      %1191 = vmatpush.bf16.msra.mxu0 %v1174
      %1192 = vmatpush.bf16.msra.mxu0 %v1173
      %1193 = vmatpush.bf16.msra.mxu0 %v1172
      %1194 = vmatpush.bf16.msra.mxu0 %v1171
      %1195 = vmatmul.bf16.gmra.mxu0 %v1107
      %v1196 = vpop.f32.mrf.mxu0
      %v1197 = vadd.f32 %v755, %v1196
      %v1198 = vpop.f32.mrf.mxu0
      %v1199 = vadd.f32 %v757, %v1198
      %1200 = vmatmul.bf16.gmra.mxu0 %v1108
      %v1201 = vpop.f32.mrf.mxu0
      %v1202 = vadd.f32 %v760, %v1201
      %v1203 = vpop.f32.mrf.mxu0
      %v1204 = vadd.f32 %v762, %v1203
      %1205 = vmatmul.bf16.gmra.mxu0 %v1109
      %v1206 = vpop.f32.mrf.mxu0
      %v1207 = vadd.f32 %v765, %v1206
      %v1208 = vpop.f32.mrf.mxu0
      %v1209 = vadd.f32 %v767, %v1208
      %1210 = vmatmul.bf16.gmra.mxu0 %v1110
      %v1211 = vpop.f32.mrf.mxu0
      %v1212 = vadd.f32 %v770, %v1211
      %v1213 = vpop.f32.mrf.mxu0
      %v1214 = vadd.f32 %v772, %v1213
      %1215 = vmatmul.bf16.gmra.mxu0 %v1111
      %v1216 = vpop.f32.mrf.mxu0
      %v1217 = vadd.f32 %v775, %v1216
      %v1218 = vpop.f32.mrf.mxu0
      %v1219 = vadd.f32 %v777, %v1218
      %1220 = vmatmul.bf16.gmra.mxu0 %v1112
      %v1221 = vpop.f32.mrf.mxu0
      %v1222 = vadd.f32 %v780, %v1221
      %v1223 = vpop.f32.mrf.mxu0
      %v1224 = vadd.f32 %v782, %v1223
      %1225 = vmatmul.bf16.gmra.mxu0 %v1113
      %v1226 = vpop.f32.mrf.mxu0
      %v1227 = vadd.f32 %v785, %v1226
      %v1228 = vpop.f32.mrf.mxu0
      %v1229 = vadd.f32 %v787, %v1228
      %1230 = vmatmul.bf16.gmra.mxu0 %v1114
      %v1231 = vpop.f32.mrf.mxu0
      %v1232 = vadd.f32 %v790, %v1231
      %v1233 = vpop.f32.mrf.mxu0
      %v1234 = vadd.f32 %v792, %v1233
      %1235 = vmatmul.bf16.gmra.mxu0 %v1115
      %v1236 = vpop.f32.mrf.mxu0
      %v1237 = vadd.f32 %v795, %v1236
      %v1238 = vpop.f32.mrf.mxu0
      %v1239 = vadd.f32 %v797, %v1238
      %1240 = vmatmul.bf16.gmra.mxu0 %v1116
      %v1241 = vpop.f32.mrf.mxu0
      %v1242 = vadd.f32 %v800, %v1241
      %v1243 = vpop.f32.mrf.mxu0
      %v1244 = vadd.f32 %v802, %v1243
      %1245 = vmatmul.bf16.gmra.mxu0 %v1117
      %v1246 = vpop.f32.mrf.mxu0
      %v1247 = vadd.f32 %v805, %v1246
      %v1248 = vpop.f32.mrf.mxu0
      %v1249 = vadd.f32 %v807, %v1248
      %1250 = vmatmul.bf16.gmra.mxu0 %v1118
      %v1251 = vpop.f32.mrf.mxu0
      %v1252 = vadd.f32 %v810, %v1251
      %v1253 = vpop.f32.mrf.mxu0
      %v1254 = vadd.f32 %v812, %v1253
      %1255 = vmatmul.bf16.gmra.mxu0 %v1119
      %v1256 = vpop.f32.mrf.mxu0
      %v1257 = vadd.f32 %v815, %v1256
      %v1258 = vpop.f32.mrf.mxu0
      %v1259 = vadd.f32 %v817, %v1258
      %1260 = vmatmul.bf16.gmra.mxu0 %v1120
      %v1261 = vpop.f32.mrf.mxu0
      %v1262 = vadd.f32 %v820, %v1261
      %v1263 = vpop.f32.mrf.mxu0
      %v1264 = vadd.f32 %v822, %v1263
      %1265 = vmatmul.bf16.gmra.mxu0 %v1121
      %v1266 = vpop.f32.mrf.mxu0
      %v1267 = vadd.f32 %v825, %v1266
      %v1268 = vpop.f32.mrf.mxu0
      %v1269 = vadd.f32 %v827, %v1268
      %1270 = vmatmul.bf16.gmra.mxu0 %v1122
      %v1271 = vpop.f32.mrf.mxu0
      %v1272 = vadd.f32 %v830, %v1271
      %v1273 = vpop.f32.mrf.mxu0
      %v1274 = vadd.f32 %v832, %v1273
      %1275 = vdwg.mxu0
      %v1276 = vld [vmem:[%s7] sm:$0x1]
      %v1278 = vperm.slane %v1276, 0
      %v1280 = vadd.f32 %v1197, %v1278
      %v1281 = vadd.f32 %v1199, %v1278
      %v1282 = vadd.f32 %v1202, %v1278
      %v1283 = vadd.f32 %v1204, %v1278
      %v1284 = vadd.f32 %v1207, %v1278
      %v1285 = vadd.f32 %v1209, %v1278
      %v1286 = vadd.f32 %v1212, %v1278
      %v1287 = vadd.f32 %v1214, %v1278
      %v1288 = vadd.f32 %v1217, %v1278
      %v1289 = vadd.f32 %v1219, %v1278
      %v1290 = vadd.f32 %v1222, %v1278
      %v1291 = vadd.f32 %v1224, %v1278
      %v1292 = vadd.f32 %v1227, %v1278
      %v1293 = vadd.f32 %v1229, %v1278
      %v1294 = vadd.f32 %v1232, %v1278
      %v1295 = vadd.f32 %v1234, %v1278
      %v1296 = vadd.f32 %v1237, %v1278
      %v1297 = vadd.f32 %v1239, %v1278
      %v1298 = vadd.f32 %v1242, %v1278
      %v1299 = vadd.f32 %v1244, %v1278
      %v1300 = vadd.f32 %v1247, %v1278
      %v1301 = vadd.f32 %v1249, %v1278
      %v1302 = vadd.f32 %v1252, %v1278
      %v1303 = vadd.f32 %v1254, %v1278
      %v1304 = vadd.f32 %v1257, %v1278
      %v1305 = vadd.f32 %v1259, %v1278
      %v1306 = vadd.f32 %v1262, %v1278
      %v1307 = vadd.f32 %v1264, %v1278
      %v1308 = vadd.f32 %v1267, %v1278
      %v1309 = vadd.f32 %v1269, %v1278
      %v1310 = vadd.f32 %v1272, %v1278
      %v1311 = vadd.f32 %v1274, %v1278
      %v1312 = vmax.f32 %v1280, 0.0
      %v1313 = vmax.f32 %v1281, 0.0
      %v1314 = vmax.f32 %v1282, 0.0
      %v1315 = vmax.f32 %v1283, 0.0
      %v1316 = vmax.f32 %v1284, 0.0
      %v1317 = vmax.f32 %v1285, 0.0
      %v1318 = vmax.f32 %v1286, 0.0
      %v1319 = vmax.f32 %v1287, 0.0
      %v1320 = vmax.f32 %v1288, 0.0
      %v1321 = vmax.f32 %v1289, 0.0
      %v1322 = vmax.f32 %v1290, 0.0
      %v1323 = vmax.f32 %v1291, 0.0
      %v1324 = vmax.f32 %v1292, 0.0
      %v1325 = vmax.f32 %v1293, 0.0
      %v1326 = vmax.f32 %v1294, 0.0
      %v1327 = vmax.f32 %v1295, 0.0
      %v1328 = vmax.f32 %v1296, 0.0
      %v1329 = vmax.f32 %v1297, 0.0
      %v1330 = vmax.f32 %v1298, 0.0
      %v1331 = vmax.f32 %v1299, 0.0
      %v1332 = vmax.f32 %v1300, 0.0
      %v1333 = vmax.f32 %v1301, 0.0
      %v1334 = vmax.f32 %v1302, 0.0
      %v1335 = vmax.f32 %v1303, 0.0
      %v1336 = vmax.f32 %v1304, 0.0
      %v1337 = vmax.f32 %v1305, 0.0
      %v1338 = vmax.f32 %v1306, 0.0
      %v1339 = vmax.f32 %v1307, 0.0
      %v1340 = vmax.f32 %v1308, 0.0
      %v1341 = vmax.f32 %v1309, 0.0
      %v1342 = vmax.f32 %v1310, 0.0
      %v1343 = vmax.f32 %v1311, 0.0
      %v1344 = vpack.c.bf16 %v1313, %v1312
      %v1345 = vpack.c.bf16 %v1315, %v1314
      %v1346 = vpack.c.bf16 %v1317, %v1316
      %v1347 = vpack.c.bf16 %v1319, %v1318
      %v1348 = vpack.c.bf16 %v1321, %v1320
      %v1349 = vpack.c.bf16 %v1323, %v1322
      %v1350 = vpack.c.bf16 %v1325, %v1324
      %v1351 = vpack.c.bf16 %v1327, %v1326
      %v1352 = vpack.c.bf16 %v1329, %v1328
      %v1353 = vpack.c.bf16 %v1331, %v1330
      %v1354 = vpack.c.bf16 %v1333, %v1332
      %v1355 = vpack.c.bf16 %v1335, %v1334
      %v1356 = vpack.c.bf16 %v1337, %v1336
      %v1357 = vpack.c.bf16 %v1339, %v1338
      %v1358 = vpack.c.bf16 %v1341, %v1340
      %v1359 = vpack.c.bf16 %v1343, %v1342
      %v1360 = vld [vmem:[%s8] sm:$0xf]
      %v1361 = vld [vmem:[%s8 + $0x4] sm:$0xf]
      %v1362 = vld [vmem:[%s8 + $0x8] sm:$0xf]
      %v1363 = vld [vmem:[%s8 + $0xc] sm:$0xf]
      %v1364 = vld [vmem:[%s8 + $0x10] sm:$0xf]
      %v1365 = vld [vmem:[%s8 + $0x14] sm:$0xf]
      %v1366 = vld [vmem:[%s8 + $0x18] sm:$0xf]
      %v1367 = vld [vmem:[%s8 + $0x1c] sm:$0xf]
      %v1368 = vld [vmem:[%s8 + $0x20] sm:$0xf]
      %v1369 = vld [vmem:[%s8 + $0x24] sm:$0xf]
      %v1370 = vld [vmem:[%s8 + $0x28] sm:$0xf]
      %v1371 = vld [vmem:[%s8 + $0x2c] sm:$0xf]
      %v1372 = vld [vmem:[%s8 + $0x30] sm:$0xf]
      %v1373 = vld [vmem:[%s8 + $0x34] sm:$0xf]
      %v1374 = vld [vmem:[%s8 + $0x38] sm:$0xf]
      %v1375 = vld [vmem:[%s8 + $0x3c] sm:$0xf]
      %v1376 = vld [vmem:[%s9] sm:$0x1]
      %v1378 = vperm.slane %v1376, 0
      %v1396 = vunpack.c.l.b16 %v1360
      %v1397 = vunpack.c.l.b16 %v1361
      %v1398 = vunpack.c.l.b16 %v1362
      %v1399 = vunpack.c.l.b16 %v1363
      %v1400 = vunpack.c.l.b16 %v1364
      %v1401 = vunpack.c.l.b16 %v1365
      %v1402 = vunpack.c.l.b16 %v1366
      %v1403 = vunpack.c.l.b16 %v1367
      %v1404 = vunpack.c.l.b16 %v1368
      %v1405 = vunpack.c.l.b16 %v1369
      %v1406 = vunpack.c.l.b16 %v1370
      %v1407 = vunpack.c.l.b16 %v1371
      %v1408 = vunpack.c.l.b16 %v1372
      %v1409 = vunpack.c.l.b16 %v1373
      %v1410 = vunpack.c.l.b16 %v1374
      %v1411 = vunpack.c.l.b16 %v1375
      %v1412 = vpack.c.b16 %v1397, %v1396
      %v1413 = vpack.c.b16 %v1399, %v1398
      %v1414 = vpack.c.b16 %v1401, %v1400
      %v1415 = vpack.c.b16 %v1403, %v1402
      %v1416 = vpack.c.b16 %v1405, %v1404
      %v1417 = vpack.c.b16 %v1407, %v1406
      %v1418 = vpack.c.b16 %v1409, %v1408
      %v1419 = vpack.c.b16 %v1411, %v1410
      %1428 = vmatpush.bf16.msra.mxu0 %v1419
      %1429 = vmatpush.bf16.msra.mxu0 %v1418
      %1430 = vmatpush.bf16.msra.mxu0 %v1417
      %1431 = vmatpush.bf16.msra.mxu0 %v1416
      %1432 = vmatpush.bf16.msra.mxu0 %v1415
      %1433 = vmatpush.bf16.msra.mxu0 %v1414
      %1434 = vmatpush.bf16.msra.mxu0 %v1413
      %1435 = vmatpush.bf16.msra.mxu0 %v1412
      %1436 = vmatmul.bf16.gmra.mxu0 %v1344
      %v1437 = vpop.f32.mrf.mxu0
      %v1438 = vadd.f32 %v1378, %v1437
      %v1439 = vpop.f32.mrf.mxu0
      %v1440 = vadd.f32 %v1378, %v1439
      %1441 = vmatmul.bf16.gmra.mxu0 %v1345
      %v1442 = vpop.f32.mrf.mxu0
      %v1443 = vadd.f32 %v1378, %v1442
      %v1444 = vpop.f32.mrf.mxu0
      %v1445 = vadd.f32 %v1378, %v1444
      %1446 = vmatmul.bf16.gmra.mxu0 %v1346
      %v1447 = vpop.f32.mrf.mxu0
      %v1448 = vadd.f32 %v1378, %v1447
      %v1449 = vpop.f32.mrf.mxu0
      %v1450 = vadd.f32 %v1378, %v1449
      %1451 = vmatmul.bf16.gmra.mxu0 %v1347
      %v1452 = vpop.f32.mrf.mxu0
      %v1453 = vadd.f32 %v1378, %v1452
      %v1454 = vpop.f32.mrf.mxu0
      %v1455 = vadd.f32 %v1378, %v1454
      %1456 = vmatmul.bf16.gmra.mxu0 %v1348
      %v1457 = vpop.f32.mrf.mxu0
      %v1458 = vadd.f32 %v1378, %v1457
      %v1459 = vpop.f32.mrf.mxu0
      %v1460 = vadd.f32 %v1378, %v1459
      %1461 = vmatmul.bf16.gmra.mxu0 %v1349
      %v1462 = vpop.f32.mrf.mxu0
      %v1463 = vadd.f32 %v1378, %v1462
      %v1464 = vpop.f32.mrf.mxu0
      %v1465 = vadd.f32 %v1378, %v1464
      %1466 = vmatmul.bf16.gmra.mxu0 %v1350
      %v1467 = vpop.f32.mrf.mxu0
      %v1468 = vadd.f32 %v1378, %v1467
      %v1469 = vpop.f32.mrf.mxu0
      %v1470 = vadd.f32 %v1378, %v1469
      %1471 = vmatmul.bf16.gmra.mxu0 %v1351
      %v1472 = vpop.f32.mrf.mxu0
      %v1473 = vadd.f32 %v1378, %v1472
      %v1474 = vpop.f32.mrf.mxu0
      %v1475 = vadd.f32 %v1378, %v1474
      %1476 = vmatmul.bf16.gmra.mxu0 %v1352
      %v1477 = vpop.f32.mrf.mxu0
      %v1478 = vadd.f32 %v1378, %v1477
      %v1479 = vpop.f32.mrf.mxu0
      %v1480 = vadd.f32 %v1378, %v1479
      %1481 = vmatmul.bf16.gmra.mxu0 %v1353
      %v1482 = vpop.f32.mrf.mxu0
      %v1483 = vadd.f32 %v1378, %v1482
      %v1484 = vpop.f32.mrf.mxu0
      %v1485 = vadd.f32 %v1378, %v1484
      %1486 = vmatmul.bf16.gmra.mxu0 %v1354
      %v1487 = vpop.f32.mrf.mxu0
      %v1488 = vadd.f32 %v1378, %v1487
      %v1489 = vpop.f32.mrf.mxu0
      %v1490 = vadd.f32 %v1378, %v1489
      %1491 = vmatmul.bf16.gmra.mxu0 %v1355
      %v1492 = vpop.f32.mrf.mxu0
      %v1493 = vadd.f32 %v1378, %v1492
      %v1494 = vpop.f32.mrf.mxu0
      %v1495 = vadd.f32 %v1378, %v1494
      %1496 = vmatmul.bf16.gmra.mxu0 %v1356
      %v1497 = vpop.f32.mrf.mxu0
      %v1498 = vadd.f32 %v1378, %v1497
      %v1499 = vpop.f32.mrf.mxu0
      %v1500 = vadd.f32 %v1378, %v1499
      %1501 = vmatmul.bf16.gmra.mxu0 %v1357
      %v1502 = vpop.f32.mrf.mxu0
      %v1503 = vadd.f32 %v1378, %v1502
      %v1504 = vpop.f32.mrf.mxu0
      %v1505 = vadd.f32 %v1378, %v1504
      %1506 = vmatmul.bf16.gmra.mxu0 %v1358
      %v1507 = vpop.f32.mrf.mxu0
      %v1508 = vadd.f32 %v1378, %v1507
      %v1509 = vpop.f32.mrf.mxu0
      %v1510 = vadd.f32 %v1378, %v1509
      %1511 = vmatmul.bf16.gmra.mxu0 %v1359
      %v1512 = vpop.f32.mrf.mxu0
      %v1513 = vadd.f32 %v1378, %v1512
      %v1514 = vpop.f32.mrf.mxu0
      %v1515 = vadd.f32 %v1378, %v1514
      %1516 = vdwg.mxu0
      %v1517 = vmax.f32 %v1438, 0.0
      %v1518 = vmax.f32 %v1440, 0.0
      %v1519 = vmax.f32 %v1443, 0.0
      %v1520 = vmax.f32 %v1445, 0.0
      %v1521 = vmax.f32 %v1448, 0.0
      %v1522 = vmax.f32 %v1450, 0.0
      %v1523 = vmax.f32 %v1453, 0.0
      %v1524 = vmax.f32 %v1455, 0.0
      %v1525 = vmax.f32 %v1458, 0.0
      %v1526 = vmax.f32 %v1460, 0.0
      %v1527 = vmax.f32 %v1463, 0.0
      %v1528 = vmax.f32 %v1465, 0.0
      %v1529 = vmax.f32 %v1468, 0.0
      %v1530 = vmax.f32 %v1470, 0.0
      %v1531 = vmax.f32 %v1473, 0.0
      %v1532 = vmax.f32 %v1475, 0.0
      %v1533 = vmax.f32 %v1478, 0.0
      %v1534 = vmax.f32 %v1480, 0.0
      %v1535 = vmax.f32 %v1483, 0.0
      %v1536 = vmax.f32 %v1485, 0.0
      %v1537 = vmax.f32 %v1488, 0.0
      %v1538 = vmax.f32 %v1490, 0.0
      %v1539 = vmax.f32 %v1493, 0.0
      %v1540 = vmax.f32 %v1495, 0.0
      %v1541 = vmax.f32 %v1498, 0.0
      %v1542 = vmax.f32 %v1500, 0.0
      %v1543 = vmax.f32 %v1503, 0.0
      %v1544 = vmax.f32 %v1505, 0.0
      %v1545 = vmax.f32 %v1508, 0.0
      %v1546 = vmax.f32 %v1510, 0.0
      %v1547 = vmax.f32 %v1513, 0.0
      %v1548 = vmax.f32 %v1515, 0.0
      %v1549 = vld [vmem:[%s520] sm:$0xff]
      %v1550 = vld [vmem:[%s520 + $0x8] sm:$0xff]
      %v1551 = vld [vmem:[%s520 + $0x10] sm:$0xff]
      %v1552 = vld [vmem:[%s520 + $0x18] sm:$0xff]
      %v1553 = vld [vmem:[%s520 + $0x20] sm:$0xff]
      %v1554 = vld [vmem:[%s520 + $0x28] sm:$0xff]
      %v1555 = vld [vmem:[%s520 + $0x30] sm:$0xff]
      %v1556 = vld [vmem:[%s520 + $0x38] sm:$0xff]
      %v1557 = vld [vmem:[%s520 + $0x40] sm:$0xff]
      %v1558 = vld [vmem:[%s520 + $0x48] sm:$0xff]
      %v1559 = vld [vmem:[%s520 + $0x50] sm:$0xff]
      %v1560 = vld [vmem:[%s520 + $0x58] sm:$0xff]
      %v1561 = vld [vmem:[%s520 + $0x60] sm:$0xff]
      %v1562 = vld [vmem:[%s520 + $0x68] sm:$0xff]
      %v1563 = vld [vmem:[%s520 + $0x70] sm:$0xff]
      %v1564 = vld [vmem:[%s520 + $0x78] sm:$0xff]
      %v1565 = vld [vmem:[%s520 + $0x80] sm:$0xff]
      %v1566 = vld [vmem:[%s520 + $0x88] sm:$0xff]
      %v1567 = vld [vmem:[%s520 + $0x90] sm:$0xff]
      %v1568 = vld [vmem:[%s520 + $0x98] sm:$0xff]
      %v1569 = vld [vmem:[%s520 + $0xa0] sm:$0xff]
      %v1570 = vld [vmem:[%s520 + $0xa8] sm:$0xff]
      %v1571 = vld [vmem:[%s520 + $0xb0] sm:$0xff]
      %v1572 = vld [vmem:[%s520 + $0xb8] sm:$0xff]
      %v1573 = vld [vmem:[%s520 + $0xc0] sm:$0xff]
      %v1574 = vld [vmem:[%s520 + $0xc8] sm:$0xff]
      %v1575 = vld [vmem:[%s520 + $0xd0] sm:$0xff]
      %v1576 = vld [vmem:[%s520 + $0xd8] sm:$0xff]
      %v1577 = vld [vmem:[%s520 + $0xe0] sm:$0xff]
      %v1578 = vld [vmem:[%s520 + $0xe8] sm:$0xff]
      %v1579 = vld [vmem:[%s520 + $0xf0] sm:$0xff]
      %v1580 = vld [vmem:[%s520 + $0xf8] sm:$0xff]
      %v1581 = vpack.c.bf16 %v1518, %v1517
      %v1582 = vpack.c.bf16 %v1550, %v1549
      %v1583 = vpack.c.bf16 %v1520, %v1519
      %v1584 = vpack.c.bf16 %v1552, %v1551
      %v1585 = vpack.c.bf16 %v1522, %v1521
      %v1586 = vpack.c.bf16 %v1554, %v1553
      %v1587 = vpack.c.bf16 %v1524, %v1523
      %v1588 = vpack.c.bf16 %v1556, %v1555
      %v1589 = vpack.c.bf16 %v1526, %v1525
      %v1590 = vpack.c.bf16 %v1558, %v1557
      %v1591 = vpack.c.bf16 %v1528, %v1527
      %v1592 = vpack.c.bf16 %v1560, %v1559
      %v1593 = vpack.c.bf16 %v1530, %v1529
      %v1594 = vpack.c.bf16 %v1562, %v1561
      %v1595 = vpack.c.bf16 %v1532, %v1531
      %v1596 = vpack.c.bf16 %v1564, %v1563
      %v1597 = vpack.c.bf16 %v1534, %v1533
      %v1598 = vpack.c.bf16 %v1566, %v1565
      %v1599 = vpack.c.bf16 %v1536, %v1535
      %v1600 = vpack.c.bf16 %v1568, %v1567
      %v1601 = vpack.c.bf16 %v1538, %v1537
      %v1602 = vpack.c.bf16 %v1570, %v1569
      %v1603 = vpack.c.bf16 %v1540, %v1539
      %v1604 = vpack.c.bf16 %v1572, %v1571
      %v1605 = vpack.c.bf16 %v1542, %v1541
      %v1606 = vpack.c.bf16 %v1574, %v1573
      %v1607 = vpack.c.bf16 %v1544, %v1543
      %v1608 = vpack.c.bf16 %v1576, %v1575
      %v1609 = vpack.c.bf16 %v1546, %v1545
      %v1610 = vpack.c.bf16 %v1578, %v1577
      %v1611 = vpack.c.bf16 %v1548, %v1547
      %v1612 = vpack.c.bf16 %v1580, %v1579
      %v1613 = vld [vmem:[%s10] sm:$0xff]
      %v1614 = vld [vmem:[%s10 + $0x8] sm:$0xff]
      %v1615 = vld [vmem:[%s10 + $0x10] sm:$0xff]
      %v1616 = vld [vmem:[%s10 + $0x18] sm:$0xff]
      %v1617 = vld [vmem:[%s10 + $0x20] sm:$0xff]
      %v1618 = vld [vmem:[%s10 + $0x28] sm:$0xff]
      %v1619 = vld [vmem:[%s10 + $0x30] sm:$0xff]
      %v1620 = vld [vmem:[%s10 + $0x38] sm:$0xff]
      %v1621 = vld [vmem:[%s10 + $0x40] sm:$0xff]
      %v1622 = vld [vmem:[%s10 + $0x48] sm:$0xff]
      %v1623 = vld [vmem:[%s10 + $0x50] sm:$0xff]
      %v1624 = vld [vmem:[%s10 + $0x58] sm:$0xff]
      %v1625 = vld [vmem:[%s10 + $0x60] sm:$0xff]
      %v1626 = vld [vmem:[%s10 + $0x68] sm:$0xff]
      %v1627 = vld [vmem:[%s10 + $0x70] sm:$0xff]
      %v1628 = vld [vmem:[%s10 + $0x78] sm:$0xff]
      %v1629 = vld [vmem:[%s10 + $0x80] sm:$0xff]
      %v1630 = vld [vmem:[%s10 + $0x88] sm:$0xff]
      %v1631 = vld [vmem:[%s11] sm:$0x3]
      %v1633 = vperm.slane %v1631, 0
      %v1634 = vperm.slane %v1631, 1
      %v1655 = vunpack.c.l.b16 %v1613
      %v1656 = vunpack.c.h.b16 %v1613
      %v1657 = vunpack.c.l.b16 %v1614
      %v1658 = vunpack.c.h.b16 %v1614
      %v1659 = vunpack.c.l.b16 %v1615
      %v1660 = vunpack.c.h.b16 %v1615
      %v1661 = vunpack.c.l.b16 %v1616
      %v1662 = vunpack.c.h.b16 %v1616
      %v1663 = vunpack.c.l.b16 %v1617
      %v1664 = vunpack.c.h.b16 %v1617
      %v1665 = vunpack.c.l.b16 %v1618
      %v1666 = vunpack.c.h.b16 %v1618
      %v1667 = vunpack.c.l.b16 %v1619
      %v1668 = vunpack.c.h.b16 %v1619
      %v1669 = vunpack.c.l.b16 %v1620
      %v1670 = vunpack.c.h.b16 %v1620
      %v1671 = vunpack.c.l.b16 %v1621
      %v1672 = vunpack.c.h.b16 %v1621
      %v1673 = vunpack.c.l.b16 %v1622
      %v1674 = vunpack.c.h.b16 %v1622
      %v1675 = vunpack.c.l.b16 %v1623
      %v1676 = vunpack.c.h.b16 %v1623
      %v1677 = vunpack.c.l.b16 %v1624
      %v1678 = vunpack.c.h.b16 %v1624
      %v1679 = vunpack.c.l.b16 %v1625
      %v1680 = vunpack.c.h.b16 %v1625
      %v1681 = vunpack.c.l.b16 %v1626
      %v1682 = vunpack.c.h.b16 %v1626
      %v1683 = vunpack.c.l.b16 %v1627
      %v1684 = vunpack.c.h.b16 %v1627
      %v1685 = vunpack.c.l.b16 %v1628
      %v1686 = vunpack.c.h.b16 %v1628
      %v1687 = vunpack.c.l.b16 %v1629
      %v1688 = vunpack.c.h.b16 %v1629
      %v1689 = vunpack.c.l.b16 %v1630
      %v1690 = vunpack.c.h.b16 %v1630
      %v1691 = vpack.c.b16 %v1657, %v1655
      %v1692 = vpack.c.b16 %v1658, %v1656
      %v1693 = vpack.c.b16 %v1661, %v1659
      %v1694 = vpack.c.b16 %v1662, %v1660
      %v1695 = vpack.c.b16 %v1665, %v1663
      %v1696 = vpack.c.b16 %v1666, %v1664
      %v1697 = vpack.c.b16 %v1669, %v1667
      %v1698 = vpack.c.b16 %v1670, %v1668
      %v1699 = vpack.c.b16 %v1673, %v1671
      %v1700 = vpack.c.b16 %v1674, %v1672
      %v1701 = vpack.c.b16 %v1677, %v1675
      %v1702 = vpack.c.b16 %v1678, %v1676
      %v1703 = vpack.c.b16 %v1681, %v1679
      %v1704 = vpack.c.b16 %v1682, %v1680
      %v1705 = vpack.c.b16 %v1685, %v1683
      %v1706 = vpack.c.b16 %v1686, %v1684
      %v1707 = vpack.c.b16 %v1689, %v1687
      %v1708 = vpack.c.b16 %v1690, %v1688
      %vm1727 = vcmask 130048
      %v1729 = vsel %vm1727, %v1582, 0
      %v1732 = vsel %vm1727, %v1584, 0
      %v1735 = vsel %vm1727, %v1586, 0
      %v1738 = vsel %vm1727, %v1588, 0
      %v1741 = vsel %vm1727, %v1590, 0
      %v1744 = vsel %vm1727, %v1592, 0
      %v1747 = vsel %vm1727, %v1594, 0
      %v1750 = vsel %vm1727, %v1596, 0
      %v1753 = vsel %vm1727, %v1598, 0
      %v1756 = vsel %vm1727, %v1600, 0
      %v1759 = vsel %vm1727, %v1602, 0
      %v1762 = vsel %vm1727, %v1604, 0
      %v1765 = vsel %vm1727, %v1606, 0
      %v1768 = vsel %vm1727, %v1608, 0
      %v1771 = vsel %vm1727, %v1610, 0
      %v1774 = vsel %vm1727, %v1612, 0
      %1776 = vmatpush.bf16.msra.mxu0 %v1705
      %1777 = vmatpush.bf16.msra.mxu0 %v1703
      %1778 = vmatpush.bf16.msra.mxu0 %v1701
      %1779 = vmatpush.bf16.msra.mxu0 %v1699
      %1780 = vmatpush.bf16.msra.mxu0 %v1697
      %1781 = vmatpush.bf16.msra.mxu0 %v1695
      %1782 = vmatpush.bf16.msra.mxu0 %v1693
      %1783 = vmatpush.bf16.msra.mxu0 %v1691
      %1784 = vmatmul.bf16.gmra.mxu0 %v1581
      %v1785 = vpop.f32.mrf.mxu0
      %v1786 = vadd.f32 %v1633, %v1785
      %v1787 = vpop.f32.mrf.mxu0
      %v1788 = vadd.f32 %v1633, %v1787
      %1789 = vmatmul.bf16.gmra.mxu0 %v1583
      %v1790 = vpop.f32.mrf.mxu0
      %v1791 = vadd.f32 %v1633, %v1790
      %v1792 = vpop.f32.mrf.mxu0
      %v1793 = vadd.f32 %v1633, %v1792
      %1794 = vmatmul.bf16.gmra.mxu0 %v1585
      %v1795 = vpop.f32.mrf.mxu0
      %v1796 = vadd.f32 %v1633, %v1795
      %v1797 = vpop.f32.mrf.mxu0
      %v1798 = vadd.f32 %v1633, %v1797
      %1799 = vmatmul.bf16.gmra.mxu0 %v1587
      %v1800 = vpop.f32.mrf.mxu0
      %v1801 = vadd.f32 %v1633, %v1800
      %v1802 = vpop.f32.mrf.mxu0
      %v1803 = vadd.f32 %v1633, %v1802
      %1804 = vmatmul.bf16.gmra.mxu0 %v1589
      %v1805 = vpop.f32.mrf.mxu0
      %v1806 = vadd.f32 %v1633, %v1805
      %v1807 = vpop.f32.mrf.mxu0
      %v1808 = vadd.f32 %v1633, %v1807
      %1809 = vmatmul.bf16.gmra.mxu0 %v1591
      %v1810 = vpop.f32.mrf.mxu0
      %v1811 = vadd.f32 %v1633, %v1810
      %v1812 = vpop.f32.mrf.mxu0
      %v1813 = vadd.f32 %v1633, %v1812
      %1814 = vmatmul.bf16.gmra.mxu0 %v1593
      %v1815 = vpop.f32.mrf.mxu0
      %v1816 = vadd.f32 %v1633, %v1815
      %v1817 = vpop.f32.mrf.mxu0
      %v1818 = vadd.f32 %v1633, %v1817
      %1819 = vmatmul.bf16.gmra.mxu0 %v1595
      %v1820 = vpop.f32.mrf.mxu0
      %v1821 = vadd.f32 %v1633, %v1820
      %v1822 = vpop.f32.mrf.mxu0
      %v1823 = vadd.f32 %v1633, %v1822
      %1824 = vmatmul.bf16.gmra.mxu0 %v1597
      %v1825 = vpop.f32.mrf.mxu0
      %v1826 = vadd.f32 %v1633, %v1825
      %v1827 = vpop.f32.mrf.mxu0
      %v1828 = vadd.f32 %v1633, %v1827
      %1829 = vmatmul.bf16.gmra.mxu0 %v1599
      %v1830 = vpop.f32.mrf.mxu0
      %v1831 = vadd.f32 %v1633, %v1830
      %v1832 = vpop.f32.mrf.mxu0
      %v1833 = vadd.f32 %v1633, %v1832
      %1834 = vmatmul.bf16.gmra.mxu0 %v1601
      %v1835 = vpop.f32.mrf.mxu0
      %v1836 = vadd.f32 %v1633, %v1835
      %v1837 = vpop.f32.mrf.mxu0
      %v1838 = vadd.f32 %v1633, %v1837
      %1839 = vmatmul.bf16.gmra.mxu0 %v1603
      %v1840 = vpop.f32.mrf.mxu0
      %v1841 = vadd.f32 %v1633, %v1840
      %v1842 = vpop.f32.mrf.mxu0
      %v1843 = vadd.f32 %v1633, %v1842
      %1844 = vmatmul.bf16.gmra.mxu0 %v1605
      %v1845 = vpop.f32.mrf.mxu0
      %v1846 = vadd.f32 %v1633, %v1845
      %v1847 = vpop.f32.mrf.mxu0
      %v1848 = vadd.f32 %v1633, %v1847
      %1849 = vmatmul.bf16.gmra.mxu0 %v1607
      %v1850 = vpop.f32.mrf.mxu0
      %v1851 = vadd.f32 %v1633, %v1850
      %v1852 = vpop.f32.mrf.mxu0
      %v1853 = vadd.f32 %v1633, %v1852
      %1854 = vmatmul.bf16.gmra.mxu0 %v1609
      %v1855 = vpop.f32.mrf.mxu0
      %v1856 = vadd.f32 %v1633, %v1855
      %v1857 = vpop.f32.mrf.mxu0
      %v1858 = vadd.f32 %v1633, %v1857
      %1859 = vmatmul.bf16.gmra.mxu0 %v1611
      %v1860 = vpop.f32.mrf.mxu0
      %v1861 = vadd.f32 %v1633, %v1860
      %v1862 = vpop.f32.mrf.mxu0
      %v1863 = vadd.f32 %v1633, %v1862
      %1864 = vdwg.mxu0
      %1865 = vmatpush.bf16.msra.mxu0 0
      %1866 = vmatpush.bf16.msra.mxu0 0
      %1867 = vmatpush.bf16.msra.mxu0 0
      %1868 = vmatpush.bf16.msra.mxu0 0
      %1869 = vmatpush.bf16.msra.mxu0 0
      %1870 = vmatpush.bf16.msra.mxu0 0
      %1871 = vmatpush.bf16.msra.mxu0 0
      %1872 = vmatpush.bf16.msra.mxu0 %v1707
      %1873 = vmatmul.bf16.gmra.mxu0 %v1729
      %v1874 = vpop.f32.mrf.mxu0
      %v1875 = vadd.f32 %v1786, %v1874
      %v1876 = vpop.f32.mrf.mxu0
      %v1877 = vadd.f32 %v1788, %v1876
      %1878 = vmatmul.bf16.gmra.mxu0 %v1732
      %v1879 = vpop.f32.mrf.mxu0
      %v1880 = vadd.f32 %v1791, %v1879
      %v1881 = vpop.f32.mrf.mxu0
      %v1882 = vadd.f32 %v1793, %v1881
      %1883 = vmatmul.bf16.gmra.mxu0 %v1735
      %v1884 = vpop.f32.mrf.mxu0
      %v1885 = vadd.f32 %v1796, %v1884
      %v1886 = vpop.f32.mrf.mxu0
      %v1887 = vadd.f32 %v1798, %v1886
      %1888 = vmatmul.bf16.gmra.mxu0 %v1738
      %v1889 = vpop.f32.mrf.mxu0
      %v1890 = vadd.f32 %v1801, %v1889
      %v1891 = vpop.f32.mrf.mxu0
      %v1892 = vadd.f32 %v1803, %v1891
      %1893 = vmatmul.bf16.gmra.mxu0 %v1741
      %v1894 = vpop.f32.mrf.mxu0
      %v1895 = vadd.f32 %v1806, %v1894
      %v1896 = vpop.f32.mrf.mxu0
      %v1897 = vadd.f32 %v1808, %v1896
      %1898 = vmatmul.bf16.gmra.mxu0 %v1744
      %v1899 = vpop.f32.mrf.mxu0
      %v1900 = vadd.f32 %v1811, %v1899
      %v1901 = vpop.f32.mrf.mxu0
      %v1902 = vadd.f32 %v1813, %v1901
      %1903 = vmatmul.bf16.gmra.mxu0 %v1747
      %v1904 = vpop.f32.mrf.mxu0
      %v1905 = vadd.f32 %v1816, %v1904
      %v1906 = vpop.f32.mrf.mxu0
      %v1907 = vadd.f32 %v1818, %v1906
      %1908 = vmatmul.bf16.gmra.mxu0 %v1750
      %v1909 = vpop.f32.mrf.mxu0
      %v1910 = vadd.f32 %v1821, %v1909
      %v1911 = vpop.f32.mrf.mxu0
      %v1912 = vadd.f32 %v1823, %v1911
      %1913 = vmatmul.bf16.gmra.mxu0 %v1753
      %v1914 = vpop.f32.mrf.mxu0
      %v1915 = vadd.f32 %v1826, %v1914
      %v1916 = vpop.f32.mrf.mxu0
      %v1917 = vadd.f32 %v1828, %v1916
      %1918 = vmatmul.bf16.gmra.mxu0 %v1756
      %v1919 = vpop.f32.mrf.mxu0
      %v1920 = vadd.f32 %v1831, %v1919
      %v1921 = vpop.f32.mrf.mxu0
      %v1922 = vadd.f32 %v1833, %v1921
      %1923 = vmatmul.bf16.gmra.mxu0 %v1759
      %v1924 = vpop.f32.mrf.mxu0
      %v1925 = vadd.f32 %v1836, %v1924
      %v1926 = vpop.f32.mrf.mxu0
      %v1927 = vadd.f32 %v1838, %v1926
      %1928 = vmatmul.bf16.gmra.mxu0 %v1762
      %v1929 = vpop.f32.mrf.mxu0
      %v1930 = vadd.f32 %v1841, %v1929
      %v1931 = vpop.f32.mrf.mxu0
      %v1932 = vadd.f32 %v1843, %v1931
      %1933 = vmatmul.bf16.gmra.mxu0 %v1765
      %v1934 = vpop.f32.mrf.mxu0
      %v1935 = vadd.f32 %v1846, %v1934
      %v1936 = vpop.f32.mrf.mxu0
      %v1937 = vadd.f32 %v1848, %v1936
      %1938 = vmatmul.bf16.gmra.mxu0 %v1768
      %v1939 = vpop.f32.mrf.mxu0
      %v1940 = vadd.f32 %v1851, %v1939
      %v1941 = vpop.f32.mrf.mxu0
      %v1942 = vadd.f32 %v1853, %v1941
      %1943 = vmatmul.bf16.gmra.mxu0 %v1771
      %v1944 = vpop.f32.mrf.mxu0
      %v1945 = vadd.f32 %v1856, %v1944
      %v1946 = vpop.f32.mrf.mxu0
      %v1947 = vadd.f32 %v1858, %v1946
      %1948 = vmatmul.bf16.gmra.mxu0 %v1774
      %v1949 = vpop.f32.mrf.mxu0
      %v1950 = vadd.f32 %v1861, %v1949
      %v1951 = vpop.f32.mrf.mxu0
      %v1952 = vadd.f32 %v1863, %v1951
      %1953 = vdwg.mxu0
      %1954 = vmatpush.bf16.msra.mxu0 %v1706
      %1955 = vmatpush.bf16.msra.mxu0 %v1704
      %1956 = vmatpush.bf16.msra.mxu0 %v1702
      %1957 = vmatpush.bf16.msra.mxu0 %v1700
      %1958 = vmatpush.bf16.msra.mxu0 %v1698
      %1959 = vmatpush.bf16.msra.mxu0 %v1696
      %1960 = vmatpush.bf16.msra.mxu0 %v1694
      %1961 = vmatpush.bf16.msra.mxu0 %v1692
      %1962 = vmatmul.bf16.gmra.mxu0 %v1581
      %v1963 = vpop.f32.mrf.mxu0
      %v1964 = vadd.f32 %v1634, %v1963
      %v1965 = vpop.f32.mrf.mxu0
      %v1966 = vadd.f32 %v1634, %v1965
      %1967 = vmatmul.bf16.gmra.mxu0 %v1583
      %v1968 = vpop.f32.mrf.mxu0
      %v1969 = vadd.f32 %v1634, %v1968
      %v1970 = vpop.f32.mrf.mxu0
      %v1971 = vadd.f32 %v1634, %v1970
      %1972 = vmatmul.bf16.gmra.mxu0 %v1585
      %v1973 = vpop.f32.mrf.mxu0
      %v1974 = vadd.f32 %v1634, %v1973
      %v1975 = vpop.f32.mrf.mxu0
      %v1976 = vadd.f32 %v1634, %v1975
      %1977 = vmatmul.bf16.gmra.mxu0 %v1587
      %v1978 = vpop.f32.mrf.mxu0
      %v1979 = vadd.f32 %v1634, %v1978
      %v1980 = vpop.f32.mrf.mxu0
      %v1981 = vadd.f32 %v1634, %v1980
      %1982 = vmatmul.bf16.gmra.mxu0 %v1589
      %v1983 = vpop.f32.mrf.mxu0
      %v1984 = vadd.f32 %v1634, %v1983
      %v1985 = vpop.f32.mrf.mxu0
      %v1986 = vadd.f32 %v1634, %v1985
      %1987 = vmatmul.bf16.gmra.mxu0 %v1591
      %v1988 = vpop.f32.mrf.mxu0
      %v1989 = vadd.f32 %v1634, %v1988
      %v1990 = vpop.f32.mrf.mxu0
      %v1991 = vadd.f32 %v1634, %v1990
      %1992 = vmatmul.bf16.gmra.mxu0 %v1593
      %v1993 = vpop.f32.mrf.mxu0
      %v1994 = vadd.f32 %v1634, %v1993
      %v1995 = vpop.f32.mrf.mxu0
      %v1996 = vadd.f32 %v1634, %v1995
      %1997 = vmatmul.bf16.gmra.mxu0 %v1595
      %v1998 = vpop.f32.mrf.mxu0
      %v1999 = vadd.f32 %v1634, %v1998
      %v2000 = vpop.f32.mrf.mxu0
      %v2001 = vadd.f32 %v1634, %v2000
      %2002 = vmatmul.bf16.gmra.mxu0 %v1597
      %v2003 = vpop.f32.mrf.mxu0
      %v2004 = vadd.f32 %v1634, %v2003
      %v2005 = vpop.f32.mrf.mxu0
      %v2006 = vadd.f32 %v1634, %v2005
      %2007 = vmatmul.bf16.gmra.mxu0 %v1599
      %v2008 = vpop.f32.mrf.mxu0
      %v2009 = vadd.f32 %v1634, %v2008
      %v2010 = vpop.f32.mrf.mxu0
      %v2011 = vadd.f32 %v1634, %v2010
      %2012 = vmatmul.bf16.gmra.mxu0 %v1601
      %v2013 = vpop.f32.mrf.mxu0
      %v2014 = vadd.f32 %v1634, %v2013
      %v2015 = vpop.f32.mrf.mxu0
      %v2016 = vadd.f32 %v1634, %v2015
      %2017 = vmatmul.bf16.gmra.mxu0 %v1603
      %v2018 = vpop.f32.mrf.mxu0
      %v2019 = vadd.f32 %v1634, %v2018
      %v2020 = vpop.f32.mrf.mxu0
      %v2021 = vadd.f32 %v1634, %v2020
      %2022 = vmatmul.bf16.gmra.mxu0 %v1605
      %v2023 = vpop.f32.mrf.mxu0
      %v2024 = vadd.f32 %v1634, %v2023
      %v2025 = vpop.f32.mrf.mxu0
      %v2026 = vadd.f32 %v1634, %v2025
      %2027 = vmatmul.bf16.gmra.mxu0 %v1607
      %v2028 = vpop.f32.mrf.mxu0
      %v2029 = vadd.f32 %v1634, %v2028
      %v2030 = vpop.f32.mrf.mxu0
      %v2031 = vadd.f32 %v1634, %v2030
      %2032 = vmatmul.bf16.gmra.mxu0 %v1609
      %v2033 = vpop.f32.mrf.mxu0
      %v2034 = vadd.f32 %v1634, %v2033
      %v2035 = vpop.f32.mrf.mxu0
      %v2036 = vadd.f32 %v1634, %v2035
      %2037 = vmatmul.bf16.gmra.mxu0 %v1611
      %v2038 = vpop.f32.mrf.mxu0
      %v2039 = vadd.f32 %v1634, %v2038
      %v2040 = vpop.f32.mrf.mxu0
      %v2041 = vadd.f32 %v1634, %v2040
      %2042 = vdwg.mxu0
      %2043 = vmatpush.bf16.msra.mxu0 0
      %2044 = vmatpush.bf16.msra.mxu0 0
      %2045 = vmatpush.bf16.msra.mxu0 0
      %2046 = vmatpush.bf16.msra.mxu0 0
      %2047 = vmatpush.bf16.msra.mxu0 0
      %2048 = vmatpush.bf16.msra.mxu0 0
      %2049 = vmatpush.bf16.msra.mxu0 0
      %2050 = vmatpush.bf16.msra.mxu0 %v1708
      %2051 = vmatmul.bf16.gmra.mxu0 %v1729
      %v2052 = vpop.f32.mrf.mxu0
      %v2053 = vadd.f32 %v1964, %v2052
      %v2054 = vpop.f32.mrf.mxu0
      %v2055 = vadd.f32 %v1966, %v2054
      %2056 = vmatmul.bf16.gmra.mxu0 %v1732
      %v2057 = vpop.f32.mrf.mxu0
      %v2058 = vadd.f32 %v1969, %v2057
      %v2059 = vpop.f32.mrf.mxu0
      %v2060 = vadd.f32 %v1971, %v2059
      %2061 = vmatmul.bf16.gmra.mxu0 %v1735
      %v2062 = vpop.f32.mrf.mxu0
      %v2063 = vadd.f32 %v1974, %v2062
      %v2064 = vpop.f32.mrf.mxu0
      %v2065 = vadd.f32 %v1976, %v2064
      %2066 = vmatmul.bf16.gmra.mxu0 %v1738
      %v2067 = vpop.f32.mrf.mxu0
      %v2068 = vadd.f32 %v1979, %v2067
      %v2069 = vpop.f32.mrf.mxu0
      %v2070 = vadd.f32 %v1981, %v2069
      %2071 = vmatmul.bf16.gmra.mxu0 %v1741
      %v2072 = vpop.f32.mrf.mxu0
      %v2073 = vadd.f32 %v1984, %v2072
      %v2074 = vpop.f32.mrf.mxu0
      %v2075 = vadd.f32 %v1986, %v2074
      %2076 = vmatmul.bf16.gmra.mxu0 %v1744
      %v2077 = vpop.f32.mrf.mxu0
      %v2078 = vadd.f32 %v1989, %v2077
      %v2079 = vpop.f32.mrf.mxu0
      %v2080 = vadd.f32 %v1991, %v2079
      %2081 = vmatmul.bf16.gmra.mxu0 %v1747
      %v2082 = vpop.f32.mrf.mxu0
      %v2083 = vadd.f32 %v1994, %v2082
      %v2084 = vpop.f32.mrf.mxu0
      %v2085 = vadd.f32 %v1996, %v2084
      %2086 = vmatmul.bf16.gmra.mxu0 %v1750
      %v2087 = vpop.f32.mrf.mxu0
      %v2088 = vadd.f32 %v1999, %v2087
      %v2089 = vpop.f32.mrf.mxu0
      %v2090 = vadd.f32 %v2001, %v2089
      %2091 = vmatmul.bf16.gmra.mxu0 %v1753
      %v2092 = vpop.f32.mrf.mxu0
      %v2093 = vadd.f32 %v2004, %v2092
      %v2094 = vpop.f32.mrf.mxu0
      %v2095 = vadd.f32 %v2006, %v2094
      %2096 = vmatmul.bf16.gmra.mxu0 %v1756
      %v2097 = vpop.f32.mrf.mxu0
      %v2098 = vadd.f32 %v2009, %v2097
      %v2099 = vpop.f32.mrf.mxu0
      %v2100 = vadd.f32 %v2011, %v2099
      %2101 = vmatmul.bf16.gmra.mxu0 %v1759
      %v2102 = vpop.f32.mrf.mxu0
      %v2103 = vadd.f32 %v2014, %v2102
      %v2104 = vpop.f32.mrf.mxu0
      %v2105 = vadd.f32 %v2016, %v2104
      %2106 = vmatmul.bf16.gmra.mxu0 %v1762
      %v2107 = vpop.f32.mrf.mxu0
      %v2108 = vadd.f32 %v2019, %v2107
      %v2109 = vpop.f32.mrf.mxu0
      %v2110 = vadd.f32 %v2021, %v2109
      %2111 = vmatmul.bf16.gmra.mxu0 %v1765
      %v2112 = vpop.f32.mrf.mxu0
      %v2113 = vadd.f32 %v2024, %v2112
      %v2114 = vpop.f32.mrf.mxu0
      %v2115 = vadd.f32 %v2026, %v2114
      %2116 = vmatmul.bf16.gmra.mxu0 %v1768
      %v2117 = vpop.f32.mrf.mxu0
      %v2118 = vadd.f32 %v2029, %v2117
      %v2119 = vpop.f32.mrf.mxu0
      %v2120 = vadd.f32 %v2031, %v2119
      %2121 = vmatmul.bf16.gmra.mxu0 %v1771
      %v2122 = vpop.f32.mrf.mxu0
      %v2123 = vadd.f32 %v2034, %v2122
      %v2124 = vpop.f32.mrf.mxu0
      %v2125 = vadd.f32 %v2036, %v2124
      %2126 = vmatmul.bf16.gmra.mxu0 %v1774
      %v2127 = vpop.f32.mrf.mxu0
      %v2128 = vadd.f32 %v2039, %v2127
      %v2129 = vpop.f32.mrf.mxu0
      %v2130 = vadd.f32 %v2041, %v2129
      %2131 = vdwg.mxu0
      %v2132 = vmax.f32 %v1875, 0.0
      %v2133 = vmax.f32 %v1877, 0.0
      %v2134 = vmax.f32 %v1880, 0.0
      %v2135 = vmax.f32 %v1882, 0.0
      %v2136 = vmax.f32 %v1885, 0.0
      %v2137 = vmax.f32 %v1887, 0.0
      %v2138 = vmax.f32 %v1890, 0.0
      %v2139 = vmax.f32 %v1892, 0.0
      %v2140 = vmax.f32 %v1895, 0.0
      %v2141 = vmax.f32 %v1897, 0.0
      %v2142 = vmax.f32 %v1900, 0.0
      %v2143 = vmax.f32 %v1902, 0.0
      %v2144 = vmax.f32 %v1905, 0.0
      %v2145 = vmax.f32 %v1907, 0.0
      %v2146 = vmax.f32 %v1910, 0.0
      %v2147 = vmax.f32 %v1912, 0.0
      %v2148 = vmax.f32 %v1915, 0.0
      %v2149 = vmax.f32 %v1917, 0.0
      %v2150 = vmax.f32 %v1920, 0.0
      %v2151 = vmax.f32 %v1922, 0.0
      %v2152 = vmax.f32 %v1925, 0.0
      %v2153 = vmax.f32 %v1927, 0.0
      %v2154 = vmax.f32 %v1930, 0.0
      %v2155 = vmax.f32 %v1932, 0.0
      %v2156 = vmax.f32 %v1935, 0.0
      %v2157 = vmax.f32 %v1937, 0.0
      %v2158 = vmax.f32 %v1940, 0.0
      %v2159 = vmax.f32 %v1942, 0.0
      %v2160 = vmax.f32 %v1945, 0.0
      %v2161 = vmax.f32 %v1947, 0.0
      %v2162 = vmax.f32 %v1950, 0.0
      %v2163 = vmax.f32 %v1952, 0.0
      %v2164 = vmax.f32 %v2053, 0.0
      %v2165 = vmax.f32 %v2055, 0.0
      %v2166 = vmax.f32 %v2058, 0.0
      %v2167 = vmax.f32 %v2060, 0.0
      %v2168 = vmax.f32 %v2063, 0.0
      %v2169 = vmax.f32 %v2065, 0.0
      %v2170 = vmax.f32 %v2068, 0.0
      %v2171 = vmax.f32 %v2070, 0.0
      %v2172 = vmax.f32 %v2073, 0.0
      %v2173 = vmax.f32 %v2075, 0.0
      %v2174 = vmax.f32 %v2078, 0.0
      %v2175 = vmax.f32 %v2080, 0.0
      %v2176 = vmax.f32 %v2083, 0.0
      %v2177 = vmax.f32 %v2085, 0.0
      %v2178 = vmax.f32 %v2088, 0.0
      %v2179 = vmax.f32 %v2090, 0.0
      %v2180 = vmax.f32 %v2093, 0.0
      %v2181 = vmax.f32 %v2095, 0.0
      %v2182 = vmax.f32 %v2098, 0.0
      %v2183 = vmax.f32 %v2100, 0.0
      %v2184 = vmax.f32 %v2103, 0.0
      %v2185 = vmax.f32 %v2105, 0.0
      %v2186 = vmax.f32 %v2108, 0.0
      %v2187 = vmax.f32 %v2110, 0.0
      %v2188 = vmax.f32 %v2113, 0.0
      %v2189 = vmax.f32 %v2115, 0.0
      %v2190 = vmax.f32 %v2118, 0.0
      %v2191 = vmax.f32 %v2120, 0.0
      %v2192 = vmax.f32 %v2123, 0.0
      %v2193 = vmax.f32 %v2125, 0.0
      %v2194 = vmax.f32 %v2128, 0.0
      %v2195 = vmax.f32 %v2130, 0.0
      %v2196 = vpack.c.bf16 %v2133, %v2132
      %v2197 = vpack.c.bf16 %v2135, %v2134
      %v2198 = vpack.c.bf16 %v2137, %v2136
      %v2199 = vpack.c.bf16 %v2139, %v2138
      %v2200 = vpack.c.bf16 %v2141, %v2140
      %v2201 = vpack.c.bf16 %v2143, %v2142
      %v2202 = vpack.c.bf16 %v2145, %v2144
      %v2203 = vpack.c.bf16 %v2147, %v2146
      %v2204 = vpack.c.bf16 %v2149, %v2148
      %v2205 = vpack.c.bf16 %v2151, %v2150
      %v2206 = vpack.c.bf16 %v2153, %v2152
      %v2207 = vpack.c.bf16 %v2155, %v2154
      %v2208 = vpack.c.bf16 %v2157, %v2156
      %v2209 = vpack.c.bf16 %v2159, %v2158
      %v2210 = vpack.c.bf16 %v2161, %v2160
      %v2211 = vpack.c.bf16 %v2163, %v2162
      %v2212 = vld [vmem:[%s12] sm:$0xf]
      %v2213 = vld [vmem:[%s12 + $0x4] sm:$0xf]
      %v2214 = vld [vmem:[%s12 + $0x8] sm:$0xf]
      %v2215 = vld [vmem:[%s12 + $0xc] sm:$0xf]
      %v2216 = vld [vmem:[%s12 + $0x10] sm:$0xf]
      %v2217 = vld [vmem:[%s12 + $0x14] sm:$0xf]
      %v2218 = vld [vmem:[%s12 + $0x18] sm:$0xf]
      %v2219 = vld [vmem:[%s12 + $0x1c] sm:$0xf]
      %v2220 = vld [vmem:[%s12 + $0x20] sm:$0xf]
      %v2221 = vld [vmem:[%s12 + $0x24] sm:$0xf]
      %v2222 = vld [vmem:[%s12 + $0x28] sm:$0xf]
      %v2223 = vld [vmem:[%s12 + $0x2c] sm:$0xf]
      %v2224 = vld [vmem:[%s12 + $0x30] sm:$0xf]
      %v2225 = vld [vmem:[%s12 + $0x34] sm:$0xf]
      %v2226 = vld [vmem:[%s12 + $0x38] sm:$0xf]
      %v2227 = vld [vmem:[%s12 + $0x3c] sm:$0xf]
      %v2228 = vld [vmem:[%s13] sm:$0x1]
      %v2230 = vperm.slane %v2228, 0
      %v2248 = vunpack.c.l.b16 %v2212
      %v2249 = vunpack.c.l.b16 %v2213
      %v2250 = vunpack.c.l.b16 %v2214
      %v2251 = vunpack.c.l.b16 %v2215
      %v2252 = vunpack.c.l.b16 %v2216
      %v2253 = vunpack.c.l.b16 %v2217
      %v2254 = vunpack.c.l.b16 %v2218
      %v2255 = vunpack.c.l.b16 %v2219
      %v2256 = vunpack.c.l.b16 %v2220
      %v2257 = vunpack.c.l.b16 %v2221
      %v2258 = vunpack.c.l.b16 %v2222
      %v2259 = vunpack.c.l.b16 %v2223
      %v2260 = vunpack.c.l.b16 %v2224
      %v2261 = vunpack.c.l.b16 %v2225
      %v2262 = vunpack.c.l.b16 %v2226
      %v2263 = vunpack.c.l.b16 %v2227
      %v2264 = vpack.c.b16 %v2249, %v2248
      %v2265 = vpack.c.b16 %v2251, %v2250
      %v2266 = vpack.c.b16 %v2253, %v2252
      %v2267 = vpack.c.b16 %v2255, %v2254
      %v2268 = vpack.c.b16 %v2257, %v2256
      %v2269 = vpack.c.b16 %v2259, %v2258
      %v2270 = vpack.c.b16 %v2261, %v2260
      %v2271 = vpack.c.b16 %v2263, %v2262
      %2280 = vmatpush.bf16.msra.mxu0 %v2271
      %2281 = vmatpush.bf16.msra.mxu0 %v2270
      %2282 = vmatpush.bf16.msra.mxu0 %v2269
      %2283 = vmatpush.bf16.msra.mxu0 %v2268
      %2284 = vmatpush.bf16.msra.mxu0 %v2267
      %2285 = vmatpush.bf16.msra.mxu0 %v2266
      %2286 = vmatpush.bf16.msra.mxu0 %v2265
      %2287 = vmatpush.bf16.msra.mxu0 %v2264
      %2288 = vmatmul.bf16.gmra.mxu0 %v2196
      %v2289 = vpop.f32.mrf.mxu0
      %v2290 = vadd.f32 %v2230, %v2289
      %v2291 = vpop.f32.mrf.mxu0
      %v2292 = vadd.f32 %v2230, %v2291
      %2293 = vmatmul.bf16.gmra.mxu0 %v2197
      %v2294 = vpop.f32.mrf.mxu0
      %v2295 = vadd.f32 %v2230, %v2294
      %v2296 = vpop.f32.mrf.mxu0
      %v2297 = vadd.f32 %v2230, %v2296
      %2298 = vmatmul.bf16.gmra.mxu0 %v2198
      %v2299 = vpop.f32.mrf.mxu0
      %v2300 = vadd.f32 %v2230, %v2299
      %v2301 = vpop.f32.mrf.mxu0
      %v2302 = vadd.f32 %v2230, %v2301
      %2303 = vmatmul.bf16.gmra.mxu0 %v2199
      %v2304 = vpop.f32.mrf.mxu0
      %v2305 = vadd.f32 %v2230, %v2304
      %v2306 = vpop.f32.mrf.mxu0
      %v2307 = vadd.f32 %v2230, %v2306
      %2308 = vmatmul.bf16.gmra.mxu0 %v2200
      %v2309 = vpop.f32.mrf.mxu0
      %v2310 = vadd.f32 %v2230, %v2309
      %v2311 = vpop.f32.mrf.mxu0
      %v2312 = vadd.f32 %v2230, %v2311
      %2313 = vmatmul.bf16.gmra.mxu0 %v2201
      %v2314 = vpop.f32.mrf.mxu0
      %v2315 = vadd.f32 %v2230, %v2314
      %v2316 = vpop.f32.mrf.mxu0
      %v2317 = vadd.f32 %v2230, %v2316
      %2318 = vmatmul.bf16.gmra.mxu0 %v2202
      %v2319 = vpop.f32.mrf.mxu0
      %v2320 = vadd.f32 %v2230, %v2319
      %v2321 = vpop.f32.mrf.mxu0
      %v2322 = vadd.f32 %v2230, %v2321
      %2323 = vmatmul.bf16.gmra.mxu0 %v2203
      %v2324 = vpop.f32.mrf.mxu0
      %v2325 = vadd.f32 %v2230, %v2324
      %v2326 = vpop.f32.mrf.mxu0
      %v2327 = vadd.f32 %v2230, %v2326
      %2328 = vmatmul.bf16.gmra.mxu0 %v2204
      %v2329 = vpop.f32.mrf.mxu0
      %v2330 = vadd.f32 %v2230, %v2329
      %v2331 = vpop.f32.mrf.mxu0
      %v2332 = vadd.f32 %v2230, %v2331
      %2333 = vmatmul.bf16.gmra.mxu0 %v2205
      %v2334 = vpop.f32.mrf.mxu0
      %v2335 = vadd.f32 %v2230, %v2334
      %v2336 = vpop.f32.mrf.mxu0
      %v2337 = vadd.f32 %v2230, %v2336
      %2338 = vmatmul.bf16.gmra.mxu0 %v2206
      %v2339 = vpop.f32.mrf.mxu0
      %v2340 = vadd.f32 %v2230, %v2339
      %v2341 = vpop.f32.mrf.mxu0
      %v2342 = vadd.f32 %v2230, %v2341
      %2343 = vmatmul.bf16.gmra.mxu0 %v2207
      %v2344 = vpop.f32.mrf.mxu0
      %v2345 = vadd.f32 %v2230, %v2344
      %v2346 = vpop.f32.mrf.mxu0
      %v2347 = vadd.f32 %v2230, %v2346
      %2348 = vmatmul.bf16.gmra.mxu0 %v2208
      %v2349 = vpop.f32.mrf.mxu0
      %v2350 = vadd.f32 %v2230, %v2349
      %v2351 = vpop.f32.mrf.mxu0
      %v2352 = vadd.f32 %v2230, %v2351
      %2353 = vmatmul.bf16.gmra.mxu0 %v2209
      %v2354 = vpop.f32.mrf.mxu0
      %v2355 = vadd.f32 %v2230, %v2354
      %v2356 = vpop.f32.mrf.mxu0
      %v2357 = vadd.f32 %v2230, %v2356
      %2358 = vmatmul.bf16.gmra.mxu0 %v2210
      %v2359 = vpop.f32.mrf.mxu0
      %v2360 = vadd.f32 %v2230, %v2359
      %v2361 = vpop.f32.mrf.mxu0
      %v2362 = vadd.f32 %v2230, %v2361
      %2363 = vmatmul.bf16.gmra.mxu0 %v2211
      %v2364 = vpop.f32.mrf.mxu0
      %v2365 = vadd.f32 %v2230, %v2364
      %v2366 = vpop.f32.mrf.mxu0
      %v2367 = vadd.f32 %v2230, %v2366
      %2368 = vdwg.mxu0
      %v2369 = vxor.u32 %v2290, 2147483648
      %v2370 = vxor.u32 %v2292, 2147483648
      %v2371 = vxor.u32 %v2295, 2147483648
      %v2372 = vxor.u32 %v2297, 2147483648
      %v2373 = vxor.u32 %v2300, 2147483648
      %v2374 = vxor.u32 %v2302, 2147483648
      %v2375 = vxor.u32 %v2305, 2147483648
      %v2376 = vxor.u32 %v2307, 2147483648
      %v2377 = vxor.u32 %v2310, 2147483648
      %v2378 = vxor.u32 %v2312, 2147483648
      %v2379 = vxor.u32 %v2315, 2147483648
      %v2380 = vxor.u32 %v2317, 2147483648
      %v2381 = vxor.u32 %v2320, 2147483648
      %v2382 = vxor.u32 %v2322, 2147483648
      %v2383 = vxor.u32 %v2325, 2147483648
      %v2384 = vxor.u32 %v2327, 2147483648
      %v2385 = vxor.u32 %v2330, 2147483648
      %v2386 = vxor.u32 %v2332, 2147483648
      %v2387 = vxor.u32 %v2335, 2147483648
      %v2388 = vxor.u32 %v2337, 2147483648
      %v2389 = vxor.u32 %v2340, 2147483648
      %v2390 = vxor.u32 %v2342, 2147483648
      %v2391 = vxor.u32 %v2345, 2147483648
      %v2392 = vxor.u32 %v2347, 2147483648
      %v2393 = vxor.u32 %v2350, 2147483648
      %v2394 = vxor.u32 %v2352, 2147483648
      %v2395 = vxor.u32 %v2355, 2147483648
      %v2396 = vxor.u32 %v2357, 2147483648
      %v2397 = vxor.u32 %v2360, 2147483648
      %v2398 = vxor.u32 %v2362, 2147483648
      %v2399 = vxor.u32 %v2365, 2147483648
      %v2400 = vxor.u32 %v2367, 2147483648
      %v2401 = vmul.f32 %v2369, 1.442695
      %v2402 = vpow.pop %v2401
      %v2403 = vmul.f32 %v2370, 1.442695
      %v2404 = vpow.pop %v2403
      %v2405 = vmul.f32 %v2371, 1.442695
      %v2406 = vpow.pop %v2405
      %v2407 = vmul.f32 %v2372, 1.442695
      %v2408 = vpow.pop %v2407
      %v2409 = vmul.f32 %v2373, 1.442695
      %v2410 = vpow.pop %v2409
      %v2411 = vmul.f32 %v2374, 1.442695
      %v2412 = vpow.pop %v2411
      %v2413 = vmul.f32 %v2375, 1.442695
      %v2414 = vpow.pop %v2413
      %v2415 = vmul.f32 %v2376, 1.442695
      %v2416 = vpow.pop %v2415
      %v2417 = vmul.f32 %v2377, 1.442695
      %v2418 = vpow.pop %v2417
      %v2419 = vmul.f32 %v2378, 1.442695
      %v2420 = vpow.pop %v2419
      %v2421 = vmul.f32 %v2379, 1.442695
      %v2422 = vpow.pop %v2421
      %v2423 = vmul.f32 %v2380, 1.442695
      %v2424 = vpow.pop %v2423
      %v2425 = vmul.f32 %v2381, 1.442695
      %v2426 = vpow.pop %v2425
      %v2427 = vmul.f32 %v2382, 1.442695
      %v2428 = vpow.pop %v2427
      %v2429 = vmul.f32 %v2383, 1.442695
      %v2430 = vpow.pop %v2429
      %v2431 = vmul.f32 %v2384, 1.442695
      %v2432 = vpow.pop %v2431
      %v2433 = vmul.f32 %v2385, 1.442695
      %v2434 = vpow.pop %v2433
      %v2435 = vmul.f32 %v2386, 1.442695
      %v2436 = vpow.pop %v2435
      %v2437 = vmul.f32 %v2387, 1.442695
      %v2438 = vpow.pop %v2437
      %v2439 = vmul.f32 %v2388, 1.442695
      %v2440 = vpow.pop %v2439
      %v2441 = vmul.f32 %v2389, 1.442695
      %v2442 = vpow.pop %v2441
      %v2443 = vmul.f32 %v2390, 1.442695
      %v2444 = vpow.pop %v2443
      %v2445 = vmul.f32 %v2391, 1.442695
      %v2446 = vpow.pop %v2445
      %v2447 = vmul.f32 %v2392, 1.442695
      %v2448 = vpow.pop %v2447
      %v2449 = vmul.f32 %v2393, 1.442695
      %v2450 = vpow.pop %v2449
      %v2451 = vmul.f32 %v2394, 1.442695
      %v2452 = vpow.pop %v2451
      %v2453 = vmul.f32 %v2395, 1.442695
      %v2454 = vpow.pop %v2453
      %v2455 = vmul.f32 %v2396, 1.442695
      %v2456 = vpow.pop %v2455
      %v2457 = vmul.f32 %v2397, 1.442695
      %v2458 = vpow.pop %v2457
      %v2459 = vmul.f32 %v2398, 1.442695
      %v2460 = vpow.pop %v2459
      %v2461 = vmul.f32 %v2399, 1.442695
      %v2462 = vpow.pop %v2461
      %v2463 = vmul.f32 %v2400, 1.442695
      %v2464 = vpow.pop %v2463
      %v2465 = vadd.f32 %v2402, 1.0
      %v2466 = vadd.f32 %v2404, 1.0
      %v2467 = vadd.f32 %v2406, 1.0
      %v2468 = vadd.f32 %v2408, 1.0
      %v2469 = vadd.f32 %v2410, 1.0
      %v2470 = vadd.f32 %v2412, 1.0
      %v2471 = vadd.f32 %v2414, 1.0
      %v2472 = vadd.f32 %v2416, 1.0
      %v2473 = vadd.f32 %v2418, 1.0
      %v2474 = vadd.f32 %v2420, 1.0
      %v2475 = vadd.f32 %v2422, 1.0
      %v2476 = vadd.f32 %v2424, 1.0
      %v2477 = vadd.f32 %v2426, 1.0
      %v2478 = vadd.f32 %v2428, 1.0
      %v2479 = vadd.f32 %v2430, 1.0
      %v2480 = vadd.f32 %v2432, 1.0
      %v2481 = vadd.f32 %v2434, 1.0
      %v2482 = vadd.f32 %v2436, 1.0
      %v2483 = vadd.f32 %v2438, 1.0
      %v2484 = vadd.f32 %v2440, 1.0
      %v2485 = vadd.f32 %v2442, 1.0
      %v2486 = vadd.f32 %v2444, 1.0
      %v2487 = vadd.f32 %v2446, 1.0
      %v2488 = vadd.f32 %v2448, 1.0
      %v2489 = vadd.f32 %v2450, 1.0
      %v2490 = vadd.f32 %v2452, 1.0
      %v2491 = vadd.f32 %v2454, 1.0
      %v2492 = vadd.f32 %v2456, 1.0
      %v2493 = vadd.f32 %v2458, 1.0
      %v2494 = vadd.f32 %v2460, 1.0
      %v2495 = vadd.f32 %v2462, 1.0
      %v2496 = vadd.f32 %v2464, 1.0
      %v2497 = vrcp.pop %v2465
      %v2498 = vmul.f32 %v2465, %v2497
      %v2499 = vsub.f32 1.0, %v2498
      %v2500 = vmul.f32 %v2497, %v2499
      %v2501 = vadd.f32 %v2497, %v2500
      %vm2502 = vweird.f32 %v2465
      %vm2503 = vweird.f32 %v2497
      %vm2504 = vmor %vm2502, %vm2503
      %v2505 = vsel %vm2504, %v2497, %v2501
      %v2506 = vand.u32 2147483647, %v2465
      %vm2507 = vcmp.eq.f32.partialorder %v2506, 8.507059e+37
      %v2508 = vand.u32 %v2465, 2147483648
      %v2509 = vor.u32 1.1754944e-38, %v2508
      %v2510 = vsel %vm2507, %v2509, %v2505
      %v2511 = vmul.f32 1.0, %v2510
      %v2512 = vrcp.pop %v2466
      %v2513 = vmul.f32 %v2466, %v2512
      %v2514 = vsub.f32 1.0, %v2513
      %v2515 = vmul.f32 %v2512, %v2514
      %v2516 = vadd.f32 %v2512, %v2515
      %vm2517 = vweird.f32 %v2466
      %vm2518 = vweird.f32 %v2512
      %vm2519 = vmor %vm2517, %vm2518
      %v2520 = vsel %vm2519, %v2512, %v2516
      %v2521 = vand.u32 2147483647, %v2466
      %vm2522 = vcmp.eq.f32.partialorder %v2521, 8.507059e+37
      %v2523 = vand.u32 %v2466, 2147483648
      %v2524 = vor.u32 1.1754944e-38, %v2523
      %v2525 = vsel %vm2522, %v2524, %v2520
      %v2526 = vmul.f32 1.0, %v2525
      %v2527 = vrcp.pop %v2467
      %v2528 = vmul.f32 %v2467, %v2527
      %v2529 = vsub.f32 1.0, %v2528
      %v2530 = vmul.f32 %v2527, %v2529
      %v2531 = vadd.f32 %v2527, %v2530
      %vm2532 = vweird.f32 %v2467
      %vm2533 = vweird.f32 %v2527
      %vm2534 = vmor %vm2532, %vm2533
      %v2535 = vsel %vm2534, %v2527, %v2531
      %v2536 = vand.u32 2147483647, %v2467
      %vm2537 = vcmp.eq.f32.partialorder %v2536, 8.507059e+37
      %v2538 = vand.u32 %v2467, 2147483648
      %v2539 = vor.u32 1.1754944e-38, %v2538
      %v2540 = vsel %vm2537, %v2539, %v2535
      %v2541 = vmul.f32 1.0, %v2540
      %v2542 = vrcp.pop %v2468
      %v2543 = vmul.f32 %v2468, %v2542
      %v2544 = vsub.f32 1.0, %v2543
      %v2545 = vmul.f32 %v2542, %v2544
      %v2546 = vadd.f32 %v2542, %v2545
      %vm2547 = vweird.f32 %v2468
      %vm2548 = vweird.f32 %v2542
      %vm2549 = vmor %vm2547, %vm2548
      %v2550 = vsel %vm2549, %v2542, %v2546
      %v2551 = vand.u32 2147483647, %v2468
      %vm2552 = vcmp.eq.f32.partialorder %v2551, 8.507059e+37
      %v2553 = vand.u32 %v2468, 2147483648
      %v2554 = vor.u32 1.1754944e-38, %v2553
      %v2555 = vsel %vm2552, %v2554, %v2550
      %v2556 = vmul.f32 1.0, %v2555
      %v2557 = vrcp.pop %v2469
      %v2558 = vmul.f32 %v2469, %v2557
      %v2559 = vsub.f32 1.0, %v2558
      %v2560 = vmul.f32 %v2557, %v2559
      %v2561 = vadd.f32 %v2557, %v2560
      %vm2562 = vweird.f32 %v2469
      %vm2563 = vweird.f32 %v2557
      %vm2564 = vmor %vm2562, %vm2563
      %v2565 = vsel %vm2564, %v2557, %v2561
      %v2566 = vand.u32 2147483647, %v2469
      %vm2567 = vcmp.eq.f32.partialorder %v2566, 8.507059e+37
      %v2568 = vand.u32 %v2469, 2147483648
      %v2569 = vor.u32 1.1754944e-38, %v2568
      %v2570 = vsel %vm2567, %v2569, %v2565
      %v2571 = vmul.f32 1.0, %v2570
      %v2572 = vrcp.pop %v2470
      %v2573 = vmul.f32 %v2470, %v2572
      %v2574 = vsub.f32 1.0, %v2573
      %v2575 = vmul.f32 %v2572, %v2574
      %v2576 = vadd.f32 %v2572, %v2575
      %vm2577 = vweird.f32 %v2470
      %vm2578 = vweird.f32 %v2572
      %vm2579 = vmor %vm2577, %vm2578
      %v2580 = vsel %vm2579, %v2572, %v2576
      %v2581 = vand.u32 2147483647, %v2470
      %vm2582 = vcmp.eq.f32.partialorder %v2581, 8.507059e+37
      %v2583 = vand.u32 %v2470, 2147483648
      %v2584 = vor.u32 1.1754944e-38, %v2583
      %v2585 = vsel %vm2582, %v2584, %v2580
      %v2586 = vmul.f32 1.0, %v2585
      %v2587 = vrcp.pop %v2471
      %v2588 = vmul.f32 %v2471, %v2587
      %v2589 = vsub.f32 1.0, %v2588
      %v2590 = vmul.f32 %v2587, %v2589
      %v2591 = vadd.f32 %v2587, %v2590
      %vm2592 = vweird.f32 %v2471
      %vm2593 = vweird.f32 %v2587
      %vm2594 = vmor %vm2592, %vm2593
      %v2595 = vsel %vm2594, %v2587, %v2591
      %v2596 = vand.u32 2147483647, %v2471
      %vm2597 = vcmp.eq.f32.partialorder %v2596, 8.507059e+37
      %v2598 = vand.u32 %v2471, 2147483648
      %v2599 = vor.u32 1.1754944e-38, %v2598
      %v2600 = vsel %vm2597, %v2599, %v2595
      %v2601 = vmul.f32 1.0, %v2600
      %v2602 = vrcp.pop %v2472
      %v2603 = vmul.f32 %v2472, %v2602
      %v2604 = vsub.f32 1.0, %v2603
      %v2605 = vmul.f32 %v2602, %v2604
      %v2606 = vadd.f32 %v2602, %v2605
      %vm2607 = vweird.f32 %v2472
      %vm2608 = vweird.f32 %v2602
      %vm2609 = vmor %vm2607, %vm2608
      %v2610 = vsel %vm2609, %v2602, %v2606
      %v2611 = vand.u32 2147483647, %v2472
      %vm2612 = vcmp.eq.f32.partialorder %v2611, 8.507059e+37
      %v2613 = vand.u32 %v2472, 2147483648
      %v2614 = vor.u32 1.1754944e-38, %v2613
      %v2615 = vsel %vm2612, %v2614, %v2610
      %v2616 = vmul.f32 1.0, %v2615
      %v2617 = vrcp.pop %v2473
      %v2618 = vmul.f32 %v2473, %v2617
      %v2619 = vsub.f32 1.0, %v2618
      %v2620 = vmul.f32 %v2617, %v2619
      %v2621 = vadd.f32 %v2617, %v2620
      %vm2622 = vweird.f32 %v2473
      %vm2623 = vweird.f32 %v2617
      %vm2624 = vmor %vm2622, %vm2623
      %v2625 = vsel %vm2624, %v2617, %v2621
      %v2626 = vand.u32 2147483647, %v2473
      %vm2627 = vcmp.eq.f32.partialorder %v2626, 8.507059e+37
      %v2628 = vand.u32 %v2473, 2147483648
      %v2629 = vor.u32 1.1754944e-38, %v2628
      %v2630 = vsel %vm2627, %v2629, %v2625
      %v2631 = vmul.f32 1.0, %v2630
      %v2632 = vrcp.pop %v2474
      %v2633 = vmul.f32 %v2474, %v2632
      %v2634 = vsub.f32 1.0, %v2633
      %v2635 = vmul.f32 %v2632, %v2634
      %v2636 = vadd.f32 %v2632, %v2635
      %vm2637 = vweird.f32 %v2474
      %vm2638 = vweird.f32 %v2632
      %vm2639 = vmor %vm2637, %vm2638
      %v2640 = vsel %vm2639, %v2632, %v2636
      %v2641 = vand.u32 2147483647, %v2474
      %vm2642 = vcmp.eq.f32.partialorder %v2641, 8.507059e+37
      %v2643 = vand.u32 %v2474, 2147483648
      %v2644 = vor.u32 1.1754944e-38, %v2643
      %v2645 = vsel %vm2642, %v2644, %v2640
      %v2646 = vmul.f32 1.0, %v2645
      %v2647 = vrcp.pop %v2475
      %v2648 = vmul.f32 %v2475, %v2647
      %v2649 = vsub.f32 1.0, %v2648
      %v2650 = vmul.f32 %v2647, %v2649
      %v2651 = vadd.f32 %v2647, %v2650
      %vm2652 = vweird.f32 %v2475
      %vm2653 = vweird.f32 %v2647
      %vm2654 = vmor %vm2652, %vm2653
      %v2655 = vsel %vm2654, %v2647, %v2651
      %v2656 = vand.u32 2147483647, %v2475
      %vm2657 = vcmp.eq.f32.partialorder %v2656, 8.507059e+37
      %v2658 = vand.u32 %v2475, 2147483648
      %v2659 = vor.u32 1.1754944e-38, %v2658
      %v2660 = vsel %vm2657, %v2659, %v2655
      %v2661 = vmul.f32 1.0, %v2660
      %v2662 = vrcp.pop %v2476
      %v2663 = vmul.f32 %v2476, %v2662
      %v2664 = vsub.f32 1.0, %v2663
      %v2665 = vmul.f32 %v2662, %v2664
      %v2666 = vadd.f32 %v2662, %v2665
      %vm2667 = vweird.f32 %v2476
      %vm2668 = vweird.f32 %v2662
      %vm2669 = vmor %vm2667, %vm2668
      %v2670 = vsel %vm2669, %v2662, %v2666
      %v2671 = vand.u32 2147483647, %v2476
      %vm2672 = vcmp.eq.f32.partialorder %v2671, 8.507059e+37
      %v2673 = vand.u32 %v2476, 2147483648
      %v2674 = vor.u32 1.1754944e-38, %v2673
      %v2675 = vsel %vm2672, %v2674, %v2670
      %v2676 = vmul.f32 1.0, %v2675
      %v2677 = vrcp.pop %v2477
      %v2678 = vmul.f32 %v2477, %v2677
      %v2679 = vsub.f32 1.0, %v2678
      %v2680 = vmul.f32 %v2677, %v2679
      %v2681 = vadd.f32 %v2677, %v2680
      %vm2682 = vweird.f32 %v2477
      %vm2683 = vweird.f32 %v2677
      %vm2684 = vmor %vm2682, %vm2683
      %v2685 = vsel %vm2684, %v2677, %v2681
      %v2686 = vand.u32 2147483647, %v2477
      %vm2687 = vcmp.eq.f32.partialorder %v2686, 8.507059e+37
      %v2688 = vand.u32 %v2477, 2147483648
      %v2689 = vor.u32 1.1754944e-38, %v2688
      %v2690 = vsel %vm2687, %v2689, %v2685
      %v2691 = vmul.f32 1.0, %v2690
      %v2692 = vrcp.pop %v2478
      %v2693 = vmul.f32 %v2478, %v2692
      %v2694 = vsub.f32 1.0, %v2693
      %v2695 = vmul.f32 %v2692, %v2694
      %v2696 = vadd.f32 %v2692, %v2695
      %vm2697 = vweird.f32 %v2478
      %vm2698 = vweird.f32 %v2692
      %vm2699 = vmor %vm2697, %vm2698
      %v2700 = vsel %vm2699, %v2692, %v2696
      %v2701 = vand.u32 2147483647, %v2478
      %vm2702 = vcmp.eq.f32.partialorder %v2701, 8.507059e+37
      %v2703 = vand.u32 %v2478, 2147483648
      %v2704 = vor.u32 1.1754944e-38, %v2703
      %v2705 = vsel %vm2702, %v2704, %v2700
      %v2706 = vmul.f32 1.0, %v2705
      %v2707 = vrcp.pop %v2479
      %v2708 = vmul.f32 %v2479, %v2707
      %v2709 = vsub.f32 1.0, %v2708
      %v2710 = vmul.f32 %v2707, %v2709
      %v2711 = vadd.f32 %v2707, %v2710
      %vm2712 = vweird.f32 %v2479
      %vm2713 = vweird.f32 %v2707
      %vm2714 = vmor %vm2712, %vm2713
      %v2715 = vsel %vm2714, %v2707, %v2711
      %v2716 = vand.u32 2147483647, %v2479
      %vm2717 = vcmp.eq.f32.partialorder %v2716, 8.507059e+37
      %v2718 = vand.u32 %v2479, 2147483648
      %v2719 = vor.u32 1.1754944e-38, %v2718
      %v2720 = vsel %vm2717, %v2719, %v2715
      %v2721 = vmul.f32 1.0, %v2720
      %v2722 = vrcp.pop %v2480
      %v2723 = vmul.f32 %v2480, %v2722
      %v2724 = vsub.f32 1.0, %v2723
      %v2725 = vmul.f32 %v2722, %v2724
      %v2726 = vadd.f32 %v2722, %v2725
      %vm2727 = vweird.f32 %v2480
      %vm2728 = vweird.f32 %v2722
      %vm2729 = vmor %vm2727, %vm2728
      %v2730 = vsel %vm2729, %v2722, %v2726
      %v2731 = vand.u32 2147483647, %v2480
      %vm2732 = vcmp.eq.f32.partialorder %v2731, 8.507059e+37
      %v2733 = vand.u32 %v2480, 2147483648
      %v2734 = vor.u32 1.1754944e-38, %v2733
      %v2735 = vsel %vm2732, %v2734, %v2730
      %v2736 = vmul.f32 1.0, %v2735
      %v2737 = vrcp.pop %v2481
      %v2738 = vmul.f32 %v2481, %v2737
      %v2739 = vsub.f32 1.0, %v2738
      %v2740 = vmul.f32 %v2737, %v2739
      %v2741 = vadd.f32 %v2737, %v2740
      %vm2742 = vweird.f32 %v2481
      %vm2743 = vweird.f32 %v2737
      %vm2744 = vmor %vm2742, %vm2743
      %v2745 = vsel %vm2744, %v2737, %v2741
      %v2746 = vand.u32 2147483647, %v2481
      %vm2747 = vcmp.eq.f32.partialorder %v2746, 8.507059e+37
      %v2748 = vand.u32 %v2481, 2147483648
      %v2749 = vor.u32 1.1754944e-38, %v2748
      %v2750 = vsel %vm2747, %v2749, %v2745
      %v2751 = vmul.f32 1.0, %v2750
      %v2752 = vrcp.pop %v2482
      %v2753 = vmul.f32 %v2482, %v2752
      %v2754 = vsub.f32 1.0, %v2753
      %v2755 = vmul.f32 %v2752, %v2754
      %v2756 = vadd.f32 %v2752, %v2755
      %vm2757 = vweird.f32 %v2482
      %vm2758 = vweird.f32 %v2752
      %vm2759 = vmor %vm2757, %vm2758
      %v2760 = vsel %vm2759, %v2752, %v2756
      %v2761 = vand.u32 2147483647, %v2482
      %vm2762 = vcmp.eq.f32.partialorder %v2761, 8.507059e+37
      %v2763 = vand.u32 %v2482, 2147483648
      %v2764 = vor.u32 1.1754944e-38, %v2763
      %v2765 = vsel %vm2762, %v2764, %v2760
      %v2766 = vmul.f32 1.0, %v2765
      %v2767 = vrcp.pop %v2483
      %v2768 = vmul.f32 %v2483, %v2767
      %v2769 = vsub.f32 1.0, %v2768
      %v2770 = vmul.f32 %v2767, %v2769
      %v2771 = vadd.f32 %v2767, %v2770
      %vm2772 = vweird.f32 %v2483
      %vm2773 = vweird.f32 %v2767
      %vm2774 = vmor %vm2772, %vm2773
      %v2775 = vsel %vm2774, %v2767, %v2771
      %v2776 = vand.u32 2147483647, %v2483
      %vm2777 = vcmp.eq.f32.partialorder %v2776, 8.507059e+37
      %v2778 = vand.u32 %v2483, 2147483648
      %v2779 = vor.u32 1.1754944e-38, %v2778
      %v2780 = vsel %vm2777, %v2779, %v2775
      %v2781 = vmul.f32 1.0, %v2780
      %v2782 = vrcp.pop %v2484
      %v2783 = vmul.f32 %v2484, %v2782
      %v2784 = vsub.f32 1.0, %v2783
      %v2785 = vmul.f32 %v2782, %v2784
      %v2786 = vadd.f32 %v2782, %v2785
      %vm2787 = vweird.f32 %v2484
      %vm2788 = vweird.f32 %v2782
      %vm2789 = vmor %vm2787, %vm2788
      %v2790 = vsel %vm2789, %v2782, %v2786
      %v2791 = vand.u32 2147483647, %v2484
      %vm2792 = vcmp.eq.f32.partialorder %v2791, 8.507059e+37
      %v2793 = vand.u32 %v2484, 2147483648
      %v2794 = vor.u32 1.1754944e-38, %v2793
      %v2795 = vsel %vm2792, %v2794, %v2790
      %v2796 = vmul.f32 1.0, %v2795
      %v2797 = vrcp.pop %v2485
      %v2798 = vmul.f32 %v2485, %v2797
      %v2799 = vsub.f32 1.0, %v2798
      %v2800 = vmul.f32 %v2797, %v2799
      %v2801 = vadd.f32 %v2797, %v2800
      %vm2802 = vweird.f32 %v2485
      %vm2803 = vweird.f32 %v2797
      %vm2804 = vmor %vm2802, %vm2803
      %v2805 = vsel %vm2804, %v2797, %v2801
      %v2806 = vand.u32 2147483647, %v2485
      %vm2807 = vcmp.eq.f32.partialorder %v2806, 8.507059e+37
      %v2808 = vand.u32 %v2485, 2147483648
      %v2809 = vor.u32 1.1754944e-38, %v2808
      %v2810 = vsel %vm2807, %v2809, %v2805
      %v2811 = vmul.f32 1.0, %v2810
      %v2812 = vrcp.pop %v2486
      %v2813 = vmul.f32 %v2486, %v2812
      %v2814 = vsub.f32 1.0, %v2813
      %v2815 = vmul.f32 %v2812, %v2814
      %v2816 = vadd.f32 %v2812, %v2815
      %vm2817 = vweird.f32 %v2486
      %vm2818 = vweird.f32 %v2812
      %vm2819 = vmor %vm2817, %vm2818
      %v2820 = vsel %vm2819, %v2812, %v2816
      %v2821 = vand.u32 2147483647, %v2486
      %vm2822 = vcmp.eq.f32.partialorder %v2821, 8.507059e+37
      %v2823 = vand.u32 %v2486, 2147483648
      %v2824 = vor.u32 1.1754944e-38, %v2823
      %v2825 = vsel %vm2822, %v2824, %v2820
      %v2826 = vmul.f32 1.0, %v2825
      %v2827 = vrcp.pop %v2487
      %v2828 = vmul.f32 %v2487, %v2827
      %v2829 = vsub.f32 1.0, %v2828
      %v2830 = vmul.f32 %v2827, %v2829
      %v2831 = vadd.f32 %v2827, %v2830
      %vm2832 = vweird.f32 %v2487
      %vm2833 = vweird.f32 %v2827
      %vm2834 = vmor %vm2832, %vm2833
      %v2835 = vsel %vm2834, %v2827, %v2831
      %v2836 = vand.u32 2147483647, %v2487
      %vm2837 = vcmp.eq.f32.partialorder %v2836, 8.507059e+37
      %v2838 = vand.u32 %v2487, 2147483648
      %v2839 = vor.u32 1.1754944e-38, %v2838
      %v2840 = vsel %vm2837, %v2839, %v2835
      %v2841 = vmul.f32 1.0, %v2840
      %v2842 = vrcp.pop %v2488
      %v2843 = vmul.f32 %v2488, %v2842
      %v2844 = vsub.f32 1.0, %v2843
      %v2845 = vmul.f32 %v2842, %v2844
      %v2846 = vadd.f32 %v2842, %v2845
      %vm2847 = vweird.f32 %v2488
      %vm2848 = vweird.f32 %v2842
      %vm2849 = vmor %vm2847, %vm2848
      %v2850 = vsel %vm2849, %v2842, %v2846
      %v2851 = vand.u32 2147483647, %v2488
      %vm2852 = vcmp.eq.f32.partialorder %v2851, 8.507059e+37
      %v2853 = vand.u32 %v2488, 2147483648
      %v2854 = vor.u32 1.1754944e-38, %v2853
      %v2855 = vsel %vm2852, %v2854, %v2850
      %v2856 = vmul.f32 1.0, %v2855
      %v2857 = vrcp.pop %v2489
      %v2858 = vmul.f32 %v2489, %v2857
      %v2859 = vsub.f32 1.0, %v2858
      %v2860 = vmul.f32 %v2857, %v2859
      %v2861 = vadd.f32 %v2857, %v2860
      %vm2862 = vweird.f32 %v2489
      %vm2863 = vweird.f32 %v2857
      %vm2864 = vmor %vm2862, %vm2863
      %v2865 = vsel %vm2864, %v2857, %v2861
      %v2866 = vand.u32 2147483647, %v2489
      %vm2867 = vcmp.eq.f32.partialorder %v2866, 8.507059e+37
      %v2868 = vand.u32 %v2489, 2147483648
      %v2869 = vor.u32 1.1754944e-38, %v2868
      %v2870 = vsel %vm2867, %v2869, %v2865
      %v2871 = vmul.f32 1.0, %v2870
      %v2872 = vrcp.pop %v2490
      %v2873 = vmul.f32 %v2490, %v2872
      %v2874 = vsub.f32 1.0, %v2873
      %v2875 = vmul.f32 %v2872, %v2874
      %v2876 = vadd.f32 %v2872, %v2875
      %vm2877 = vweird.f32 %v2490
      %vm2878 = vweird.f32 %v2872
      %vm2879 = vmor %vm2877, %vm2878
      %v2880 = vsel %vm2879, %v2872, %v2876
      %v2881 = vand.u32 2147483647, %v2490
      %vm2882 = vcmp.eq.f32.partialorder %v2881, 8.507059e+37
      %v2883 = vand.u32 %v2490, 2147483648
      %v2884 = vor.u32 1.1754944e-38, %v2883
      %v2885 = vsel %vm2882, %v2884, %v2880
      %v2886 = vmul.f32 1.0, %v2885
      %v2887 = vrcp.pop %v2491
      %v2888 = vmul.f32 %v2491, %v2887
      %v2889 = vsub.f32 1.0, %v2888
      %v2890 = vmul.f32 %v2887, %v2889
      %v2891 = vadd.f32 %v2887, %v2890
      %vm2892 = vweird.f32 %v2491
      %vm2893 = vweird.f32 %v2887
      %vm2894 = vmor %vm2892, %vm2893
      %v2895 = vsel %vm2894, %v2887, %v2891
      %v2896 = vand.u32 2147483647, %v2491
      %vm2897 = vcmp.eq.f32.partialorder %v2896, 8.507059e+37
      %v2898 = vand.u32 %v2491, 2147483648
      %v2899 = vor.u32 1.1754944e-38, %v2898
      %v2900 = vsel %vm2897, %v2899, %v2895
      %v2901 = vmul.f32 1.0, %v2900
      %v2902 = vrcp.pop %v2492
      %v2903 = vmul.f32 %v2492, %v2902
      %v2904 = vsub.f32 1.0, %v2903
      %v2905 = vmul.f32 %v2902, %v2904
      %v2906 = vadd.f32 %v2902, %v2905
      %vm2907 = vweird.f32 %v2492
      %vm2908 = vweird.f32 %v2902
      %vm2909 = vmor %vm2907, %vm2908
      %v2910 = vsel %vm2909, %v2902, %v2906
      %v2911 = vand.u32 2147483647, %v2492
      %vm2912 = vcmp.eq.f32.partialorder %v2911, 8.507059e+37
      %v2913 = vand.u32 %v2492, 2147483648
      %v2914 = vor.u32 1.1754944e-38, %v2913
      %v2915 = vsel %vm2912, %v2914, %v2910
      %v2916 = vmul.f32 1.0, %v2915
      %v2917 = vrcp.pop %v2493
      %v2918 = vmul.f32 %v2493, %v2917
      %v2919 = vsub.f32 1.0, %v2918
      %v2920 = vmul.f32 %v2917, %v2919
      %v2921 = vadd.f32 %v2917, %v2920
      %vm2922 = vweird.f32 %v2493
      %vm2923 = vweird.f32 %v2917
      %vm2924 = vmor %vm2922, %vm2923
      %v2925 = vsel %vm2924, %v2917, %v2921
      %v2926 = vand.u32 2147483647, %v2493
      %vm2927 = vcmp.eq.f32.partialorder %v2926, 8.507059e+37
      %v2928 = vand.u32 %v2493, 2147483648
      %v2929 = vor.u32 1.1754944e-38, %v2928
      %v2930 = vsel %vm2927, %v2929, %v2925
      %v2931 = vmul.f32 1.0, %v2930
      %v2932 = vrcp.pop %v2494
      %v2933 = vmul.f32 %v2494, %v2932
      %v2934 = vsub.f32 1.0, %v2933
      %v2935 = vmul.f32 %v2932, %v2934
      %v2936 = vadd.f32 %v2932, %v2935
      %vm2937 = vweird.f32 %v2494
      %vm2938 = vweird.f32 %v2932
      %vm2939 = vmor %vm2937, %vm2938
      %v2940 = vsel %vm2939, %v2932, %v2936
      %v2941 = vand.u32 2147483647, %v2494
      %vm2942 = vcmp.eq.f32.partialorder %v2941, 8.507059e+37
      %v2943 = vand.u32 %v2494, 2147483648
      %v2944 = vor.u32 1.1754944e-38, %v2943
      %v2945 = vsel %vm2942, %v2944, %v2940
      %v2946 = vmul.f32 1.0, %v2945
      %v2947 = vrcp.pop %v2495
      %v2948 = vmul.f32 %v2495, %v2947
      %v2949 = vsub.f32 1.0, %v2948
      %v2950 = vmul.f32 %v2947, %v2949
      %v2951 = vadd.f32 %v2947, %v2950
      %vm2952 = vweird.f32 %v2495
      %vm2953 = vweird.f32 %v2947
      %vm2954 = vmor %vm2952, %vm2953
      %v2955 = vsel %vm2954, %v2947, %v2951
      %v2956 = vand.u32 2147483647, %v2495
      %vm2957 = vcmp.eq.f32.partialorder %v2956, 8.507059e+37
      %v2958 = vand.u32 %v2495, 2147483648
      %v2959 = vor.u32 1.1754944e-38, %v2958
      %v2960 = vsel %vm2957, %v2959, %v2955
      %v2961 = vmul.f32 1.0, %v2960
      %v2962 = vrcp.pop %v2496
      %v2963 = vmul.f32 %v2496, %v2962
      %v2964 = vsub.f32 1.0, %v2963
      %v2965 = vmul.f32 %v2962, %v2964
      %v2966 = vadd.f32 %v2962, %v2965
      %vm2967 = vweird.f32 %v2496
      %vm2968 = vweird.f32 %v2962
      %vm2969 = vmor %vm2967, %vm2968
      %v2970 = vsel %vm2969, %v2962, %v2966
      %v2971 = vand.u32 2147483647, %v2496
      %vm2972 = vcmp.eq.f32.partialorder %v2971, 8.507059e+37
      %v2973 = vand.u32 %v2496, 2147483648
      %v2974 = vor.u32 1.1754944e-38, %v2973
      %v2975 = vsel %vm2972, %v2974, %v2970
      %v2976 = vmul.f32 1.0, %v2975
      %vm2977 = vcmask 23552
      %2978 = vst.msk [vmem:[%s526] sm:$0xff] %vm2977, %v2511
      %2979 = vst.msk [vmem:[%s526 + $0x8] sm:$0xff] %vm2977, %v2526
      %2980 = vst.msk [vmem:[%s526 + $0x10] sm:$0xff] %vm2977, %v2541
      %2981 = vst.msk [vmem:[%s526 + $0x18] sm:$0xff] %vm2977, %v2556
      %2982 = vst.msk [vmem:[%s526 + $0x20] sm:$0xff] %vm2977, %v2571
      %2983 = vst.msk [vmem:[%s526 + $0x28] sm:$0xff] %vm2977, %v2586
      %2984 = vst.msk [vmem:[%s526 + $0x30] sm:$0xff] %vm2977, %v2601
      %2985 = vst.msk [vmem:[%s526 + $0x38] sm:$0xff] %vm2977, %v2616
      %2986 = vst.msk [vmem:[%s526 + $0x40] sm:$0xff] %vm2977, %v2631
      %2987 = vst.msk [vmem:[%s526 + $0x48] sm:$0xff] %vm2977, %v2646
      %2988 = vst.msk [vmem:[%s526 + $0x50] sm:$0xff] %vm2977, %v2661
      %2989 = vst.msk [vmem:[%s526 + $0x58] sm:$0xff] %vm2977, %v2676
      %2990 = vst.msk [vmem:[%s526 + $0x60] sm:$0xff] %vm2977, %v2691
      %2991 = vst.msk [vmem:[%s526 + $0x68] sm:$0xff] %vm2977, %v2706
      %2992 = vst.msk [vmem:[%s526 + $0x70] sm:$0xff] %vm2977, %v2721
      %2993 = vst.msk [vmem:[%s526 + $0x78] sm:$0xff] %vm2977, %v2736
      %2994 = vst.msk [vmem:[%s526 + $0x80] sm:$0xff] %vm2977, %v2751
      %2995 = vst.msk [vmem:[%s526 + $0x88] sm:$0xff] %vm2977, %v2766
      %2996 = vst.msk [vmem:[%s526 + $0x90] sm:$0xff] %vm2977, %v2781
      %2997 = vst.msk [vmem:[%s526 + $0x98] sm:$0xff] %vm2977, %v2796
      %2998 = vst.msk [vmem:[%s526 + $0xa0] sm:$0xff] %vm2977, %v2811
      %2999 = vst.msk [vmem:[%s526 + $0xa8] sm:$0xff] %vm2977, %v2826
      %3000 = vst.msk [vmem:[%s526 + $0xb0] sm:$0xff] %vm2977, %v2841
      %3001 = vst.msk [vmem:[%s526 + $0xb8] sm:$0xff] %vm2977, %v2856
      %3002 = vst.msk [vmem:[%s526 + $0xc0] sm:$0xff] %vm2977, %v2871
      %3003 = vst.msk [vmem:[%s526 + $0xc8] sm:$0xff] %vm2977, %v2886
      %3004 = vst.msk [vmem:[%s526 + $0xd0] sm:$0xff] %vm2977, %v2901
      %3005 = vst.msk [vmem:[%s526 + $0xd8] sm:$0xff] %vm2977, %v2916
      %3006 = vst.msk [vmem:[%s526 + $0xe0] sm:$0xff] %vm2977, %v2931
      %3007 = vst.msk [vmem:[%s526 + $0xe8] sm:$0xff] %vm2977, %v2946
      %3008 = vst.msk [vmem:[%s526 + $0xf0] sm:$0xff] %vm2977, %v2961
      %3009 = vst.msk [vmem:[%s526 + $0xf8] sm:$0xff] %vm2977, %v2976
      %vm3010 = vcmask 7168
      %3011 = vst.msk [vmem:[%s532] sm:$0xff] %vm3010, %v2164
      %3012 = vst.msk [vmem:[%s532 + $0x8] sm:$0xff] %vm3010, %v2165
      %3013 = vst.msk [vmem:[%s532 + $0x10] sm:$0xff] %vm3010, %v2166
      %3014 = vst.msk [vmem:[%s532 + $0x18] sm:$0xff] %vm3010, %v2167
      %3015 = vst.msk [vmem:[%s532 + $0x20] sm:$0xff] %vm3010, %v2168
      %3016 = vst.msk [vmem:[%s532 + $0x28] sm:$0xff] %vm3010, %v2169
      %3017 = vst.msk [vmem:[%s532 + $0x30] sm:$0xff] %vm3010, %v2170
      %3018 = vst.msk [vmem:[%s532 + $0x38] sm:$0xff] %vm3010, %v2171
      %3019 = vst.msk [vmem:[%s532 + $0x40] sm:$0xff] %vm3010, %v2172
      %3020 = vst.msk [vmem:[%s532 + $0x48] sm:$0xff] %vm3010, %v2173
      %3021 = vst.msk [vmem:[%s532 + $0x50] sm:$0xff] %vm3010, %v2174
      %3022 = vst.msk [vmem:[%s532 + $0x58] sm:$0xff] %vm3010, %v2175
      %3023 = vst.msk [vmem:[%s532 + $0x60] sm:$0xff] %vm3010, %v2176
      %3024 = vst.msk [vmem:[%s532 + $0x68] sm:$0xff] %vm3010, %v2177
      %3025 = vst.msk [vmem:[%s532 + $0x70] sm:$0xff] %vm3010, %v2178
      %3026 = vst.msk [vmem:[%s532 + $0x78] sm:$0xff] %vm3010, %v2179
      %3027 = vst.msk [vmem:[%s532 + $0x80] sm:$0xff] %vm3010, %v2180
      %3028 = vst.msk [vmem:[%s532 + $0x88] sm:$0xff] %vm3010, %v2181
      %3029 = vst.msk [vmem:[%s532 + $0x90] sm:$0xff] %vm3010, %v2182
      %3030 = vst.msk [vmem:[%s532 + $0x98] sm:$0xff] %vm3010, %v2183
      %3031 = vst.msk [vmem:[%s532 + $0xa0] sm:$0xff] %vm3010, %v2184
      %3032 = vst.msk [vmem:[%s532 + $0xa8] sm:$0xff] %vm3010, %v2185
      %3033 = vst.msk [vmem:[%s532 + $0xb0] sm:$0xff] %vm3010, %v2186
      %3034 = vst.msk [vmem:[%s532 + $0xb8] sm:$0xff] %vm3010, %v2187
      %3035 = vst.msk [vmem:[%s532 + $0xc0] sm:$0xff] %vm3010, %v2188
      %3036 = vst.msk [vmem:[%s532 + $0xc8] sm:$0xff] %vm3010, %v2189
      %3037 = vst.msk [vmem:[%s532 + $0xd0] sm:$0xff] %vm3010, %v2190
      %3038 = vst.msk [vmem:[%s532 + $0xd8] sm:$0xff] %vm3010, %v2191
      %3039 = vst.msk [vmem:[%s532 + $0xe0] sm:$0xff] %vm3010, %v2192
      %3040 = vst.msk [vmem:[%s532 + $0xe8] sm:$0xff] %vm3010, %v2193
      %3041 = vst.msk [vmem:[%s532 + $0xf0] sm:$0xff] %vm3010, %v2194
      %3042 = vst.msk [vmem:[%s532 + $0xf8] sm:$0xff] %vm3010, %v2195
      %s3043 = smul.u32 32, %s27
      %p3044 = scmp.lt.s32.totalorder %s3043, 127
      %s3045 = scalar_select %p3044, %s3043, 127
      %s3046 = smul.addr %s3045, 8
      %s3047 = scalar_lea.vmem %s14, %s3046
      %s3048 = smul.u32 32, %s27
      %p3049 = scmp.lt.s32.totalorder %s3048, 127
      %s3050 = scalar_select %p3049, %s3048, 127
      %s3051 = smul.addr %s3050, 8
      %s3052 = scalar_lea.vmem %s15, %s3051
      // Predicated region
      $region77: #{_mlp_forward_impl.1} parent=75 // pred_check
        %p3053 = pneg %p349
      $region78: #{_mlp_forward_impl.1} parent=75 // pred_check_branch
        %3055 = sbr.rel (%p3053) target = $region80
      $region79: #{_mlp_forward_impl.1} parent=75 // pred_region
        %s3056 = smul.u32 32, %s27
      $region80: #{_mlp_forward_impl.1} parent=75 // pred_fallthru
        _
      // Predicated region
      $region81: #{_mlp_forward_impl.1} parent=75 // pred_check
        %p3057 = pneg %p375
      $region82: #{_mlp_forward_impl.1} parent=75 // pred_check_branch
        %3059 = sbr.rel (%p3057) target = $region84
      $region83: #{_mlp_forward_impl.1} parent=75 // pred_region
        %s3060 = smul.u32 32, %s27
      $region84: #{_mlp_forward_impl.1} parent=75 // pred_fallthru
        _
    $region76: #{_mlp_forward_impl.1} parent=5 // pred_fallthru
      _
    %p3061 = scmp.le.s32.totalorder 2, %s22
    // Predicated region
    $region85: #{_mlp_forward_impl.1} parent=5 // pred_check
      %p3062 = pneg %p3061
    $region86: #{_mlp_forward_impl.1} parent=5 // pred_check_branch
      %3064 = sbr.rel (%p3062) target = $region88
    $region87: #{_mlp_forward_impl.1} parent=5 // pred_region
      %s3065 = ssub.s32 %s22, 2
      // Predicated region
      $region89: #{_mlp_forward_impl.1} parent=87 // pred_check
        %p3066 = pneg %p355
      $region90: #{_mlp_forward_impl.1} parent=87 // pred_check_branch
        %3068 = sbr.rel (%p3066) target = $region92
      $region91: #{_mlp_forward_impl.1} parent=87 // pred_region
        %s3069 = smul.u32 32, %s28
        %p3070 = scmp.lt.s32.totalorder %s3069, 127
        %s3071 = scalar_select %p3070, %s3069, 127
        %s3072 = smul.addr %s3071, 8
        %s3073 = scalar_lea.vmem %s14, %s3072
      $region92: #{_mlp_forward_impl.1} parent=87 // pred_fallthru
        _
      // Predicated region
      $region93: #{_mlp_forward_impl.1} parent=87 // pred_check
        %p3074 = pneg %p381
      $region94: #{_mlp_forward_impl.1} parent=87 // pred_check_branch
        %3076 = sbr.rel (%p3074) target = $region96
      $region95: #{_mlp_forward_impl.1} parent=87 // pred_region
        %s3077 = smul.u32 32, %s28
        %p3078 = scmp.lt.s32.totalorder %s3077, 127
        %s3079 = scalar_select %p3078, %s3077, 127
        %s3080 = smul.addr %s3079, 8
        %s3081 = scalar_lea.vmem %s15, %s3080
      $region96: #{_mlp_forward_impl.1} parent=87 // pred_fallthru
        _
    $region88: #{_mlp_forward_impl.1} parent=5 // pred_fallthru
      _
  $region6: #{_mlp_forward_impl.1} parent=0 // loop_footer
    %s26 = sadd.s32 1, %s22
  $region7: #{_mlp_forward_impl.1} parent=0 // loop_footer_branch
    %21 = sbr.rel target = $region3
  $region8: #{_mlp_forward_impl.1} parent=0 // loop_exit
    _

</llo_original>
